<compile_context>
chip_gen: v7x
topology: tpu7x:2x2x1
jax: 0.10.0
libtpu: 0.0.40
codegen_flags: <defaults>
</compile_context>

<pallas_src>
import math

import jax
import jax.numpy as jnp
from jax.experimental import pallas as pl
from jax.experimental.pallas import tpu as pltpu

EPS = 1e-3  # BatchNorm1d eps


# ----------------------------------------------------------------------------
# In-kernel helpers (traced inside the Pallas kernel)
# ----------------------------------------------------------------------------
def _conv_bn_relu(x, w2d, gamma, beta, not_first, not_last):
    """Fused Conv1d(k=3,p=1,no bias) + BatchNorm1d(train stats) + ReLU.

    x         : (Cin, L)   channels-first activation (value, lives in VMEM)
    w2d       : (Cout, 3*Cin) tap-major im2col weight
    gamma     : (Cout, 1)
    beta      : (Cout, 1)
    not_first : (1, L) f32, 0.0 at l == 0 else 1.0   (left  `padding=1` halo)
    not_last  : (1, L) f32, 0.0 at l == L-1 else 1.0 (right `padding=1` halo)
    """
    l = x.shape[1]
    # x(l-1) and x(l+1) via XLU lane rotations + VPU boundary zeroing.
    x_m1 = pltpu.roll(x, shift=1, axis=1) * not_first
    x_p1 = pltpu.roll(x, shift=l - 1, axis=1) * not_last
    # im2col along the channel (sublane) axis: [x(l-1); x(l); x(l+1)]
    xim = jnp.concatenate([x_m1, x, x_p1], axis=0)          # (3*Cin, L)
    # single MXU matmul, K = 3*Cin (48 or 96)
    y = jnp.dot(w2d, xim, preferred_element_type=jnp.float32)  # (Cout, L)
    # BatchNorm1d training mode: per-channel stats over (batch=1, L), biased var
    mean = jnp.mean(y, axis=1, keepdims=True)                # (Cout, 1)
    var = jnp.mean(jnp.square(y - mean), axis=1, keepdims=True)
    scale = gamma * jax.lax.rsqrt(var + EPS)                 # (Cout, 1)
    shift = beta - mean * scale                              # (Cout, 1)
    # 2 lane-dense VPU passes + ReLU
    return jnp.maximum(y * scale + shift, 0.0)


# ----------------------------------------------------------------------------
# Single fused kernel: whole SegNet forward
# ----------------------------------------------------------------------------
def segnet_kernel(
    x_ref,                             # (16, L)  channels-first input
    w1_ref, w2_ref, w3_ref, wd1_ref,   # (32,48) (32,96) (32,96) (64,96)
    w4_ref, w5_ref, w6_ref, wd2_ref,   # (32,96) (32,96) (32,96) (64,96)
    wca_ref, wcb_ref,                  # (2,64) (2,64)  cls weight halves
    bn_ref,                            # (64, 16) col 2i=gamma_i, 2i+1=beta_i
    bcls_ref,                          # (2, 1)
    o_ref,                             # (2, L)
):
    x = x_ref[...]                                            # (16, L)
    L = x.shape[1]

    # Build the padding=1 boundary masks ONCE; reused by all 8 conv layers.
    lane = jax.lax.broadcasted_iota(jnp.int32, (1, L), 1)
    not_first = (lane != 0).astype(jnp.float32)               # (1, L)
    not_last = (lane != L - 1).astype(jnp.float32)            # (1, L)

    bn = bn_ref[...]

    def g(i, c):
        return bn[:c, 2 * i:2 * i + 1]        # gamma_i, (c, 1)

    def b(i, c):
        return bn[:c, 2 * i + 1:2 * i + 2]    # beta_i,  (c, 1)

    def cbr(x, w_ref, i, c):
        return _conv_bn_relu(x, w_ref[...], g(i, c), b(i, c), not_first, not_last)

    x = cbr(x, w1_ref, 0, 32)       # conv1
    x = cbr(x, w2_ref, 1, 32)       # conv2
    x = cbr(x, w3_ref, 2, 32)       # conv3
    up1 = cbr(x, wd1_ref, 3, 64)    # deconv1
    x = cbr(x, w4_ref, 4, 32)       # conv4
    x = cbr(x, w5_ref, 5, 32)       # conv5
    x = cbr(x, w6_ref, 6, 32)       # conv6
    up2 = cbr(x, wd2_ref, 7, 64)    # deconv2

    # cls_layer on torch.cat([up1, up2], dim=1) without materializing the cat:
    # W[:, :64] @ up1 + W[:, 64:] @ up2 + bias
    logits = (
        jnp.dot(wca_ref[...], up1, preferred_element_type=jnp.float32)
        + jnp.dot(wcb_ref[...], up2, preferred_element_type=jnp.float32)
        + bcls_ref[...]
    )
    o_ref[...] = logits                                       # (2, L)


def _full_spec(arr):
    nd = arr.ndim
    return pl.BlockSpec(arr.shape, lambda i, _nd=nd: (0,) * _nd)


def _segnet_pallas(x_cf, p):
    """x_cf: (16, L) channels-first input -> (2, L) logits."""
    _, L = x_cf.shape
    args = (
        x_cf,
        p["w1"], p["w2"], p["w3"], p["wd1"],
        p["w4"], p["w5"], p["w6"], p["wd2"],
        p["wcls_a"], p["wcls_b"], p["bn"], p["bcls"],
    )
    return pl.pallas_call(
        segnet_kernel,
        out_shape=jax.ShapeDtypeStruct((2, L), jnp.float32),
        grid=(1,),
        in_specs=[_full_spec(a) for a in args],
        out_specs=pl.BlockSpec((2, L), lambda i: (0, 0)),
        compiler_params=pltpu.CompilerParams(
            dimension_semantics=("arbitrary",)),
    )(*args)


# ----------------------------------------------------------------------------
# Parameter construction (deterministic, synthetic) + weight re-layout
# ----------------------------------------------------------------------------
def _conv_to_im2col(w):
    """PyTorch Conv1d weight (Cout, Cin, K) -> (Cout, K*Cin), tap-major cols."""
    cout, cin, k = w.shape
    return jnp.transpose(w, (0, 2, 1)).reshape(cout, k * cin)


def _deconv_to_im2col(wt):
    """PyTorch ConvTranspose1d weight (Cin, Cout, K) -> equivalent-conv
    (Cout, K*Cin): flip kernel axis, swap in/out (valid for stride=1, pad=1)."""
    cin, cout, k = wt.shape
    wf = jnp.flip(wt, axis=2)
    return jnp.transpose(wf, (1, 2, 0)).reshape(cout, k * cin)


def make_params(key, inchannel=16):
    ks = iter(jax.random.split(key, 16))

    def conv_w(cin, cout, k):
        bound = 1.0 / math.sqrt(cin * k)
        return jax.random.uniform(next(ks), (cout, cin, k), jnp.float32, -bound, bound)

    def deconv_w(cin, cout, k):
        bound = 1.0 / math.sqrt(cin * k)
        return jax.random.uniform(next(ks), (cin, cout, k), jnp.float32, -bound, bound)

    p = {}
    p["w1"] = _conv_to_im2col(conv_w(inchannel, 32, 3))   # (32, 48)
    p["w2"] = _conv_to_im2col(conv_w(32, 32, 3))          # (32, 96)
    p["w3"] = _conv_to_im2col(conv_w(32, 32, 3))
    p["wd1"] = _deconv_to_im2col(deconv_w(32, 64, 3))     # (64, 96)
    p["w4"] = _conv_to_im2col(conv_w(32, 32, 3))
    p["w5"] = _conv_to_im2col(conv_w(32, 32, 3))
    p["w6"] = _conv_to_im2col(conv_w(32, 32, 3))
    p["wd2"] = _deconv_to_im2col(deconv_w(32, 64, 3))     # (64, 96)

    # BatchNorm params packed into one slab: col 2i = gamma_i, col 2i+1 = beta_i
    channels = [32, 32, 32, 64, 32, 32, 32, 64]
    bn = jnp.zeros((64, 16), jnp.float32)
    for i, c in enumerate(channels):
        bn = bn.at[:c, 2 * i].set(1.0)   # gamma init = 1, beta init = 0
    p["bn"] = bn

    # cls_layer: Conv1d(128, 2, 1, bias=True); bias init = -log((1-pi)/pi), pi=0.01
    wc = conv_w(128, 2, 1)[:, :, 0]                       # (2, 128)
    p["wcls_a"] = wc[:, :64]                              # branch up1 (deconv1)
    p["wcls_b"] = wc[:, 64:]                              # branch up2 (deconv2)
    p["bcls"] = jnp.full((2, 1), -math.log((1.0 - 0.01) / 0.01), jnp.float32)
    return p


# ----------------------------------------------------------------------------
# Forward
# ----------------------------------------------------------------------------
@jax.jit
def segnet_forward(features, params):
    """features: (N, 16) f32  ->  seg_pred: (N, 2) f32 (raw view of (2, N))."""
    # PyTorch: x_input = features.view(-1,16).permute(1,0).unsqueeze(0) -> (1,16,N)
    x_cf = jnp.transpose(features)          # (16, N) channels-first
    logits = _segnet_pallas(x_cf, params)   # (2, N)  == seg_pred[0]
    # PyTorch: seg_pred.view(-1, 2) is a raw row-major reshape of (1, 2, N).
    return logits.reshape(-1, 2)


if __name__ == "__main__":
    key = jax.random.PRNGKey(0)
    k_param, k_data = jax.random.split(key)

    N, IN_CH = 256, 16  # x_conv1.features viewed as (-1, 16)
    features = jax.random.normal(k_data, (N, IN_CH), jnp.float32)

    params = make_params(k_param, inchannel=IN_CH)
    out = segnet_forward(features, params)
    out = jax.block_until_ready(out)

    assert out.shape == (N, 2), out.shape
    assert bool(jnp.all(jnp.isfinite(out)))
    print("KERNEL_OK")
</pallas_src>

<mosaic_0001>
module attributes {stable_mosaic.version = 11 : i64} {
  func.func @segnet_kernel(%arg0: i32, %arg1: memref<16x256xf32, #tpu.memory_space<vmem>>, %arg2: memref<32x48xf32, #tpu.memory_space<vmem>>, %arg3: memref<32x96xf32, #tpu.memory_space<vmem>>, %arg4: memref<32x96xf32, #tpu.memory_space<vmem>>, %arg5: memref<64x96xf32, #tpu.memory_space<vmem>>, %arg6: memref<32x96xf32, #tpu.memory_space<vmem>>, %arg7: memref<32x96xf32, #tpu.memory_space<vmem>>, %arg8: memref<32x96xf32, #tpu.memory_space<vmem>>, %arg9: memref<64x96xf32, #tpu.memory_space<vmem>>, %arg10: memref<2x64xf32, #tpu.memory_space<vmem>>, %arg11: memref<2x64xf32, #tpu.memory_space<vmem>>, %arg12: memref<64x16xf32, #tpu.memory_space<vmem>>, %arg13: memref<2x1xf32, #tpu.memory_space<vmem>>, %arg14: memref<2x256xf32, #tpu.memory_space<vmem>>) attributes {dimension_semantics = [#tpu.dimension_semantics<arbitrary>], iteration_bounds = array<i64: 1>, scalar_prefetch = 0 : i64, scratch_operands = 0 : i64, tpu.core_type = #tpu.core_type<tc>, window_params = [{pipeline_mode = #tpu.pipeline_mode<synchronous>, transform_indices = @transform_0, window_bounds = array<i64: 16, 256>}, {pipeline_mode = #tpu.pipeline_mode<synchronous>, transform_indices = @transform_1, window_bounds = array<i64: 32, 48>}, {pipeline_mode = #tpu.pipeline_mode<synchronous>, transform_indices = @transform_2, window_bounds = array<i64: 32, 96>}, {pipeline_mode = #tpu.pipeline_mode<synchronous>, transform_indices = @transform_3, window_bounds = array<i64: 32, 96>}, {pipeline_mode = #tpu.pipeline_mode<synchronous>, transform_indices = @transform_4, window_bounds = array<i64: 64, 96>}, {pipeline_mode = #tpu.pipeline_mode<synchronous>, transform_indices = @transform_5, window_bounds = array<i64: 32, 96>}, {pipeline_mode = #tpu.pipeline_mode<synchronous>, transform_indices = @transform_6, window_bounds = array<i64: 32, 96>}, {pipeline_mode = #tpu.pipeline_mode<synchronous>, transform_indices = @transform_7, window_bounds = array<i64: 32, 96>}, {pipeline_mode = #tpu.pipeline_mode<synchronous>, transform_indices = @transform_8, window_bounds = array<i64: 64, 96>}, {pipeline_mode = #tpu.pipeline_mode<synchronous>, transform_indices = @transform_9, window_bounds = array<i64: 2, 64>}, {pipeline_mode = #tpu.pipeline_mode<synchronous>, transform_indices = @transform_10, window_bounds = array<i64: 2, 64>}, {pipeline_mode = #tpu.pipeline_mode<synchronous>, transform_indices = @transform_11, window_bounds = array<i64: 64, 16>}, {pipeline_mode = #tpu.pipeline_mode<synchronous>, transform_indices = @transform_12, window_bounds = array<i64: 2, 1>}, {pipeline_mode = #tpu.pipeline_mode<synchronous>, transform_indices = @transform_13, window_bounds = array<i64: 2, 256>}]} {
    %c0 = arith.constant 0 : index
    %c0_0 = arith.constant 0 : index
    %0 = vector.load %arg1[%c0, %c0_0] : memref<16x256xf32, #tpu.memory_space<vmem>>, vector<16x256xf32>
    %1 = tpu.iota {dimensions = array<i32: 1>} : vector<1x256xi32>
    %c0_i32 = arith.constant 0 : i32
    %2 = vector.broadcast %c0_i32 : i32 to vector<1x256xi32>
    %3 = arith.cmpi ne, %1, %2 : vector<1x256xi32>
    %4 = arith.extui %3 : vector<1x256xi1> to vector<1x256xi32>
    %5 = arith.sitofp %4 : vector<1x256xi32> to vector<1x256xf32>
    %c255_i32 = arith.constant 255 : i32
    %6 = vector.broadcast %c255_i32 : i32 to vector<1x256xi32>
    %7 = arith.cmpi ne, %1, %6 : vector<1x256xi32>
    %8 = arith.extui %7 : vector<1x256xi1> to vector<1x256xi32>
    %9 = arith.sitofp %8 : vector<1x256xi32> to vector<1x256xf32>
    %c0_1 = arith.constant 0 : index
    %c0_2 = arith.constant 0 : index
    %10 = vector.load %arg12[%c0_1, %c0_2] : memref<64x16xf32, #tpu.memory_space<vmem>>, vector<64x16xf32>
    %c0_3 = arith.constant 0 : index
    %c0_4 = arith.constant 0 : index
    %11 = vector.load %arg2[%c0_3, %c0_4] : memref<32x48xf32, #tpu.memory_space<vmem>>, vector<32x48xf32>
    %12 = vector.extract_strided_slice %10 {offsets = [0, 0], sizes = [32, 1], strides = [1, 1]} : vector<64x16xf32> to vector<32x1xf32>
    %13 = vector.extract_strided_slice %10 {offsets = [0, 1], sizes = [32, 1], strides = [1, 1]} : vector<64x16xf32> to vector<32x1xf32>
    %c1_i32 = arith.constant 1 : i32
    %14 = tpu.dynamic_rotate %0 by %c1_i32 dim 1 : vector<16x256xf32>, i32 -> vector<16x256xf32>
    %15 = vector.broadcast %5 : vector<1x256xf32> to vector<16x256xf32>
    %16 = arith.mulf %14, %15 : vector<16x256xf32>
    %c255_i32_5 = arith.constant 255 : i32
    %17 = tpu.dynamic_rotate %0 by %c255_i32_5 dim 1 : vector<16x256xf32>, i32 -> vector<16x256xf32>
    %18 = vector.broadcast %9 : vector<1x256xf32> to vector<16x256xf32>
    %19 = arith.mulf %17, %18 : vector<16x256xf32>
    %20 = tpu.concatenate %16, %0, %19 in 0 : vector<16x256xf32>, vector<16x256xf32>, vector<16x256xf32> -> vector<48x256xf32>
    %cst = arith.constant dense<0.000000e+00> : vector<32x256xf32>
    %21 = tpu.matmul %11, %20, %cst {dimension_numbers = #tpu.dot_dimension_numbers<[1], [0], [0], [1], [0, 0, 1, 1], [], []>} : vector<32x48xf32>, vector<48x256xf32>, vector<32x256xf32> -> vector<32x256xf32>
    %cst_6 = arith.constant dense<0.000000e+00> : vector<32xf32>
    %22 = vector.multi_reduction <add>, %21, %cst_6 [1] : vector<32x256xf32> to vector<32xf32>
    %23 = vector.shape_cast %22 : vector<32xf32> to vector<32x1xf32>
    %cst_7 = arith.constant 2.560000e+02 : f32
    %24 = vector.broadcast %cst_7 : f32 to vector<32x1xf32>
    %25 = arith.divf %23, %24 : vector<32x1xf32>
    %26 = vector.broadcast %25 : vector<32x1xf32> to vector<32x256xf32>
    %27 = arith.subf %21, %26 : vector<32x256xf32>
    %28 = arith.mulf %27, %27 : vector<32x256xf32>
    %cst_8 = arith.constant dense<0.000000e+00> : vector<32xf32>
    %29 = vector.multi_reduction <add>, %28, %cst_8 [1] : vector<32x256xf32> to vector<32xf32>
    %30 = vector.shape_cast %29 : vector<32xf32> to vector<32x1xf32>
    %cst_9 = arith.constant 2.560000e+02 : f32
    %31 = vector.broadcast %cst_9 : f32 to vector<32x1xf32>
    %32 = arith.divf %30, %31 : vector<32x1xf32>
    %cst_10 = arith.constant 1.000000e-03 : f32
    %33 = vector.broadcast %cst_10 : f32 to vector<32x1xf32>
    %34 = arith.addf %32, %33 : vector<32x1xf32>
    %35 = math.rsqrt %34 : vector<32x1xf32>
    %36 = arith.mulf %12, %35 : vector<32x1xf32>
    %37 = arith.mulf %25, %36 : vector<32x1xf32>
    %38 = arith.subf %13, %37 : vector<32x1xf32>
    %39 = vector.broadcast %36 : vector<32x1xf32> to vector<32x256xf32>
    %40 = arith.mulf %21, %39 : vector<32x256xf32>
    %41 = vector.broadcast %38 : vector<32x1xf32> to vector<32x256xf32>
    %42 = arith.addf %40, %41 : vector<32x256xf32>
    %cst_11 = arith.constant 0.000000e+00 : f32
    %43 = vector.broadcast %cst_11 : f32 to vector<32x256xf32>
    %44 = arith.maximumf %42, %43 : vector<32x256xf32>
    %c0_12 = arith.constant 0 : index
    %c0_13 = arith.constant 0 : index
    %45 = vector.load %arg3[%c0_12, %c0_13] : memref<32x96xf32, #tpu.memory_space<vmem>>, vector<32x96xf32>
    %46 = vector.extract_strided_slice %10 {offsets = [0, 2], sizes = [32, 1], strides = [1, 1]} : vector<64x16xf32> to vector<32x1xf32>
    %47 = vector.extract_strided_slice %10 {offsets = [0, 3], sizes = [32, 1], strides = [1, 1]} : vector<64x16xf32> to vector<32x1xf32>
    %c1_i32_14 = arith.constant 1 : i32
    %48 = tpu.dynamic_rotate %44 by %c1_i32_14 dim 1 : vector<32x256xf32>, i32 -> vector<32x256xf32>
    %49 = vector.broadcast %5 : vector<1x256xf32> to vector<32x256xf32>
    %50 = arith.mulf %48, %49 : vector<32x256xf32>
    %c255_i32_15 = arith.constant 255 : i32
    %51 = tpu.dynamic_rotate %44 by %c255_i32_15 dim 1 : vector<32x256xf32>, i32 -> vector<32x256xf32>
    %52 = vector.broadcast %9 : vector<1x256xf32> to vector<32x256xf32>
    %53 = arith.mulf %51, %52 : vector<32x256xf32>
    %54 = tpu.concatenate %50, %44, %53 in 0 : vector<32x256xf32>, vector<32x256xf32>, vector<32x256xf32> -> vector<96x256xf32>
    %cst_16 = arith.constant dense<0.000000e+00> : vector<32x256xf32>
    %55 = tpu.matmul %45, %54, %cst_16 {dimension_numbers = #tpu.dot_dimension_numbers<[1], [0], [0], [1], [0, 0, 1, 1], [], []>} : vector<32x96xf32>, vector<96x256xf32>, vector<32x256xf32> -> vector<32x256xf32>
    %cst_17 = arith.constant dense<0.000000e+00> : vector<32xf32>
    %56 = vector.multi_reduction <add>, %55, %cst_17 [1] : vector<32x256xf32> to vector<32xf32>
    %57 = vector.shape_cast %56 : vector<32xf32> to vector<32x1xf32>
    %cst_18 = arith.constant 2.560000e+02 : f32
    %58 = vector.broadcast %cst_18 : f32 to vector<32x1xf32>
    %59 = arith.divf %57, %58 : vector<32x1xf32>
    %60 = vector.broadcast %59 : vector<32x1xf32> to vector<32x256xf32>
    %61 = arith.subf %55, %60 : vector<32x256xf32>
    %62 = arith.mulf %61, %61 : vector<32x256xf32>
    %cst_19 = arith.constant dense<0.000000e+00> : vector<32xf32>
    %63 = vector.multi_reduction <add>, %62, %cst_19 [1] : vector<32x256xf32> to vector<32xf32>
    %64 = vector.shape_cast %63 : vector<32xf32> to vector<32x1xf32>
    %cst_20 = arith.constant 2.560000e+02 : f32
    %65 = vector.broadcast %cst_20 : f32 to vector<32x1xf32>
    %66 = arith.divf %64, %65 : vector<32x1xf32>
    %cst_21 = arith.constant 1.000000e-03 : f32
    %67 = vector.broadcast %cst_21 : f32 to vector<32x1xf32>
    %68 = arith.addf %66, %67 : vector<32x1xf32>
    %69 = math.rsqrt %68 : vector<32x1xf32>
    %70 = arith.mulf %46, %69 : vector<32x1xf32>
    %71 = arith.mulf %59, %70 : vector<32x1xf32>
    %72 = arith.subf %47, %71 : vector<32x1xf32>
    %73 = vector.broadcast %70 : vector<32x1xf32> to vector<32x256xf32>
    %74 = arith.mulf %55, %73 : vector<32x256xf32>
    %75 = vector.broadcast %72 : vector<32x1xf32> to vector<32x256xf32>
    %76 = arith.addf %74, %75 : vector<32x256xf32>
    %cst_22 = arith.constant 0.000000e+00 : f32
    %77 = vector.broadcast %cst_22 : f32 to vector<32x256xf32>
    %78 = arith.maximumf %76, %77 : vector<32x256xf32>
    %c0_23 = arith.constant 0 : index
    %c0_24 = arith.constant 0 : index
    %79 = vector.load %arg4[%c0_23, %c0_24] : memref<32x96xf32, #tpu.memory_space<vmem>>, vector<32x96xf32>
    %80 = vector.extract_strided_slice %10 {offsets = [0, 4], sizes = [32, 1], strides = [1, 1]} : vector<64x16xf32> to vector<32x1xf32>
    %81 = vector.extract_strided_slice %10 {offsets = [0, 5], sizes = [32, 1], strides = [1, 1]} : vector<64x16xf32> to vector<32x1xf32>
    %c1_i32_25 = arith.constant 1 : i32
    %82 = tpu.dynamic_rotate %78 by %c1_i32_25 dim 1 : vector<32x256xf32>, i32 -> vector<32x256xf32>
    %83 = vector.broadcast %5 : vector<1x256xf32> to vector<32x256xf32>
    %84 = arith.mulf %82, %83 : vector<32x256xf32>
    %c255_i32_26 = arith.constant 255 : i32
    %85 = tpu.dynamic_rotate %78 by %c255_i32_26 dim 1 : vector<32x256xf32>, i32 -> vector<32x256xf32>
    %86 = vector.broadcast %9 : vector<1x256xf32> to vector<32x256xf32>
    %87 = arith.mulf %85, %86 : vector<32x256xf32>
    %88 = tpu.concatenate %84, %78, %87 in 0 : vector<32x256xf32>, vector<32x256xf32>, vector<32x256xf32> -> vector<96x256xf32>
    %cst_27 = arith.constant dense<0.000000e+00> : vector<32x256xf32>
    %89 = tpu.matmul %79, %88, %cst_27 {dimension_numbers = #tpu.dot_dimension_numbers<[1], [0], [0], [1], [0, 0, 1, 1], [], []>} : vector<32x96xf32>, vector<96x256xf32>, vector<32x256xf32> -> vector<32x256xf32>
    %cst_28 = arith.constant dense<0.000000e+00> : vector<32xf32>
    %90 = vector.multi_reduction <add>, %89, %cst_28 [1] : vector<32x256xf32> to vector<32xf32>
    %91 = vector.shape_cast %90 : vector<32xf32> to vector<32x1xf32>
    %cst_29 = arith.constant 2.560000e+02 : f32
    %92 = vector.broadcast %cst_29 : f32 to vector<32x1xf32>
    %93 = arith.divf %91, %92 : vector<32x1xf32>
    %94 = vector.broadcast %93 : vector<32x1xf32> to vector<32x256xf32>
    %95 = arith.subf %89, %94 : vector<32x256xf32>
    %96 = arith.mulf %95, %95 : vector<32x256xf32>
    %cst_30 = arith.constant dense<0.000000e+00> : vector<32xf32>
    %97 = vector.multi_reduction <add>, %96, %cst_30 [1] : vector<32x256xf32> to vector<32xf32>
    %98 = vector.shape_cast %97 : vector<32xf32> to vector<32x1xf32>
    %cst_31 = arith.constant 2.560000e+02 : f32
    %99 = vector.broadcast %cst_31 : f32 to vector<32x1xf32>
    %100 = arith.divf %98, %99 : vector<32x1xf32>
    %cst_32 = arith.constant 1.000000e-03 : f32
    %101 = vector.broadcast %cst_32 : f32 to vector<32x1xf32>
    %102 = arith.addf %100, %101 : vector<32x1xf32>
    %103 = math.rsqrt %102 : vector<32x1xf32>
    %104 = arith.mulf %80, %103 : vector<32x1xf32>
    %105 = arith.mulf %93, %104 : vector<32x1xf32>
    %106 = arith.subf %81, %105 : vector<32x1xf32>
    %107 = vector.broadcast %104 : vector<32x1xf32> to vector<32x256xf32>
    %108 = arith.mulf %89, %107 : vector<32x256xf32>
    %109 = vector.broadcast %106 : vector<32x1xf32> to vector<32x256xf32>
    %110 = arith.addf %108, %109 : vector<32x256xf32>
    %cst_33 = arith.constant 0.000000e+00 : f32
    %111 = vector.broadcast %cst_33 : f32 to vector<32x256xf32>
    %112 = arith.maximumf %110, %111 : vector<32x256xf32>
    %c0_34 = arith.constant 0 : index
    %c0_35 = arith.constant 0 : index
    %113 = vector.load %arg5[%c0_34, %c0_35] : memref<64x96xf32, #tpu.memory_space<vmem>>, vector<64x96xf32>
    %114 = vector.extract_strided_slice %10 {offsets = [0, 6], sizes = [64, 1], strides = [1, 1]} : vector<64x16xf32> to vector<64x1xf32>
    %115 = vector.extract_strided_slice %10 {offsets = [0, 7], sizes = [64, 1], strides = [1, 1]} : vector<64x16xf32> to vector<64x1xf32>
    %c1_i32_36 = arith.constant 1 : i32
    %116 = tpu.dynamic_rotate %112 by %c1_i32_36 dim 1 : vector<32x256xf32>, i32 -> vector<32x256xf32>
    %117 = vector.broadcast %5 : vector<1x256xf32> to vector<32x256xf32>
    %118 = arith.mulf %116, %117 : vector<32x256xf32>
    %c255_i32_37 = arith.constant 255 : i32
    %119 = tpu.dynamic_rotate %112 by %c255_i32_37 dim 1 : vector<32x256xf32>, i32 -> vector<32x256xf32>
    %120 = vector.broadcast %9 : vector<1x256xf32> to vector<32x256xf32>
    %121 = arith.mulf %119, %120 : vector<32x256xf32>
    %122 = tpu.concatenate %118, %112, %121 in 0 : vector<32x256xf32>, vector<32x256xf32>, vector<32x256xf32> -> vector<96x256xf32>
    %cst_38 = arith.constant dense<0.000000e+00> : vector<64x256xf32>
    %123 = tpu.matmul %113, %122, %cst_38 {dimension_numbers = #tpu.dot_dimension_numbers<[1], [0], [0], [1], [0, 0, 1, 1], [], []>} : vector<64x96xf32>, vector<96x256xf32>, vector<64x256xf32> -> vector<64x256xf32>
    %cst_39 = arith.constant dense<0.000000e+00> : vector<64xf32>
    %124 = vector.multi_reduction <add>, %123, %cst_39 [1] : vector<64x256xf32> to vector<64xf32>
    %125 = vector.shape_cast %124 : vector<64xf32> to vector<64x1xf32>
    %cst_40 = arith.constant 2.560000e+02 : f32
    %126 = vector.broadcast %cst_40 : f32 to vector<64x1xf32>
    %127 = arith.divf %125, %126 : vector<64x1xf32>
    %128 = vector.broadcast %127 : vector<64x1xf32> to vector<64x256xf32>
    %129 = arith.subf %123, %128 : vector<64x256xf32>
    %130 = arith.mulf %129, %129 : vector<64x256xf32>
    %cst_41 = arith.constant dense<0.000000e+00> : vector<64xf32>
    %131 = vector.multi_reduction <add>, %130, %cst_41 [1] : vector<64x256xf32> to vector<64xf32>
    %132 = vector.shape_cast %131 : vector<64xf32> to vector<64x1xf32>
    %cst_42 = arith.constant 2.560000e+02 : f32
    %133 = vector.broadcast %cst_42 : f32 to vector<64x1xf32>
    %134 = arith.divf %132, %133 : vector<64x1xf32>
    %cst_43 = arith.constant 1.000000e-03 : f32
    %135 = vector.broadcast %cst_43 : f32 to vector<64x1xf32>
    %136 = arith.addf %134, %135 : vector<64x1xf32>
    %137 = math.rsqrt %136 : vector<64x1xf32>
    %138 = arith.mulf %114, %137 : vector<64x1xf32>
    %139 = arith.mulf %127, %138 : vector<64x1xf32>
    %140 = arith.subf %115, %139 : vector<64x1xf32>
    %141 = vector.broadcast %138 : vector<64x1xf32> to vector<64x256xf32>
    %142 = arith.mulf %123, %141 : vector<64x256xf32>
    %143 = vector.broadcast %140 : vector<64x1xf32> to vector<64x256xf32>
    %144 = arith.addf %142, %143 : vector<64x256xf32>
    %cst_44 = arith.constant 0.000000e+00 : f32
    %145 = vector.broadcast %cst_44 : f32 to vector<64x256xf32>
    %146 = arith.maximumf %144, %145 : vector<64x256xf32>
    %c0_45 = arith.constant 0 : index
    %c0_46 = arith.constant 0 : index
    %147 = vector.load %arg6[%c0_45, %c0_46] : memref<32x96xf32, #tpu.memory_space<vmem>>, vector<32x96xf32>
    %148 = vector.extract_strided_slice %10 {offsets = [0, 8], sizes = [32, 1], strides = [1, 1]} : vector<64x16xf32> to vector<32x1xf32>
    %149 = vector.extract_strided_slice %10 {offsets = [0, 9], sizes = [32, 1], strides = [1, 1]} : vector<64x16xf32> to vector<32x1xf32>
    %c1_i32_47 = arith.constant 1 : i32
    %150 = tpu.dynamic_rotate %112 by %c1_i32_47 dim 1 : vector<32x256xf32>, i32 -> vector<32x256xf32>
    %151 = vector.broadcast %5 : vector<1x256xf32> to vector<32x256xf32>
    %152 = arith.mulf %150, %151 : vector<32x256xf32>
    %c255_i32_48 = arith.constant 255 : i32
    %153 = tpu.dynamic_rotate %112 by %c255_i32_48 dim 1 : vector<32x256xf32>, i32 -> vector<32x256xf32>
    %154 = vector.broadcast %9 : vector<1x256xf32> to vector<32x256xf32>
    %155 = arith.mulf %153, %154 : vector<32x256xf32>
    %156 = tpu.concatenate %152, %112, %155 in 0 : vector<32x256xf32>, vector<32x256xf32>, vector<32x256xf32> -> vector<96x256xf32>
    %cst_49 = arith.constant dense<0.000000e+00> : vector<32x256xf32>
    %157 = tpu.matmul %147, %156, %cst_49 {dimension_numbers = #tpu.dot_dimension_numbers<[1], [0], [0], [1], [0, 0, 1, 1], [], []>} : vector<32x96xf32>, vector<96x256xf32>, vector<32x256xf32> -> vector<32x256xf32>
    %cst_50 = arith.constant dense<0.000000e+00> : vector<32xf32>
    %158 = vector.multi_reduction <add>, %157, %cst_50 [1] : vector<32x256xf32> to vector<32xf32>
    %159 = vector.shape_cast %158 : vector<32xf32> to vector<32x1xf32>
    %cst_51 = arith.constant 2.560000e+02 : f32
    %160 = vector.broadcast %cst_51 : f32 to vector<32x1xf32>
    %161 = arith.divf %159, %160 : vector<32x1xf32>
    %162 = vector.broadcast %161 : vector<32x1xf32> to vector<32x256xf32>
    %163 = arith.subf %157, %162 : vector<32x256xf32>
    %164 = arith.mulf %163, %163 : vector<32x256xf32>
    %cst_52 = arith.constant dense<0.000000e+00> : vector<32xf32>
    %165 = vector.multi_reduction <add>, %164, %cst_52 [1] : vector<32x256xf32> to vector<32xf32>
    %166 = vector.shape_cast %165 : vector<32xf32> to vector<32x1xf32>
    %cst_53 = arith.constant 2.560000e+02 : f32
    %167 = vector.broadcast %cst_53 : f32 to vector<32x1xf32>
    %168 = arith.divf %166, %167 : vector<32x1xf32>
    %cst_54 = arith.constant 1.000000e-03 : f32
    %169 = vector.broadcast %cst_54 : f32 to vector<32x1xf32>
    %170 = arith.addf %168, %169 : vector<32x1xf32>
    %171 = math.rsqrt %170 : vector<32x1xf32>
    %172 = arith.mulf %148, %171 : vector<32x1xf32>
    %173 = arith.mulf %161, %172 : vector<32x1xf32>
    %174 = arith.subf %149, %173 : vector<32x1xf32>
    %175 = vector.broadcast %172 : vector<32x1xf32> to vector<32x256xf32>
    %176 = arith.mulf %157, %175 : vector<32x256xf32>
    %177 = vector.broadcast %174 : vector<32x1xf32> to vector<32x256xf32>
    %178 = arith.addf %176, %177 : vector<32x256xf32>
    %cst_55 = arith.constant 0.000000e+00 : f32
    %179 = vector.broadcast %cst_55 : f32 to vector<32x256xf32>
    %180 = arith.maximumf %178, %179 : vector<32x256xf32>
    %c0_56 = arith.constant 0 : index
    %c0_57 = arith.constant 0 : index
    %181 = vector.load %arg7[%c0_56, %c0_57] : memref<32x96xf32, #tpu.memory_space<vmem>>, vector<32x96xf32>
    %182 = vector.extract_strided_slice %10 {offsets = [0, 10], sizes = [32, 1], strides = [1, 1]} : vector<64x16xf32> to vector<32x1xf32>
    %183 = vector.extract_strided_slice %10 {offsets = [0, 11], sizes = [32, 1], strides = [1, 1]} : vector<64x16xf32> to vector<32x1xf32>
    %c1_i32_58 = arith.constant 1 : i32
    %184 = tpu.dynamic_rotate %180 by %c1_i32_58 dim 1 : vector<32x256xf32>, i32 -> vector<32x256xf32>
    %185 = vector.broadcast %5 : vector<1x256xf32> to vector<32x256xf32>
    %186 = arith.mulf %184, %185 : vector<32x256xf32>
    %c255_i32_59 = arith.constant 255 : i32
    %187 = tpu.dynamic_rotate %180 by %c255_i32_59 dim 1 : vector<32x256xf32>, i32 -> vector<32x256xf32>
    %188 = vector.broadcast %9 : vector<1x256xf32> to vector<32x256xf32>
    %189 = arith.mulf %187, %188 : vector<32x256xf32>
    %190 = tpu.concatenate %186, %180, %189 in 0 : vector<32x256xf32>, vector<32x256xf32>, vector<32x256xf32> -> vector<96x256xf32>
    %cst_60 = arith.constant dense<0.000000e+00> : vector<32x256xf32>
    %191 = tpu.matmul %181, %190, %cst_60 {dimension_numbers = #tpu.dot_dimension_numbers<[1], [0], [0], [1], [0, 0, 1, 1], [], []>} : vector<32x96xf32>, vector<96x256xf32>, vector<32x256xf32> -> vector<32x256xf32>
    %cst_61 = arith.constant dense<0.000000e+00> : vector<32xf32>
    %192 = vector.multi_reduction <add>, %191, %cst_61 [1] : vector<32x256xf32> to vector<32xf32>
    %193 = vector.shape_cast %192 : vector<32xf32> to vector<32x1xf32>
    %cst_62 = arith.constant 2.560000e+02 : f32
    %194 = vector.broadcast %cst_62 : f32 to vector<32x1xf32>
    %195 = arith.divf %193, %194 : vector<32x1xf32>
    %196 = vector.broadcast %195 : vector<32x1xf32> to vector<32x256xf32>
    %197 = arith.subf %191, %196 : vector<32x256xf32>
    %198 = arith.mulf %197, %197 : vector<32x256xf32>
    %cst_63 = arith.constant dense<0.000000e+00> : vector<32xf32>
    %199 = vector.multi_reduction <add>, %198, %cst_63 [1] : vector<32x256xf32> to vector<32xf32>
    %200 = vector.shape_cast %199 : vector<32xf32> to vector<32x1xf32>
    %cst_64 = arith.constant 2.560000e+02 : f32
    %201 = vector.broadcast %cst_64 : f32 to vector<32x1xf32>
    %202 = arith.divf %200, %201 : vector<32x1xf32>
    %cst_65 = arith.constant 1.000000e-03 : f32
    %203 = vector.broadcast %cst_65 : f32 to vector<32x1xf32>
    %204 = arith.addf %202, %203 : vector<32x1xf32>
    %205 = math.rsqrt %204 : vector<32x1xf32>
    %206 = arith.mulf %182, %205 : vector<32x1xf32>
    %207 = arith.mulf %195, %206 : vector<32x1xf32>
    %208 = arith.subf %183, %207 : vector<32x1xf32>
    %209 = vector.broadcast %206 : vector<32x1xf32> to vector<32x256xf32>
    %210 = arith.mulf %191, %209 : vector<32x256xf32>
    %211 = vector.broadcast %208 : vector<32x1xf32> to vector<32x256xf32>
    %212 = arith.addf %210, %211 : vector<32x256xf32>
    %cst_66 = arith.constant 0.000000e+00 : f32
    %213 = vector.broadcast %cst_66 : f32 to vector<32x256xf32>
    %214 = arith.maximumf %212, %213 : vector<32x256xf32>
    %c0_67 = arith.constant 0 : index
    %c0_68 = arith.constant 0 : index
    %215 = vector.load %arg8[%c0_67, %c0_68] : memref<32x96xf32, #tpu.memory_space<vmem>>, vector<32x96xf32>
    %216 = vector.extract_strided_slice %10 {offsets = [0, 12], sizes = [32, 1], strides = [1, 1]} : vector<64x16xf32> to vector<32x1xf32>
    %217 = vector.extract_strided_slice %10 {offsets = [0, 13], sizes = [32, 1], strides = [1, 1]} : vector<64x16xf32> to vector<32x1xf32>
    %c1_i32_69 = arith.constant 1 : i32
    %218 = tpu.dynamic_rotate %214 by %c1_i32_69 dim 1 : vector<32x256xf32>, i32 -> vector<32x256xf32>
    %219 = vector.broadcast %5 : vector<1x256xf32> to vector<32x256xf32>
    %220 = arith.mulf %218, %219 : vector<32x256xf32>
    %c255_i32_70 = arith.constant 255 : i32
    %221 = tpu.dynamic_rotate %214 by %c255_i32_70 dim 1 : vector<32x256xf32>, i32 -> vector<32x256xf32>
    %222 = vector.broadcast %9 : vector<1x256xf32> to vector<32x256xf32>
    %223 = arith.mulf %221, %222 : vector<32x256xf32>
    %224 = tpu.concatenate %220, %214, %223 in 0 : vector<32x256xf32>, vector<32x256xf32>, vector<32x256xf32> -> vector<96x256xf32>
    %cst_71 = arith.constant dense<0.000000e+00> : vector<32x256xf32>
    %225 = tpu.matmul %215, %224, %cst_71 {dimension_numbers = #tpu.dot_dimension_numbers<[1], [0], [0], [1], [0, 0, 1, 1], [], []>} : vector<32x96xf32>, vector<96x256xf32>, vector<32x256xf32> -> vector<32x256xf32>
    %cst_72 = arith.constant dense<0.000000e+00> : vector<32xf32>
    %226 = vector.multi_reduction <add>, %225, %cst_72 [1] : vector<32x256xf32> to vector<32xf32>
    %227 = vector.shape_cast %226 : vector<32xf32> to vector<32x1xf32>
    %cst_73 = arith.constant 2.560000e+02 : f32
    %228 = vector.broadcast %cst_73 : f32 to vector<32x1xf32>
    %229 = arith.divf %227, %228 : vector<32x1xf32>
    %230 = vector.broadcast %229 : vector<32x1xf32> to vector<32x256xf32>
    %231 = arith.subf %225, %230 : vector<32x256xf32>
    %232 = arith.mulf %231, %231 : vector<32x256xf32>
    %cst_74 = arith.constant dense<0.000000e+00> : vector<32xf32>
    %233 = vector.multi_reduction <add>, %232, %cst_74 [1] : vector<32x256xf32> to vector<32xf32>
    %234 = vector.shape_cast %233 : vector<32xf32> to vector<32x1xf32>
    %cst_75 = arith.constant 2.560000e+02 : f32
    %235 = vector.broadcast %cst_75 : f32 to vector<32x1xf32>
    %236 = arith.divf %234, %235 : vector<32x1xf32>
    %cst_76 = arith.constant 1.000000e-03 : f32
    %237 = vector.broadcast %cst_76 : f32 to vector<32x1xf32>
    %238 = arith.addf %236, %237 : vector<32x1xf32>
    %239 = math.rsqrt %238 : vector<32x1xf32>
    %240 = arith.mulf %216, %239 : vector<32x1xf32>
    %241 = arith.mulf %229, %240 : vector<32x1xf32>
    %242 = arith.subf %217, %241 : vector<32x1xf32>
    %243 = vector.broadcast %240 : vector<32x1xf32> to vector<32x256xf32>
    %244 = arith.mulf %225, %243 : vector<32x256xf32>
    %245 = vector.broadcast %242 : vector<32x1xf32> to vector<32x256xf32>
    %246 = arith.addf %244, %245 : vector<32x256xf32>
    %cst_77 = arith.constant 0.000000e+00 : f32
    %247 = vector.broadcast %cst_77 : f32 to vector<32x256xf32>
    %248 = arith.maximumf %246, %247 : vector<32x256xf32>
    %c0_78 = arith.constant 0 : index
    %c0_79 = arith.constant 0 : index
    %249 = vector.load %arg9[%c0_78, %c0_79] : memref<64x96xf32, #tpu.memory_space<vmem>>, vector<64x96xf32>
    %250 = vector.extract_strided_slice %10 {offsets = [0, 14], sizes = [64, 1], strides = [1, 1]} : vector<64x16xf32> to vector<64x1xf32>
    %251 = vector.extract_strided_slice %10 {offsets = [0, 15], sizes = [64, 1], strides = [1, 1]} : vector<64x16xf32> to vector<64x1xf32>
    %c1_i32_80 = arith.constant 1 : i32
    %252 = tpu.dynamic_rotate %248 by %c1_i32_80 dim 1 : vector<32x256xf32>, i32 -> vector<32x256xf32>
    %253 = vector.broadcast %5 : vector<1x256xf32> to vector<32x256xf32>
    %254 = arith.mulf %252, %253 : vector<32x256xf32>
    %c255_i32_81 = arith.constant 255 : i32
    %255 = tpu.dynamic_rotate %248 by %c255_i32_81 dim 1 : vector<32x256xf32>, i32 -> vector<32x256xf32>
    %256 = vector.broadcast %9 : vector<1x256xf32> to vector<32x256xf32>
    %257 = arith.mulf %255, %256 : vector<32x256xf32>
    %258 = tpu.concatenate %254, %248, %257 in 0 : vector<32x256xf32>, vector<32x256xf32>, vector<32x256xf32> -> vector<96x256xf32>
    %cst_82 = arith.constant dense<0.000000e+00> : vector<64x256xf32>
    %259 = tpu.matmul %249, %258, %cst_82 {dimension_numbers = #tpu.dot_dimension_numbers<[1], [0], [0], [1], [0, 0, 1, 1], [], []>} : vector<64x96xf32>, vector<96x256xf32>, vector<64x256xf32> -> vector<64x256xf32>
    %cst_83 = arith.constant dense<0.000000e+00> : vector<64xf32>
    %260 = vector.multi_reduction <add>, %259, %cst_83 [1] : vector<64x256xf32> to vector<64xf32>
    %261 = vector.shape_cast %260 : vector<64xf32> to vector<64x1xf32>
    %cst_84 = arith.constant 2.560000e+02 : f32
    %262 = vector.broadcast %cst_84 : f32 to vector<64x1xf32>
    %263 = arith.divf %261, %262 : vector<64x1xf32>
    %264 = vector.broadcast %263 : vector<64x1xf32> to vector<64x256xf32>
    %265 = arith.subf %259, %264 : vector<64x256xf32>
    %266 = arith.mulf %265, %265 : vector<64x256xf32>
    %cst_85 = arith.constant dense<0.000000e+00> : vector<64xf32>
    %267 = vector.multi_reduction <add>, %266, %cst_85 [1] : vector<64x256xf32> to vector<64xf32>
    %268 = vector.shape_cast %267 : vector<64xf32> to vector<64x1xf32>
    %cst_86 = arith.constant 2.560000e+02 : f32
    %269 = vector.broadcast %cst_86 : f32 to vector<64x1xf32>
    %270 = arith.divf %268, %269 : vector<64x1xf32>
    %cst_87 = arith.constant 1.000000e-03 : f32
    %271 = vector.broadcast %cst_87 : f32 to vector<64x1xf32>
    %272 = arith.addf %270, %271 : vector<64x1xf32>
    %273 = math.rsqrt %272 : vector<64x1xf32>
    %274 = arith.mulf %250, %273 : vector<64x1xf32>
    %275 = arith.mulf %263, %274 : vector<64x1xf32>
    %276 = arith.subf %251, %275 : vector<64x1xf32>
    %277 = vector.broadcast %274 : vector<64x1xf32> to vector<64x256xf32>
    %278 = arith.mulf %259, %277 : vector<64x256xf32>
    %279 = vector.broadcast %276 : vector<64x1xf32> to vector<64x256xf32>
    %280 = arith.addf %278, %279 : vector<64x256xf32>
    %cst_88 = arith.constant 0.000000e+00 : f32
    %281 = vector.broadcast %cst_88 : f32 to vector<64x256xf32>
    %282 = arith.maximumf %280, %281 : vector<64x256xf32>
    %c0_89 = arith.constant 0 : index
    %c0_90 = arith.constant 0 : index
    %283 = vector.load %arg10[%c0_89, %c0_90] : memref<2x64xf32, #tpu.memory_space<vmem>>, vector<2x64xf32>
    %cst_91 = arith.constant dense<0.000000e+00> : vector<2x256xf32>
    %284 = tpu.matmul %283, %146, %cst_91 {dimension_numbers = #tpu.dot_dimension_numbers<[1], [0], [0], [1], [0, 0, 1, 1], [], []>} : vector<2x64xf32>, vector<64x256xf32>, vector<2x256xf32> -> vector<2x256xf32>
    %c0_92 = arith.constant 0 : index
    %c0_93 = arith.constant 0 : index
    %285 = vector.load %arg11[%c0_92, %c0_93] : memref<2x64xf32, #tpu.memory_space<vmem>>, vector<2x64xf32>
    %cst_94 = arith.constant dense<0.000000e+00> : vector<2x256xf32>
    %286 = tpu.matmul %285, %282, %cst_94 {dimension_numbers = #tpu.dot_dimension_numbers<[1], [0], [0], [1], [0, 0, 1, 1], [], []>} : vector<2x64xf32>, vector<64x256xf32>, vector<2x256xf32> -> vector<2x256xf32>
    %287 = arith.addf %284, %286 : vector<2x256xf32>
    %c0_95 = arith.constant 0 : index
    %c0_96 = arith.constant 0 : index
    %288 = vector.load %arg13[%c0_95, %c0_96] : memref<2x1xf32, #tpu.memory_space<vmem>>, vector<2x1xf32>
    %289 = vector.broadcast %288 : vector<2x1xf32> to vector<2x256xf32>
    %290 = arith.addf %287, %289 : vector<2x256xf32>
    %c0_97 = arith.constant 0 : index
    %c0_98 = arith.constant 0 : index
    %291 = vector.load %arg14[%c0_97, %c0_98] : memref<2x256xf32, #tpu.memory_space<vmem>>, vector<2x256xf32>
    tpu.vector_store %arg14[%c0_97, %c0_98], %290 {strides = array<i32>} : memref<2x256xf32, #tpu.memory_space<vmem>>, vector<2x256xf32>,
    return
  }
  func.func @transform_0(%arg0: i32) -> (i32, i32) {
    %c0_i32 = arith.constant 0 : i32
    %c0_i32_0 = arith.constant 0 : i32
    %c0_i32_1 = arith.constant 0 : i32
    return %c0_i32, %c0_i32_0 : i32, i32
  }
  func.func @transform_1(%arg0: i32) -> (i32, i32) {
    %c0_i32 = arith.constant 0 : i32
    %c0_i32_0 = arith.constant 0 : i32
    %c0_i32_1 = arith.constant 0 : i32
    return %c0_i32, %c0_i32_0 : i32, i32
  }
  func.func @transform_2(%arg0: i32) -> (i32, i32) {
    %c0_i32 = arith.constant 0 : i32
    %c0_i32_0 = arith.constant 0 : i32
    %c0_i32_1 = arith.constant 0 : i32
    return %c0_i32, %c0_i32_0 : i32, i32
  }
  func.func @transform_3(%arg0: i32) -> (i32, i32) {
    %c0_i32 = arith.constant 0 : i32
    %c0_i32_0 = arith.constant 0 : i32
    %c0_i32_1 = arith.constant 0 : i32
    return %c0_i32, %c0_i32_0 : i32, i32
  }
  func.func @transform_4(%arg0: i32) -> (i32, i32) {
    %c0_i32 = arith.constant 0 : i32
    %c0_i32_0 = arith.constant 0 : i32
    %c0_i32_1 = arith.constant 0 : i32
    return %c0_i32, %c0_i32_0 : i32, i32
  }
  func.func @transform_5(%arg0: i32) -> (i32, i32) {
    %c0_i32 = arith.constant 0 : i32
    %c0_i32_0 = arith.constant 0 : i32
    %c0_i32_1 = arith.constant 0 : i32
    return %c0_i32, %c0_i32_0 : i32, i32
  }
  func.func @transform_6(%arg0: i32) -> (i32, i32) {
    %c0_i32 = arith.constant 0 : i32
    %c0_i32_0 = arith.constant 0 : i32
    %c0_i32_1 = arith.constant 0 : i32
    return %c0_i32, %c0_i32_0 : i32, i32
  }
  func.func @transform_7(%arg0: i32) -> (i32, i32) {
    %c0_i32 = arith.constant 0 : i32
    %c0_i32_0 = arith.constant 0 : i32
    %c0_i32_1 = arith.constant 0 : i32
    return %c0_i32, %c0_i32_0 : i32, i32
  }
  func.func @transform_8(%arg0: i32) -> (i32, i32) {
    %c0_i32 = arith.constant 0 : i32
    %c0_i32_0 = arith.constant 0 : i32
    %c0_i32_1 = arith.constant 0 : i32
    return %c0_i32, %c0_i32_0 : i32, i32
  }
  func.func @transform_9(%arg0: i32) -> (i32, i32) {
    %c0_i32 = arith.constant 0 : i32
    %c0_i32_0 = arith.constant 0 : i32
    %c0_i32_1 = arith.constant 0 : i32
    return %c0_i32, %c0_i32_0 : i32, i32
  }
  func.func @transform_10(%arg0: i32) -> (i32, i32) {
    %c0_i32 = arith.constant 0 : i32
    %c0_i32_0 = arith.constant 0 : i32
    %c0_i32_1 = arith.constant 0 : i32
    return %c0_i32, %c0_i32_0 : i32, i32
  }
  func.func @transform_11(%arg0: i32) -> (i32, i32) {
    %c0_i32 = arith.constant 0 : i32
    %c0_i32_0 = arith.constant 0 : i32
    %c0_i32_1 = arith.constant 0 : i32
    return %c0_i32, %c0_i32_0 : i32, i32
  }
  func.func @transform_12(%arg0: i32) -> (i32, i32) {
    %c0_i32 = arith.constant 0 : i32
    %c0_i32_0 = arith.constant 0 : i32
    %c0_i32_1 = arith.constant 0 : i32
    return %c0_i32, %c0_i32_0 : i32, i32
  }
  func.func @transform_13(%arg0: i32) -> (i32, i32) {
    %c0_i32 = arith.constant 0 : i32
    %c0_i32_0 = arith.constant 0 : i32
    %c0_i32_1 = arith.constant 0 : i32
    return %c0_i32, %c0_i32_0 : i32, i32
  }
}

</mosaic_0001>

<llo_original>
// kernel: segnet_forward.1
$region0: #{segnet_forward.1}
  #allocation0 [shape = 'u32[]', space=smem, size = 0x4, offset = 0x4, fixed_abs, tag = 'smem constant byte address 0x4 - core index']
  #allocation1 [shape = 'u32[144,128]{1,0:T(1,128)}', space=vmem, size = 0x12000, scoped, tag = 'internal scratch']
  %s0 = inlined_call_operand.hbm [shape: f32[16,256], index: 0, kind: input, shape index: {}]
  %s1 = inlined_call_operand.hbm [shape: f32[32,48], index: 1, kind: input, shape index: {}]
  %s2 = inlined_call_operand.hbm [shape: f32[32,96], index: 2, kind: input, shape index: {}]
  %s3 = inlined_call_operand.hbm [shape: f32[32,96], index: 3, kind: input, shape index: {}]
  %s4 = inlined_call_operand.vmem [shape: f32[64,96], index: 4, kind: input, shape index: {}]
  %s5 = inlined_call_operand.hbm [shape: f32[32,96], index: 5, kind: input, shape index: {}]
  %s6 = inlined_call_operand.hbm [shape: f32[32,96], index: 6, kind: input, shape index: {}]
  %s7 = inlined_call_operand.hbm [shape: f32[32,96], index: 7, kind: input, shape index: {}]
  %s8 = inlined_call_operand.vmem [shape: f32[64,96], index: 8, kind: input, shape index: {}]
  %s9 = inlined_call_operand.hbm [shape: f32[2,64], index: 9, kind: input, shape index: {}]
  %s10 = inlined_call_operand.hbm [shape: f32[2,64], index: 10, kind: input, shape index: {}]
  %s11 = inlined_call_operand.vmem [shape: f32[64,16], index: 11, kind: input, shape index: {}]
  %s12 = inlined_call_operand.vmem [shape: f32[2,1], index: 12, kind: input, shape index: {}]
  %s13 = inlined_call_operand.vmem [shape: f32[2,256], index: 13, kind: output, shape index: {}]
  %s14 = sld [smem:[#allocation0]]
  $region98: #{segnet_forward.1} parent=0
    _
  %s16 = ssub.s32 1, %s14
  %s17 = scalar_select 0, %s16, %s14
  $region1: #{segnet_forward.1} parent=0
    #allocation2 [shape = 'u8[16384]{0}', space=vmem, size = 0x4000, scoped, tag = 'input window, operand 0, single buffered']
    #allocation3 [shape = 's32[1]{0}', space=sflag, size = 0x4, scoped, tag = 'scoped memory for segnet_forward.1']
    #allocation4 [shape = 'u8[16384]{0}', space=vmem, size = 0x4000, scoped, tag = 'input window, operand 1, single buffered']
    #allocation5 [shape = 's32[1]{0}', space=sflag, size = 0x4, scoped, tag = 'scoped memory for segnet_forward.1']
    #allocation6 [shape = 'u8[16384]{0}', space=vmem, size = 0x4000, scoped, tag = 'input window, operand 2, single buffered']
    #allocation7 [shape = 'u8[16384]{0}', space=vmem, size = 0x4000, scoped, tag = 'input window, operand 3, single buffered']
    #allocation8 [shape = 's32[1]{0}', space=sflag, size = 0x4, scoped, tag = 'scoped memory for segnet_forward.1']
    #allocation9 [shape = 'u8[16384]{0}', space=vmem, size = 0x4000, scoped, tag = 'input window, operand 5, single buffered']
    #allocation10 [shape = 'u8[16384]{0}', space=vmem, size = 0x4000, scoped, tag = 'input window, operand 6, single buffered']
    #allocation11 [shape = 's32[1]{0}', space=sflag, size = 0x4, scoped, tag = 'scoped memory for segnet_forward.1']
    #allocation12 [shape = 'u8[16384]{0}', space=vmem, size = 0x4000, scoped, tag = 'input window, operand 7, single buffered']
    #allocation13 [shape = 'u8[1024]{0}', space=vmem, size = 0x400, scoped, tag = 'input window, operand 9, single buffered']
    #allocation14 [shape = 's32[1]{0}', space=sflag, size = 0x4, scoped, tag = 'scoped memory for segnet_forward.1']
    #allocation15 [shape = 'u8[1024]{0}', space=vmem, size = 0x400, scoped, tag = 'input window, operand 10, single buffered']
    %18 = vsyncpa [#allocation3], 0
    %19 = vsyncpa [#allocation5], 0
    %20 = vsyncpa [#allocation8], 0
    %21 = vsyncpa [#allocation11], 0
    %22 = vsyncpa [#allocation14], 0
    // Predicated region
    $region2: #{segnet_forward.1} parent=1 // pred_check
      _
    $region3: #{segnet_forward.1} parent=1 // pred_check_branch
      %24 = sbr.rel (0) target = $region5
    $region4: #{segnet_forward.1} parent=1 // pred_region
      %s26 = ssub.s32 512, 512
      %27 = vsyncadd [#allocation3], %s26
      %s28 = sshll.u32 [#allocation2], 4
      %s29 = int_to_ptr.vmem [resolvable:$true] %s28
      %34 = dma.hbm_to_vmem [thread:$0]  %s0, 512, %s29, [#allocation3], 256, 256, 16
    $region5: #{segnet_forward.1} parent=1 // pred_fallthru
      _
    // Predicated region
    $region6: #{segnet_forward.1} parent=1 // pred_check
      _
    $region7: #{segnet_forward.1} parent=1 // pred_check_branch
      %36 = sbr.rel (0) target = $region9
    $region8: #{segnet_forward.1} parent=1 // pred_region
      %s38 = ssub.s32 512, 512
      %39 = vsyncadd [#allocation5], %s38
      %s40 = sshll.u32 [#allocation4], 4
      %s41 = int_to_ptr.vmem [resolvable:$true] %s40
      %46 = dma.hbm_to_vmem [thread:$0]  %s1, 512, %s41, [#allocation5], 128, 128, 8
    $region9: #{segnet_forward.1} parent=1 // pred_fallthru
      _
    // Predicated region
    $region10: #{segnet_forward.1} parent=1 // pred_check
      _
    $region11: #{segnet_forward.1} parent=1 // pred_check_branch
      %48 = sbr.rel (0) target = $region13
    $region12: #{segnet_forward.1} parent=1 // pred_region
      %s50 = ssub.s32 512, 512
      %51 = vsyncadd [#allocation5], %s50
      %s52 = sshll.u32 [#allocation6], 4
      %s53 = int_to_ptr.vmem [resolvable:$true] %s52
      %58 = dma.hbm_to_vmem [thread:$0]  %s2, 512, %s53, [#allocation5], 128, 128, 8
    $region13: #{segnet_forward.1} parent=1 // pred_fallthru
      _
    // Predicated region
    $region14: #{segnet_forward.1} parent=1 // pred_check
      _
    $region15: #{segnet_forward.1} parent=1 // pred_check_branch
      %60 = sbr.rel (0) target = $region17
    $region16: #{segnet_forward.1} parent=1 // pred_region
      %s62 = ssub.s32 512, 512
      %63 = vsyncadd [#allocation8], %s62
      %s64 = sshll.u32 [#allocation7], 4
      %s65 = int_to_ptr.vmem [resolvable:$true] %s64
      %70 = dma.hbm_to_vmem [thread:$0]  %s3, 512, %s65, [#allocation8], 128, 128, 8
    $region17: #{segnet_forward.1} parent=1 // pred_fallthru
      _
    // Predicated region
    $region18: #{segnet_forward.1} parent=1 // pred_check
      _
    $region19: #{segnet_forward.1} parent=1 // pred_check_branch
      %72 = sbr.rel (0) target = $region21
    $region20: #{segnet_forward.1} parent=1 // pred_region
      _
    $region21: #{segnet_forward.1} parent=1 // pred_fallthru
      _
    // Predicated region
    $region22: #{segnet_forward.1} parent=1 // pred_check
      _
    $region23: #{segnet_forward.1} parent=1 // pred_check_branch
      %74 = sbr.rel (0) target = $region25
    $region24: #{segnet_forward.1} parent=1 // pred_region
      %s76 = ssub.s32 512, 512
      %77 = vsyncadd [#allocation8], %s76
      %s78 = sshll.u32 [#allocation9], 4
      %s79 = int_to_ptr.vmem [resolvable:$true] %s78
      %84 = dma.hbm_to_vmem [thread:$0]  %s5, 512, %s79, [#allocation8], 128, 128, 8
    $region25: #{segnet_forward.1} parent=1 // pred_fallthru
      _
    // Predicated region
    $region26: #{segnet_forward.1} parent=1 // pred_check
      _
    $region27: #{segnet_forward.1} parent=1 // pred_check_branch
      %86 = sbr.rel (0) target = $region29
    $region28: #{segnet_forward.1} parent=1 // pred_region
      %s88 = ssub.s32 512, 512
      %89 = vsyncadd [#allocation11], %s88
      %s90 = sshll.u32 [#allocation10], 4
      %s91 = int_to_ptr.vmem [resolvable:$true] %s90
      %96 = dma.hbm_to_vmem [thread:$0]  %s6, 512, %s91, [#allocation11], 128, 128, 8
    $region29: #{segnet_forward.1} parent=1 // pred_fallthru
      _
    // Predicated region
    $region30: #{segnet_forward.1} parent=1 // pred_check
      _
    $region31: #{segnet_forward.1} parent=1 // pred_check_branch
      %98 = sbr.rel (0) target = $region33
    $region32: #{segnet_forward.1} parent=1 // pred_region
      %s100 = ssub.s32 512, 512
      %101 = vsyncadd [#allocation11], %s100
      %s102 = sshll.u32 [#allocation12], 4
      %s103 = int_to_ptr.vmem [resolvable:$true] %s102
      %108 = dma.hbm_to_vmem [thread:$0]  %s7, 512, %s103, [#allocation11], 128, 128, 8
    $region33: #{segnet_forward.1} parent=1 // pred_fallthru
      _
    // Predicated region
    $region34: #{segnet_forward.1} parent=1 // pred_check
      _
    $region35: #{segnet_forward.1} parent=1 // pred_check_branch
      %110 = sbr.rel (0) target = $region37
    $region36: #{segnet_forward.1} parent=1 // pred_region
      _
    $region37: #{segnet_forward.1} parent=1 // pred_fallthru
      _
    // Predicated region
    $region38: #{segnet_forward.1} parent=1 // pred_check
      _
    $region39: #{segnet_forward.1} parent=1 // pred_check_branch
      %112 = sbr.rel (0) target = $region41
    $region40: #{segnet_forward.1} parent=1 // pred_region
      %s114 = ssub.s32 32, 32
      %115 = vsyncadd [#allocation14], %s114
      %s117 = sshll.u32 [#allocation13], 4
      %s118 = int_to_ptr.vmem [resolvable:$true] %s117
      %120 = dma.hbm_to_vmem [thread:$0]  %s9, 32, %s118, [#allocation14]
    $region41: #{segnet_forward.1} parent=1 // pred_fallthru
      _
    // Predicated region
    $region42: #{segnet_forward.1} parent=1 // pred_check
      _
    $region43: #{segnet_forward.1} parent=1 // pred_check_branch
      %122 = sbr.rel (0) target = $region45
    $region44: #{segnet_forward.1} parent=1 // pred_region
      %s124 = ssub.s32 32, 32
      %125 = vsyncadd [#allocation14], %s124
      %s127 = sshll.u32 [#allocation15], 4
      %s128 = int_to_ptr.vmem [resolvable:$true] %s127
      %130 = dma.hbm_to_vmem [thread:$0]  %s10, 32, %s128, [#allocation14]
    $region45: #{segnet_forward.1} parent=1 // pred_fallthru
      _
    // Predicated region
    $region46: #{segnet_forward.1} parent=1 // pred_check
      _
    $region47: #{segnet_forward.1} parent=1 // pred_check_branch
      %132 = sbr.rel (0) target = $region49
    $region48: #{segnet_forward.1} parent=1 // pred_region
      _
    $region49: #{segnet_forward.1} parent=1 // pred_fallthru
      _
    // Predicated region
    $region50: #{segnet_forward.1} parent=1 // pred_check
      _
    $region51: #{segnet_forward.1} parent=1 // pred_check_branch
      %134 = sbr.rel (0) target = $region53
    $region52: #{segnet_forward.1} parent=1 // pred_region
      _
    $region53: #{segnet_forward.1} parent=1 // pred_fallthru
      _
    // Predicated region
    $region54: #{segnet_forward.1} parent=1 // pred_check
      _
    $region55: #{segnet_forward.1} parent=1 // pred_check_branch
      %136 = sbr.rel (0) target = $region57
    $region56: #{segnet_forward.1} parent=1 // pred_region
      %137 = dma.done [#allocation3], 512
    $region57: #{segnet_forward.1} parent=1 // pred_fallthru
      _
    // Predicated region
    $region58: #{segnet_forward.1} parent=1 // pred_check
      _
    $region59: #{segnet_forward.1} parent=1 // pred_check_branch
      %139 = sbr.rel (0) target = $region61
    $region60: #{segnet_forward.1} parent=1 // pred_region
      %140 = dma.done [#allocation5], 512
    $region61: #{segnet_forward.1} parent=1 // pred_fallthru
      _
    // Predicated region
    $region62: #{segnet_forward.1} parent=1 // pred_check
      _
    $region63: #{segnet_forward.1} parent=1 // pred_check_branch
      %142 = sbr.rel (0) target = $region65
    $region64: #{segnet_forward.1} parent=1 // pred_region
      %143 = dma.done [#allocation5], 512
    $region65: #{segnet_forward.1} parent=1 // pred_fallthru
      _
    // Predicated region
    $region66: #{segnet_forward.1} parent=1 // pred_check
      _
    $region67: #{segnet_forward.1} parent=1 // pred_check_branch
      %145 = sbr.rel (0) target = $region69
    $region68: #{segnet_forward.1} parent=1 // pred_region
      %146 = dma.done [#allocation8], 512
    $region69: #{segnet_forward.1} parent=1 // pred_fallthru
      _
    // Predicated region
    $region70: #{segnet_forward.1} parent=1 // pred_check
      _
    $region71: #{segnet_forward.1} parent=1 // pred_check_branch
      %148 = sbr.rel (0) target = $region73
    $region72: #{segnet_forward.1} parent=1 // pred_region
      %149 = dma.done [#allocation8], 512
    $region73: #{segnet_forward.1} parent=1 // pred_fallthru
      _
    // Predicated region
    $region74: #{segnet_forward.1} parent=1 // pred_check
      _
    $region75: #{segnet_forward.1} parent=1 // pred_check_branch
      %151 = sbr.rel (0) target = $region77
    $region76: #{segnet_forward.1} parent=1 // pred_region
      %152 = dma.done [#allocation11], 512
    $region77: #{segnet_forward.1} parent=1 // pred_fallthru
      _
    // Predicated region
    $region78: #{segnet_forward.1} parent=1 // pred_check
      _
    $region79: #{segnet_forward.1} parent=1 // pred_check_branch
      %154 = sbr.rel (0) target = $region81
    $region80: #{segnet_forward.1} parent=1 // pred_region
      %155 = dma.done [#allocation11], 512
    $region81: #{segnet_forward.1} parent=1 // pred_fallthru
      _
    // Predicated region
    $region82: #{segnet_forward.1} parent=1 // pred_check
      _
    $region83: #{segnet_forward.1} parent=1 // pred_check_branch
      %157 = sbr.rel (0) target = $region85
    $region84: #{segnet_forward.1} parent=1 // pred_region
      %158 = dma.done [#allocation14], 32
    $region85: #{segnet_forward.1} parent=1 // pred_fallthru
      _
    // Predicated region
    $region86: #{segnet_forward.1} parent=1 // pred_check
      _
    $region87: #{segnet_forward.1} parent=1 // pred_check_branch
      %160 = sbr.rel (0) target = $region89
    $region88: #{segnet_forward.1} parent=1 // pred_region
      %161 = dma.done [#allocation14], 32
    $region89: #{segnet_forward.1} parent=1 // pred_fallthru
      _
    %v162 = vld [vmem:[#allocation2] sm:$0xff]
    %v163 = vld [vmem:[#allocation2 + $0x8] sm:$0xff]
    %v164 = vld [vmem:[#allocation2 + $0x10] sm:$0xff]
    %v165 = vld [vmem:[#allocation2 + $0x18] sm:$0xff]
    %v166 = vlaneseq
    %v167 = vand.u32 %v166, 127
    %v168 = vadd.s32 %v167, 128
    %vm169 = vcmp.ne.s32.totalorder %v167, 0
    %vm170 = vcmp.ne.s32.totalorder %v168, 0
    %v171 = vsel %vm169, 1, 0
    %v172 = vsel %vm170, 1, 0
    %v173 = vcvt.s32.f32 %v171
    %v174 = vcvt.s32.f32 %v172
    %vm175 = vcmp.ne.s32.totalorder %v167, 255
    %vm176 = vcmp.ne.s32.totalorder %v168, 255
    %v177 = vsel %vm175, 1, 0
    %v178 = vsel %vm176, 1, 0
    %v179 = vcvt.s32.f32 %v177
    %v180 = vcvt.s32.f32 %v178
    %v181 = vld [vmem:[%s11] sm:$0xff]
    %v182 = vld [vmem:[%s11 + $0x8] sm:$0xff]
    %v183 = vld [vmem:[%s11 + $0x10] sm:$0xff]
    %v184 = vld [vmem:[%s11 + $0x18] sm:$0xff]
    %v185 = vld [vmem:[%s11 + $0x20] sm:$0xff]
    %v186 = vld [vmem:[%s11 + $0x28] sm:$0xff]
    %v187 = vld [vmem:[%s11 + $0x30] sm:$0xff]
    %v188 = vld [vmem:[%s11 + $0x38] sm:$0xff]
    %v189 = vld [vmem:[#allocation4] sm:$0xff]
    %v190 = vld [vmem:[#allocation4 + $0x8] sm:$0xff]
    %v191 = vld [vmem:[#allocation4 + $0x10] sm:$0xff]
    %v192 = vld [vmem:[#allocation4 + $0x18] sm:$0xff]
    %193 = vrot.lane.b32.xlu0 %v162, 1
    %v194 = vpop.permute.xlu0 %193
    %195 = vrot.lane.b32.xlu0 %v164, 1
    %v196 = vpop.permute.xlu0 %195
    %197 = vrot.lane.b32.xlu0 %v163, 1
    %v198 = vpop.permute.xlu0 %197
    %199 = vrot.lane.b32.xlu0 %v165, 1
    %v200 = vpop.permute.xlu0 %199
    %vm201 = vcmp.lt.s32.totalorder %v167, 1
    %v202 = vsel %vm201, %v194, %v198
    %v203 = vsel %vm201, %v196, %v200
    %v204 = vsel %vm201, %v198, %v194
    %v205 = vsel %vm201, %v200, %v196
    %v206 = vmul.f32 %v204, %v173
    %v207 = vmul.f32 %v202, %v174
    %v208 = vmul.f32 %v205, %v173
    %v209 = vmul.f32 %v203, %v174
    %210 = vrot.lane.b32.xlu0 %v162, 127
    %v211 = vpop.permute.xlu0 %210
    %212 = vrot.lane.b32.xlu0 %v164, 127
    %v213 = vpop.permute.xlu0 %212
    %214 = vrot.lane.b32.xlu0 %v163, 127
    %v215 = vpop.permute.xlu0 %214
    %216 = vrot.lane.b32.xlu0 %v165, 127
    %v217 = vpop.permute.xlu0 %216
    %vm218 = vcmp.lt.s32.totalorder %v167, 127
    %v219 = vsel %vm218, %v211, %v215
    %v220 = vsel %vm218, %v213, %v217
    %v221 = vsel %vm218, %v215, %v211
    %v222 = vsel %vm218, %v217, %v213
    %v223 = vmul.f32 %v219, %v179
    %v224 = vmul.f32 %v221, %v180
    %v225 = vmul.f32 %v220, %v179
    %v226 = vmul.f32 %v222, %v180
    %vm227 = vcmask 392192
    %v229 = vsel %vm227, %v189, 0
    %v232 = vsel %vm227, %v190, 0
    %v235 = vsel %vm227, %v191, 0
    %v238 = vsel %vm227, %v192, 0
    %240 = vmatprep.subr.mxu0 %v207
    %241 = vmatpush1.msra.mxu0 %v206
    %242 = vmatprep.subr.mxu0 %v209
    %243 = vmatpush1.msra.mxu0 %v208
    %244 = vmatprep.subr.mxu0 %v163
    %245 = vmatpush1.msra.mxu0 %v162
    %246 = vmatprep.subr.mxu0 %v165
    %247 = vmatpush1.msra.mxu0 %v164
    %248 = vmatprep.subr.mxu0 %v224
    %249 = vmatpush1.msra.mxu0 %v223
    %250 = vmatprep.subr.mxu0 %v226
    %251 = vmatpush1.msra.mxu0 %v225
    %252 = vmatprep.subr.mxu0 0.0
    %253 = vmatpush1.msra.mxu0 0.0
    %254 = vmatprep.subr.mxu0 0.0
    %255 = vmatpush1.msra.mxu0 0.0
    %256 = vmatprep.subr.mxu0 0.0
    %257 = vmatpush1.msra.mxu0 0.0
    %258 = vmatprep.subr.mxu0 0.0
    %259 = vmatpush1.msra.mxu0 0.0
    %260 = vmatprep.subr.mxu0 0.0
    %261 = vmatpush1.msra.mxu0 0.0
    %262 = vmatprep.subr.mxu0 0.0
    %263 = vmatpush1.msra.mxu0 0.0
    %264 = vmatprep.subr.mxu0 0.0
    %265 = vmatpush1.msra.mxu0 0.0
    %266 = vmatprep.subr.mxu0 0.0
    %267 = vmatpush1.msra.mxu0 0.0
    %268 = vmatprep.subr.mxu0 0.0
    %269 = vmatpush1.msra.mxu0 0.0
    %270 = vmatprep.subr.mxu0 0.0
    %271 = vmatpush1.msra.mxu0 0.0
    %272 = vmatprep.subr.mxu0 0.0
    %273 = vmatpush1.msra.mxu0 0.0
    %274 = vmatprep.subr.mxu0 0.0
    %275 = vmatpush1.msra.mxu0 0.0
    %276 = vmatprep.subr.mxu0 0.0
    %277 = vmatpush1.msra.mxu0 0.0
    %278 = vmatprep.subr.mxu0 0.0
    %279 = vmatpush1.msra.mxu0 0.0
    %280 = vmatprep.subr.mxu0 0.0
    %281 = vmatpush1.msra.mxu0 0.0
    %282 = vmatprep.subr.mxu0 0.0
    %283 = vmatpush1.msra.mxu0 0.0
    %284 = vmatprep.subr.mxu0 0.0
    %285 = vmatpush1.msra.mxu0 0.0
    %286 = vmatprep.subr.mxu0 0.0
    %287 = vmatpush1.msra.mxu0 0.0
    %288 = vmatprep.subr.mxu0 0.0
    %289 = vmatpush1.msra.mxu0 0.0
    %290 = vmatprep.subr.mxu0 0.0
    %291 = vmatpush1.msra.mxu0 0.0
    %292 = vmatprep.subr.mxu0 0.0
    %293 = vmatpush1.msra.mxu0 0.0
    %294 = vmatprep.subr.mxu0 0.0
    %295 = vmatpush1.msra.mxu0 0.0
    %296 = vmatprep.subr.mxu0 0.0
    %297 = vmatpush1.msra.mxu0 0.0
    %298 = vmatprep.subr.mxu0 0.0
    %299 = vmatpush1.msra.mxu0 0.0
    %300 = vmatprep.subr.mxu0 0.0
    %301 = vmatpush1.msra.mxu0 0.0
    %302 = vmatprep.subr.mxu0 0.0
    %303 = vmatpush1.msra.mxu0 0.0
    %304 = vmatprep.mubr.f32.mxu0 0.0
    %305 = vmatmul.mubr.f32.gmra.mrb[0].mxu0 %v229
    %v306 = vpop.f32.mrb[0].mxu0
    %v307 = vadd.f32 0.0, %v306
    %v308 = vpop.f32.mrb[0].mxu0
    %v309 = vadd.f32 0.0, %v308
    %310 = vmatprep.mubr.f32.mxu0 0.0
    %311 = vmatmul.mubr.f32.gmra.mrb[0].mxu0 %v232
    %v312 = vpop.f32.mrb[0].mxu0
    %v313 = vadd.f32 0.0, %v312
    %v314 = vpop.f32.mrb[0].mxu0
    %v315 = vadd.f32 0.0, %v314
    %316 = vmatprep.mubr.f32.mxu0 0.0
    %317 = vmatmul.mubr.f32.gmra.mrb[0].mxu0 %v235
    %v318 = vpop.f32.mrb[0].mxu0
    %v319 = vadd.f32 0.0, %v318
    %v320 = vpop.f32.mrb[0].mxu0
    %v321 = vadd.f32 0.0, %v320
    %322 = vmatprep.mubr.f32.mxu0 0.0
    %323 = vmatmul.mubr.f32.gmra.mrb[0].mxu0 %v238
    %v324 = vpop.f32.mrb[0].mxu0
    %v325 = vadd.f32 0.0, %v324
    %v326 = vpop.f32.mrb[0].mxu0
    %v327 = vadd.f32 0.0, %v326
    %328 = vdwg.mxu0
    %v329 = vadd.f32 %v307, %v309
    %330 = vadd.xlane.f32.xlu0 %v329
    %v331 = vpop.xlane.xlu0 %330
    %v332 = vadd.f32 %v313, %v315
    %333 = vadd.xlane.f32.xlu0 %v332
    %v334 = vpop.xlane.xlu0 %333
    %v335 = vadd.f32 %v319, %v321
    %336 = vadd.xlane.f32.xlu0 %v335
    %v337 = vpop.xlane.xlu0 %336
    %v338 = vadd.f32 %v325, %v327
    %339 = vadd.xlane.f32.xlu0 %v338
    %v340 = vpop.xlane.xlu0 %339
    %v341 = vrcp.pop 256.0
    %v342 = vmul.f32 %v331, %v341
    %v343 = vmul.f32 %v334, %v341
    %v344 = vmul.f32 %v337, %v341
    %v345 = vmul.f32 %v340, %v341
    %v346 = vsub.f32 %v307, %v342
    %v347 = vsub.f32 %v309, %v342
    %v348 = vsub.f32 %v313, %v343
    %v349 = vsub.f32 %v315, %v343
    %v350 = vsub.f32 %v319, %v344
    %v351 = vsub.f32 %v321, %v344
    %v352 = vsub.f32 %v325, %v345
    %v353 = vsub.f32 %v327, %v345
    %v354 = vmul.f32 %v346, %v346
    %v355 = vmul.f32 %v347, %v347
    %v356 = vmul.f32 %v348, %v348
    %v357 = vmul.f32 %v349, %v349
    %v358 = vmul.f32 %v350, %v350
    %v359 = vmul.f32 %v351, %v351
    %v360 = vmul.f32 %v352, %v352
    %v361 = vmul.f32 %v353, %v353
    %v362 = vadd.f32 %v354, %v355
    %363 = vadd.xlane.f32.xlu0 %v362
    %v364 = vpop.xlane.xlu0 %363
    %v365 = vadd.f32 %v356, %v357
    %366 = vadd.xlane.f32.xlu0 %v365
    %v367 = vpop.xlane.xlu0 %366
    %v368 = vadd.f32 %v358, %v359
    %369 = vadd.xlane.f32.xlu0 %v368
    %v370 = vpop.xlane.xlu0 %369
    %v371 = vadd.f32 %v360, %v361
    %372 = vadd.xlane.f32.xlu0 %v371
    %v373 = vpop.xlane.xlu0 %372
    %v374 = vmul.f32 %v364, %v341
    %v375 = vmul.f32 %v367, %v341
    %v376 = vmul.f32 %v370, %v341
    %v377 = vmul.f32 %v373, %v341
    %v378 = vadd.f32 %v374, 0.001
    %v379 = vadd.f32 %v375, 0.001
    %v380 = vadd.f32 %v376, 0.001
    %v381 = vadd.f32 %v377, 0.001
    %v382 = vrsqrt.pop %v378
    %v383 = vrsqrt.pop %v379
    %v384 = vrsqrt.pop %v380
    %v385 = vrsqrt.pop %v381
    %v386 = vmul.f32 %v181, %v382
    %v387 = vmul.f32 %v182, %v383
    %v388 = vmul.f32 %v183, %v384
    %v389 = vmul.f32 %v184, %v385
    %v390 = vmul.f32 %v342, %v386
    %v391 = vmul.f32 %v343, %v387
    %v392 = vmul.f32 %v344, %v388
    %v393 = vmul.f32 %v345, %v389
    %398 = vrot.lane.b32.xlu0 %v390, 1
    %v399 = vpop.permute.xlu0 %398
    %400 = vrot.lane.b32.xlu0 %v391, 1
    %v401 = vpop.permute.xlu0 %400
    %402 = vrot.lane.b32.xlu0 %v392, 1
    %v403 = vpop.permute.xlu0 %402
    %404 = vrot.lane.b32.xlu0 %v393, 1
    %v405 = vpop.permute.xlu0 %404
    %v410 = vsub.f32 %v181, %v399
    %v411 = vsub.f32 %v182, %v401
    %v412 = vsub.f32 %v183, %v403
    %v413 = vsub.f32 %v184, %v405
    %415 = vset.pattern.permute.xlu0 0
    %416 = vperm.xlu0 %415, %v386
    %v417 = vpop.permute.xlu0 %416
    %420 = vset.pattern.permute.xlu0 0
    %421 = vperm.xlu0 %420, %v387
    %v422 = vpop.permute.xlu0 %421
    %425 = vset.pattern.permute.xlu0 0
    %426 = vperm.xlu0 %425, %v388
    %v427 = vpop.permute.xlu0 %426
    %430 = vset.pattern.permute.xlu0 0
    %431 = vperm.xlu0 %430, %v389
    %v432 = vpop.permute.xlu0 %431
    %v434 = vmul.f32 %v307, %v417
    %v435 = vmul.f32 %v309, %v417
    %v436 = vmul.f32 %v313, %v422
    %v437 = vmul.f32 %v315, %v422
    %v438 = vmul.f32 %v319, %v427
    %v439 = vmul.f32 %v321, %v427
    %v440 = vmul.f32 %v325, %v432
    %v441 = vmul.f32 %v327, %v432
    %443 = vset.pattern.permute.xlu0 1
    %444 = vperm.xlu0 %443, %v410
    %v445 = vpop.permute.xlu0 %444
    %448 = vset.pattern.permute.xlu0 1
    %449 = vperm.xlu0 %448, %v411
    %v450 = vpop.permute.xlu0 %449
    %453 = vset.pattern.permute.xlu0 1
    %454 = vperm.xlu0 %453, %v412
    %v455 = vpop.permute.xlu0 %454
    %458 = vset.pattern.permute.xlu0 1
    %459 = vperm.xlu0 %458, %v413
    %v460 = vpop.permute.xlu0 %459
    %v462 = vadd.f32 %v434, %v445
    %v463 = vadd.f32 %v435, %v445
    %v464 = vadd.f32 %v436, %v450
    %v465 = vadd.f32 %v437, %v450
    %v466 = vadd.f32 %v438, %v455
    %v467 = vadd.f32 %v439, %v455
    %v468 = vadd.f32 %v440, %v460
    %v469 = vadd.f32 %v441, %v460
    %v470 = vmax.f32 %v462, 0.0
    %v471 = vmax.f32 %v463, 0.0
    %v472 = vmax.f32 %v464, 0.0
    %v473 = vmax.f32 %v465, 0.0
    %v474 = vmax.f32 %v466, 0.0
    %v475 = vmax.f32 %v467, 0.0
    %v476 = vmax.f32 %v468, 0.0
    %v477 = vmax.f32 %v469, 0.0
    %v478 = vld [vmem:[#allocation6] sm:$0xff]
    %v479 = vld [vmem:[#allocation6 + $0x8] sm:$0xff]
    %v480 = vld [vmem:[#allocation6 + $0x10] sm:$0xff]
    %v481 = vld [vmem:[#allocation6 + $0x18] sm:$0xff]
    %482 = vrot.lane.b32.xlu0 %v470, 1
    %v483 = vpop.permute.xlu0 %482
    %484 = vrot.lane.b32.xlu0 %v472, 1
    %v485 = vpop.permute.xlu0 %484
    %486 = vrot.lane.b32.xlu0 %v474, 1
    %v487 = vpop.permute.xlu0 %486
    %488 = vrot.lane.b32.xlu0 %v476, 1
    %v489 = vpop.permute.xlu0 %488
    %490 = vrot.lane.b32.xlu0 %v471, 1
    %v491 = vpop.permute.xlu0 %490
    %492 = vrot.lane.b32.xlu0 %v473, 1
    %v493 = vpop.permute.xlu0 %492
    %494 = vrot.lane.b32.xlu0 %v475, 1
    %v495 = vpop.permute.xlu0 %494
    %496 = vrot.lane.b32.xlu0 %v477, 1
    %v497 = vpop.permute.xlu0 %496
    %v498 = vsel %vm201, %v483, %v491
    %v499 = vsel %vm201, %v485, %v493
    %v500 = vsel %vm201, %v487, %v495
    %v501 = vsel %vm201, %v489, %v497
    %v502 = vsel %vm201, %v491, %v483
    %v503 = vsel %vm201, %v493, %v485
    %v504 = vsel %vm201, %v495, %v487
    %v505 = vsel %vm201, %v497, %v489
    %v506 = vmul.f32 %v502, %v173
    %v507 = vmul.f32 %v498, %v174
    %v508 = vmul.f32 %v503, %v173
    %v509 = vmul.f32 %v499, %v174
    %v510 = vmul.f32 %v504, %v173
    %v511 = vmul.f32 %v500, %v174
    %v512 = vmul.f32 %v505, %v173
    %v513 = vmul.f32 %v501, %v174
    %514 = vrot.lane.b32.xlu0 %v470, 127
    %v515 = vpop.permute.xlu0 %514
    %516 = vrot.lane.b32.xlu0 %v472, 127
    %v517 = vpop.permute.xlu0 %516
    %518 = vrot.lane.b32.xlu0 %v474, 127
    %v519 = vpop.permute.xlu0 %518
    %520 = vrot.lane.b32.xlu0 %v476, 127
    %v521 = vpop.permute.xlu0 %520
    %522 = vrot.lane.b32.xlu0 %v471, 127
    %v523 = vpop.permute.xlu0 %522
    %524 = vrot.lane.b32.xlu0 %v473, 127
    %v525 = vpop.permute.xlu0 %524
    %526 = vrot.lane.b32.xlu0 %v475, 127
    %v527 = vpop.permute.xlu0 %526
    %528 = vrot.lane.b32.xlu0 %v477, 127
    %v529 = vpop.permute.xlu0 %528
    %v530 = vsel %vm218, %v515, %v523
    %v531 = vsel %vm218, %v517, %v525
    %v532 = vsel %vm218, %v519, %v527
    %v533 = vsel %vm218, %v521, %v529
    %v534 = vsel %vm218, %v523, %v515
    %v535 = vsel %vm218, %v525, %v517
    %v536 = vsel %vm218, %v527, %v519
    %v537 = vsel %vm218, %v529, %v521
    %v538 = vmul.f32 %v530, %v179
    %v539 = vmul.f32 %v534, %v180
    %v540 = vmul.f32 %v531, %v179
    %v541 = vmul.f32 %v535, %v180
    %v542 = vmul.f32 %v532, %v179
    %v543 = vmul.f32 %v536, %v180
    %v544 = vmul.f32 %v533, %v179
    %v545 = vmul.f32 %v537, %v180
    %vm546 = vcmask 785408
    %v548 = vsel %vm546, %v478, 0
    %v551 = vsel %vm546, %v479, 0
    %v554 = vsel %vm546, %v480, 0
    %v557 = vsel %vm546, %v481, 0
    %559 = vmatprep.subr.mxu0 %v507
    %560 = vmatpush1.msra.mxu0 %v506
    %561 = vmatprep.subr.mxu0 %v509
    %562 = vmatpush1.msra.mxu0 %v508
    %563 = vmatprep.subr.mxu0 %v511
    %564 = vmatpush1.msra.mxu0 %v510
    %565 = vmatprep.subr.mxu0 %v513
    %566 = vmatpush1.msra.mxu0 %v512
    %567 = vmatprep.subr.mxu0 %v471
    %568 = vmatpush1.msra.mxu0 %v470
    %569 = vmatprep.subr.mxu0 %v473
    %570 = vmatpush1.msra.mxu0 %v472
    %571 = vmatprep.subr.mxu0 %v475
    %572 = vmatpush1.msra.mxu0 %v474
    %573 = vmatprep.subr.mxu0 %v477
    %574 = vmatpush1.msra.mxu0 %v476
    %575 = vmatprep.subr.mxu0 %v539
    %576 = vmatpush1.msra.mxu0 %v538
    %577 = vmatprep.subr.mxu0 %v541
    %578 = vmatpush1.msra.mxu0 %v540
    %579 = vmatprep.subr.mxu0 %v543
    %580 = vmatpush1.msra.mxu0 %v542
    %581 = vmatprep.subr.mxu0 %v545
    %582 = vmatpush1.msra.mxu0 %v544
    %583 = vmatprep.subr.mxu0 0.0
    %584 = vmatpush1.msra.mxu0 0.0
    %585 = vmatprep.subr.mxu0 0.0
    %586 = vmatpush1.msra.mxu0 0.0
    %587 = vmatprep.subr.mxu0 0.0
    %588 = vmatpush1.msra.mxu0 0.0
    %589 = vmatprep.subr.mxu0 0.0
    %590 = vmatpush1.msra.mxu0 0.0
    %591 = vmatprep.subr.mxu0 0.0
    %592 = vmatpush1.msra.mxu0 0.0
    %593 = vmatprep.subr.mxu0 0.0
    %594 = vmatpush1.msra.mxu0 0.0
    %595 = vmatprep.subr.mxu0 0.0
    %596 = vmatpush1.msra.mxu0 0.0
    %597 = vmatprep.subr.mxu0 0.0
    %598 = vmatpush1.msra.mxu0 0.0
    %599 = vmatprep.subr.mxu0 0.0
    %600 = vmatpush1.msra.mxu0 0.0
    %601 = vmatprep.subr.mxu0 0.0
    %602 = vmatpush1.msra.mxu0 0.0
    %603 = vmatprep.subr.mxu0 0.0
    %604 = vmatpush1.msra.mxu0 0.0
    %605 = vmatprep.subr.mxu0 0.0
    %606 = vmatpush1.msra.mxu0 0.0
    %607 = vmatprep.subr.mxu0 0.0
    %608 = vmatpush1.msra.mxu0 0.0
    %609 = vmatprep.subr.mxu0 0.0
    %610 = vmatpush1.msra.mxu0 0.0
    %611 = vmatprep.subr.mxu0 0.0
    %612 = vmatpush1.msra.mxu0 0.0
    %613 = vmatprep.subr.mxu0 0.0
    %614 = vmatpush1.msra.mxu0 0.0
    %615 = vmatprep.subr.mxu0 0.0
    %616 = vmatpush1.msra.mxu0 0.0
    %617 = vmatprep.subr.mxu0 0.0
    %618 = vmatpush1.msra.mxu0 0.0
    %619 = vmatprep.subr.mxu0 0.0
    %620 = vmatpush1.msra.mxu0 0.0
    %621 = vmatprep.subr.mxu0 0.0
    %622 = vmatpush1.msra.mxu0 0.0
    %623 = vmatprep.mubr.f32.mxu0 0.0
    %624 = vmatmul.mubr.f32.gmra.mrb[0].mxu0 %v548
    %v625 = vpop.f32.mrb[0].mxu0
    %v626 = vadd.f32 0.0, %v625
    %v627 = vpop.f32.mrb[0].mxu0
    %v628 = vadd.f32 0.0, %v627
    %629 = vmatprep.mubr.f32.mxu0 0.0
    %630 = vmatmul.mubr.f32.gmra.mrb[0].mxu0 %v551
    %v631 = vpop.f32.mrb[0].mxu0
    %v632 = vadd.f32 0.0, %v631
    %v633 = vpop.f32.mrb[0].mxu0
    %v634 = vadd.f32 0.0, %v633
    %635 = vmatprep.mubr.f32.mxu0 0.0
    %636 = vmatmul.mubr.f32.gmra.mrb[0].mxu0 %v554
    %v637 = vpop.f32.mrb[0].mxu0
    %v638 = vadd.f32 0.0, %v637
    %v639 = vpop.f32.mrb[0].mxu0
    %v640 = vadd.f32 0.0, %v639
    %641 = vmatprep.mubr.f32.mxu0 0.0
    %642 = vmatmul.mubr.f32.gmra.mrb[0].mxu0 %v557
    %v643 = vpop.f32.mrb[0].mxu0
    %v644 = vadd.f32 0.0, %v643
    %v645 = vpop.f32.mrb[0].mxu0
    %v646 = vadd.f32 0.0, %v645
    %647 = vdwg.mxu0
    %v648 = vadd.f32 %v626, %v628
    %649 = vadd.xlane.f32.xlu0 %v648
    %v650 = vpop.xlane.xlu0 %649
    %v651 = vadd.f32 %v632, %v634
    %652 = vadd.xlane.f32.xlu0 %v651
    %v653 = vpop.xlane.xlu0 %652
    %v654 = vadd.f32 %v638, %v640
    %655 = vadd.xlane.f32.xlu0 %v654
    %v656 = vpop.xlane.xlu0 %655
    %v657 = vadd.f32 %v644, %v646
    %658 = vadd.xlane.f32.xlu0 %v657
    %v659 = vpop.xlane.xlu0 %658
    %v660 = vmul.f32 %v650, %v341
    %v661 = vmul.f32 %v653, %v341
    %v662 = vmul.f32 %v656, %v341
    %v663 = vmul.f32 %v659, %v341
    %v664 = vsub.f32 %v626, %v660
    %v665 = vsub.f32 %v628, %v660
    %v666 = vsub.f32 %v632, %v661
    %v667 = vsub.f32 %v634, %v661
    %v668 = vsub.f32 %v638, %v662
    %v669 = vsub.f32 %v640, %v662
    %v670 = vsub.f32 %v644, %v663
    %v671 = vsub.f32 %v646, %v663
    %v672 = vmul.f32 %v664, %v664
    %v673 = vmul.f32 %v665, %v665
    %v674 = vmul.f32 %v666, %v666
    %v675 = vmul.f32 %v667, %v667
    %v676 = vmul.f32 %v668, %v668
    %v677 = vmul.f32 %v669, %v669
    %v678 = vmul.f32 %v670, %v670
    %v679 = vmul.f32 %v671, %v671
    %v680 = vadd.f32 %v672, %v673
    %681 = vadd.xlane.f32.xlu0 %v680
    %v682 = vpop.xlane.xlu0 %681
    %v683 = vadd.f32 %v674, %v675
    %684 = vadd.xlane.f32.xlu0 %v683
    %v685 = vpop.xlane.xlu0 %684
    %v686 = vadd.f32 %v676, %v677
    %687 = vadd.xlane.f32.xlu0 %v686
    %v688 = vpop.xlane.xlu0 %687
    %v689 = vadd.f32 %v678, %v679
    %690 = vadd.xlane.f32.xlu0 %v689
    %v691 = vpop.xlane.xlu0 %690
    %v692 = vmul.f32 %v682, %v341
    %v693 = vmul.f32 %v685, %v341
    %v694 = vmul.f32 %v688, %v341
    %v695 = vmul.f32 %v691, %v341
    %v696 = vadd.f32 %v692, 0.001
    %v697 = vadd.f32 %v693, 0.001
    %v698 = vadd.f32 %v694, 0.001
    %v699 = vadd.f32 %v695, 0.001
    %v700 = vrsqrt.pop %v696
    %v701 = vrsqrt.pop %v697
    %v702 = vrsqrt.pop %v698
    %v703 = vrsqrt.pop %v699
    %v704 = vmul.f32 %v181, %v700
    %v705 = vmul.f32 %v182, %v701
    %v706 = vmul.f32 %v183, %v702
    %v707 = vmul.f32 %v184, %v703
    %v708 = vmul.f32 %v660, %v704
    %v709 = vmul.f32 %v661, %v705
    %v710 = vmul.f32 %v662, %v706
    %v711 = vmul.f32 %v663, %v707
    %716 = vrot.lane.b32.xlu0 %v708, 1
    %v717 = vpop.permute.xlu0 %716
    %718 = vrot.lane.b32.xlu0 %v709, 1
    %v719 = vpop.permute.xlu0 %718
    %720 = vrot.lane.b32.xlu0 %v710, 1
    %v721 = vpop.permute.xlu0 %720
    %722 = vrot.lane.b32.xlu0 %v711, 1
    %v723 = vpop.permute.xlu0 %722
    %v728 = vsub.f32 %v181, %v717
    %v729 = vsub.f32 %v182, %v719
    %v730 = vsub.f32 %v183, %v721
    %v731 = vsub.f32 %v184, %v723
    %733 = vset.pattern.permute.xlu0 2
    %734 = vperm.xlu0 %733, %v704
    %v735 = vpop.permute.xlu0 %734
    %738 = vset.pattern.permute.xlu0 2
    %739 = vperm.xlu0 %738, %v705
    %v740 = vpop.permute.xlu0 %739
    %743 = vset.pattern.permute.xlu0 2
    %744 = vperm.xlu0 %743, %v706
    %v745 = vpop.permute.xlu0 %744
    %748 = vset.pattern.permute.xlu0 2
    %749 = vperm.xlu0 %748, %v707
    %v750 = vpop.permute.xlu0 %749
    %v752 = vmul.f32 %v626, %v735
    %v753 = vmul.f32 %v628, %v735
    %v754 = vmul.f32 %v632, %v740
    %v755 = vmul.f32 %v634, %v740
    %v756 = vmul.f32 %v638, %v745
    %v757 = vmul.f32 %v640, %v745
    %v758 = vmul.f32 %v644, %v750
    %v759 = vmul.f32 %v646, %v750
    %761 = vset.pattern.permute.xlu0 3
    %762 = vperm.xlu0 %761, %v728
    %v763 = vpop.permute.xlu0 %762
    %766 = vset.pattern.permute.xlu0 3
    %767 = vperm.xlu0 %766, %v729
    %v768 = vpop.permute.xlu0 %767
    %771 = vset.pattern.permute.xlu0 3
    %772 = vperm.xlu0 %771, %v730
    %v773 = vpop.permute.xlu0 %772
    %776 = vset.pattern.permute.xlu0 3
    %777 = vperm.xlu0 %776, %v731
    %v778 = vpop.permute.xlu0 %777
    %v780 = vadd.f32 %v752, %v763
    %v781 = vadd.f32 %v753, %v763
    %v782 = vadd.f32 %v754, %v768
    %v783 = vadd.f32 %v755, %v768
    %v784 = vadd.f32 %v756, %v773
    %v785 = vadd.f32 %v757, %v773
    %v786 = vadd.f32 %v758, %v778
    %v787 = vadd.f32 %v759, %v778
    %v788 = vmax.f32 %v780, 0.0
    %v789 = vmax.f32 %v781, 0.0
    %v790 = vmax.f32 %v782, 0.0
    %v791 = vmax.f32 %v783, 0.0
    %v792 = vmax.f32 %v784, 0.0
    %v793 = vmax.f32 %v785, 0.0
    %v794 = vmax.f32 %v786, 0.0
    %v795 = vmax.f32 %v787, 0.0
    %v796 = vld [vmem:[#allocation7] sm:$0xff]
    %v797 = vld [vmem:[#allocation7 + $0x8] sm:$0xff]
    %v798 = vld [vmem:[#allocation7 + $0x10] sm:$0xff]
    %v799 = vld [vmem:[#allocation7 + $0x18] sm:$0xff]
    %800 = vrot.lane.b32.xlu0 %v788, 1
    %v801 = vpop.permute.xlu0 %800
    %802 = vrot.lane.b32.xlu0 %v790, 1
    %v803 = vpop.permute.xlu0 %802
    %804 = vrot.lane.b32.xlu0 %v792, 1
    %v805 = vpop.permute.xlu0 %804
    %806 = vrot.lane.b32.xlu0 %v794, 1
    %v807 = vpop.permute.xlu0 %806
    %808 = vrot.lane.b32.xlu0 %v789, 1
    %v809 = vpop.permute.xlu0 %808
    %810 = vrot.lane.b32.xlu0 %v791, 1
    %v811 = vpop.permute.xlu0 %810
    %812 = vrot.lane.b32.xlu0 %v793, 1
    %v813 = vpop.permute.xlu0 %812
    %814 = vrot.lane.b32.xlu0 %v795, 1
    %v815 = vpop.permute.xlu0 %814
    %v816 = vsel %vm201, %v801, %v809
    %v817 = vsel %vm201, %v803, %v811
    %v818 = vsel %vm201, %v805, %v813
    %v819 = vsel %vm201, %v807, %v815
    %v820 = vsel %vm201, %v809, %v801
    %v821 = vsel %vm201, %v811, %v803
    %v822 = vsel %vm201, %v813, %v805
    %v823 = vsel %vm201, %v815, %v807
    %v824 = vmul.f32 %v820, %v173
    %v825 = vmul.f32 %v816, %v174
    %v826 = vmul.f32 %v821, %v173
    %v827 = vmul.f32 %v817, %v174
    %v828 = vmul.f32 %v822, %v173
    %v829 = vmul.f32 %v818, %v174
    %v830 = vmul.f32 %v823, %v173
    %v831 = vmul.f32 %v819, %v174
    %832 = vrot.lane.b32.xlu0 %v788, 127
    %v833 = vpop.permute.xlu0 %832
    %834 = vrot.lane.b32.xlu0 %v790, 127
    %v835 = vpop.permute.xlu0 %834
    %836 = vrot.lane.b32.xlu0 %v792, 127
    %v837 = vpop.permute.xlu0 %836
    %838 = vrot.lane.b32.xlu0 %v794, 127
    %v839 = vpop.permute.xlu0 %838
    %840 = vrot.lane.b32.xlu0 %v789, 127
    %v841 = vpop.permute.xlu0 %840
    %842 = vrot.lane.b32.xlu0 %v791, 127
    %v843 = vpop.permute.xlu0 %842
    %844 = vrot.lane.b32.xlu0 %v793, 127
    %v845 = vpop.permute.xlu0 %844
    %846 = vrot.lane.b32.xlu0 %v795, 127
    %v847 = vpop.permute.xlu0 %846
    %v848 = vsel %vm218, %v833, %v841
    %v849 = vsel %vm218, %v835, %v843
    %v850 = vsel %vm218, %v837, %v845
    %v851 = vsel %vm218, %v839, %v847
    %v852 = vsel %vm218, %v841, %v833
    %v853 = vsel %vm218, %v843, %v835
    %v854 = vsel %vm218, %v845, %v837
    %v855 = vsel %vm218, %v847, %v839
    %v856 = vmul.f32 %v848, %v179
    %v857 = vmul.f32 %v852, %v180
    %v858 = vmul.f32 %v849, %v179
    %v859 = vmul.f32 %v853, %v180
    %v860 = vmul.f32 %v850, %v179
    %v861 = vmul.f32 %v854, %v180
    %v862 = vmul.f32 %v851, %v179
    %v863 = vmul.f32 %v855, %v180
    %v865 = vsel %vm546, %v796, 0
    %v868 = vsel %vm546, %v797, 0
    %v871 = vsel %vm546, %v798, 0
    %v874 = vsel %vm546, %v799, 0
    %876 = vmatprep.subr.mxu0 %v825
    %877 = vmatpush1.msra.mxu0 %v824
    %878 = vmatprep.subr.mxu0 %v827
    %879 = vmatpush1.msra.mxu0 %v826
    %880 = vmatprep.subr.mxu0 %v829
    %881 = vmatpush1.msra.mxu0 %v828
    %882 = vmatprep.subr.mxu0 %v831
    %883 = vmatpush1.msra.mxu0 %v830
    %884 = vmatprep.subr.mxu0 %v789
    %885 = vmatpush1.msra.mxu0 %v788
    %886 = vmatprep.subr.mxu0 %v791
    %887 = vmatpush1.msra.mxu0 %v790
    %888 = vmatprep.subr.mxu0 %v793
    %889 = vmatpush1.msra.mxu0 %v792
    %890 = vmatprep.subr.mxu0 %v795
    %891 = vmatpush1.msra.mxu0 %v794
    %892 = vmatprep.subr.mxu0 %v857
    %893 = vmatpush1.msra.mxu0 %v856
    %894 = vmatprep.subr.mxu0 %v859
    %895 = vmatpush1.msra.mxu0 %v858
    %896 = vmatprep.subr.mxu0 %v861
    %897 = vmatpush1.msra.mxu0 %v860
    %898 = vmatprep.subr.mxu0 %v863
    %899 = vmatpush1.msra.mxu0 %v862
    %900 = vmatprep.subr.mxu0 0.0
    %901 = vmatpush1.msra.mxu0 0.0
    %902 = vmatprep.subr.mxu0 0.0
    %903 = vmatpush1.msra.mxu0 0.0
    %904 = vmatprep.subr.mxu0 0.0
    %905 = vmatpush1.msra.mxu0 0.0
    %906 = vmatprep.subr.mxu0 0.0
    %907 = vmatpush1.msra.mxu0 0.0
    %908 = vmatprep.subr.mxu0 0.0
    %909 = vmatpush1.msra.mxu0 0.0
    %910 = vmatprep.subr.mxu0 0.0
    %911 = vmatpush1.msra.mxu0 0.0
    %912 = vmatprep.subr.mxu0 0.0
    %913 = vmatpush1.msra.mxu0 0.0
    %914 = vmatprep.subr.mxu0 0.0
    %915 = vmatpush1.msra.mxu0 0.0
    %916 = vmatprep.subr.mxu0 0.0
    %917 = vmatpush1.msra.mxu0 0.0
    %918 = vmatprep.subr.mxu0 0.0
    %919 = vmatpush1.msra.mxu0 0.0
    %920 = vmatprep.subr.mxu0 0.0
    %921 = vmatpush1.msra.mxu0 0.0
    %922 = vmatprep.subr.mxu0 0.0
    %923 = vmatpush1.msra.mxu0 0.0
    %924 = vmatprep.subr.mxu0 0.0
    %925 = vmatpush1.msra.mxu0 0.0
    %926 = vmatprep.subr.mxu0 0.0
    %927 = vmatpush1.msra.mxu0 0.0
    %928 = vmatprep.subr.mxu0 0.0
    %929 = vmatpush1.msra.mxu0 0.0
    %930 = vmatprep.subr.mxu0 0.0
    %931 = vmatpush1.msra.mxu0 0.0
    %932 = vmatprep.subr.mxu0 0.0
    %933 = vmatpush1.msra.mxu0 0.0
    %934 = vmatprep.subr.mxu0 0.0
    %935 = vmatpush1.msra.mxu0 0.0
    %936 = vmatprep.subr.mxu0 0.0
    %937 = vmatpush1.msra.mxu0 0.0
    %938 = vmatprep.subr.mxu0 0.0
    %939 = vmatpush1.msra.mxu0 0.0
    %940 = vmatprep.mubr.f32.mxu0 0.0
    %941 = vmatmul.mubr.f32.gmra.mrb[0].mxu0 %v865
    %v942 = vpop.f32.mrb[0].mxu0
    %v943 = vadd.f32 0.0, %v942
    %v944 = vpop.f32.mrb[0].mxu0
    %v945 = vadd.f32 0.0, %v944
    %946 = vmatprep.mubr.f32.mxu0 0.0
    %947 = vmatmul.mubr.f32.gmra.mrb[0].mxu0 %v868
    %v948 = vpop.f32.mrb[0].mxu0
    %v949 = vadd.f32 0.0, %v948
    %v950 = vpop.f32.mrb[0].mxu0
    %v951 = vadd.f32 0.0, %v950
    %952 = vmatprep.mubr.f32.mxu0 0.0
    %953 = vmatmul.mubr.f32.gmra.mrb[0].mxu0 %v871
    %v954 = vpop.f32.mrb[0].mxu0
    %v955 = vadd.f32 0.0, %v954
    %v956 = vpop.f32.mrb[0].mxu0
    %v957 = vadd.f32 0.0, %v956
    %958 = vmatprep.mubr.f32.mxu0 0.0
    %959 = vmatmul.mubr.f32.gmra.mrb[0].mxu0 %v874
    %v960 = vpop.f32.mrb[0].mxu0
    %v961 = vadd.f32 0.0, %v960
    %v962 = vpop.f32.mrb[0].mxu0
    %v963 = vadd.f32 0.0, %v962
    %964 = vdwg.mxu0
    %v965 = vadd.f32 %v943, %v945
    %966 = vadd.xlane.f32.xlu0 %v965
    %v967 = vpop.xlane.xlu0 %966
    %v968 = vadd.f32 %v949, %v951
    %969 = vadd.xlane.f32.xlu0 %v968
    %v970 = vpop.xlane.xlu0 %969
    %v971 = vadd.f32 %v955, %v957
    %972 = vadd.xlane.f32.xlu0 %v971
    %v973 = vpop.xlane.xlu0 %972
    %v974 = vadd.f32 %v961, %v963
    %975 = vadd.xlane.f32.xlu0 %v974
    %v976 = vpop.xlane.xlu0 %975
    %v977 = vmul.f32 %v967, %v341
    %v978 = vmul.f32 %v970, %v341
    %v979 = vmul.f32 %v973, %v341
    %v980 = vmul.f32 %v976, %v341
    %v981 = vsub.f32 %v943, %v977
    %v982 = vsub.f32 %v945, %v977
    %v983 = vsub.f32 %v949, %v978
    %v984 = vsub.f32 %v951, %v978
    %v985 = vsub.f32 %v955, %v979
    %v986 = vsub.f32 %v957, %v979
    %v987 = vsub.f32 %v961, %v980
    %v988 = vsub.f32 %v963, %v980
    %v989 = vmul.f32 %v981, %v981
    %v990 = vmul.f32 %v982, %v982
    %v991 = vmul.f32 %v983, %v983
    %v992 = vmul.f32 %v984, %v984
    %v993 = vmul.f32 %v985, %v985
    %v994 = vmul.f32 %v986, %v986
    %v995 = vmul.f32 %v987, %v987
    %v996 = vmul.f32 %v988, %v988
    %v997 = vadd.f32 %v989, %v990
    %998 = vadd.xlane.f32.xlu0 %v997
    %v999 = vpop.xlane.xlu0 %998
    %v1000 = vadd.f32 %v991, %v992
    %1001 = vadd.xlane.f32.xlu0 %v1000
    %v1002 = vpop.xlane.xlu0 %1001
    %v1003 = vadd.f32 %v993, %v994
    %1004 = vadd.xlane.f32.xlu0 %v1003
    %v1005 = vpop.xlane.xlu0 %1004
    %v1006 = vadd.f32 %v995, %v996
    %1007 = vadd.xlane.f32.xlu0 %v1006
    %v1008 = vpop.xlane.xlu0 %1007
    %v1009 = vmul.f32 %v999, %v341
    %v1010 = vmul.f32 %v1002, %v341
    %v1011 = vmul.f32 %v1005, %v341
    %v1012 = vmul.f32 %v1008, %v341
    %v1013 = vadd.f32 %v1009, 0.001
    %v1014 = vadd.f32 %v1010, 0.001
    %v1015 = vadd.f32 %v1011, 0.001
    %v1016 = vadd.f32 %v1012, 0.001
    %v1017 = vrsqrt.pop %v1013
    %v1018 = vrsqrt.pop %v1014
    %v1019 = vrsqrt.pop %v1015
    %v1020 = vrsqrt.pop %v1016
    %v1021 = vmul.f32 %v181, %v1017
    %v1022 = vmul.f32 %v182, %v1018
    %v1023 = vmul.f32 %v183, %v1019
    %v1024 = vmul.f32 %v184, %v1020
    %v1025 = vmul.f32 %v977, %v1021
    %v1026 = vmul.f32 %v978, %v1022
    %v1027 = vmul.f32 %v979, %v1023
    %v1028 = vmul.f32 %v980, %v1024
    %1033 = vrot.lane.b32.xlu0 %v1025, 1
    %v1034 = vpop.permute.xlu0 %1033
    %1035 = vrot.lane.b32.xlu0 %v1026, 1
    %v1036 = vpop.permute.xlu0 %1035
    %1037 = vrot.lane.b32.xlu0 %v1027, 1
    %v1038 = vpop.permute.xlu0 %1037
    %1039 = vrot.lane.b32.xlu0 %v1028, 1
    %v1040 = vpop.permute.xlu0 %1039
    %v1045 = vsub.f32 %v181, %v1034
    %v1046 = vsub.f32 %v182, %v1036
    %v1047 = vsub.f32 %v183, %v1038
    %v1048 = vsub.f32 %v184, %v1040
    %1050 = vset.pattern.permute.xlu0 4
    %1051 = vperm.xlu0 %1050, %v1021
    %v1052 = vpop.permute.xlu0 %1051
    %1055 = vset.pattern.permute.xlu0 4
    %1056 = vperm.xlu0 %1055, %v1022
    %v1057 = vpop.permute.xlu0 %1056
    %1060 = vset.pattern.permute.xlu0 4
    %1061 = vperm.xlu0 %1060, %v1023
    %v1062 = vpop.permute.xlu0 %1061
    %1065 = vset.pattern.permute.xlu0 4
    %1066 = vperm.xlu0 %1065, %v1024
    %v1067 = vpop.permute.xlu0 %1066
    %v1069 = vmul.f32 %v943, %v1052
    %v1070 = vmul.f32 %v945, %v1052
    %v1071 = vmul.f32 %v949, %v1057
    %v1072 = vmul.f32 %v951, %v1057
    %v1073 = vmul.f32 %v955, %v1062
    %v1074 = vmul.f32 %v957, %v1062
    %v1075 = vmul.f32 %v961, %v1067
    %v1076 = vmul.f32 %v963, %v1067
    %1078 = vset.pattern.permute.xlu0 5
    %1079 = vperm.xlu0 %1078, %v1045
    %v1080 = vpop.permute.xlu0 %1079
    %1083 = vset.pattern.permute.xlu0 5
    %1084 = vperm.xlu0 %1083, %v1046
    %v1085 = vpop.permute.xlu0 %1084
    %1088 = vset.pattern.permute.xlu0 5
    %1089 = vperm.xlu0 %1088, %v1047
    %v1090 = vpop.permute.xlu0 %1089
    %1093 = vset.pattern.permute.xlu0 5
    %1094 = vperm.xlu0 %1093, %v1048
    %v1095 = vpop.permute.xlu0 %1094
    %v1097 = vadd.f32 %v1069, %v1080
    %v1098 = vadd.f32 %v1070, %v1080
    %v1099 = vadd.f32 %v1071, %v1085
    %v1100 = vadd.f32 %v1072, %v1085
    %v1101 = vadd.f32 %v1073, %v1090
    %v1102 = vadd.f32 %v1074, %v1090
    %v1103 = vadd.f32 %v1075, %v1095
    %v1104 = vadd.f32 %v1076, %v1095
    %v1105 = vmax.f32 %v1097, 0.0
    %v1106 = vmax.f32 %v1098, 0.0
    %v1107 = vmax.f32 %v1099, 0.0
    %v1108 = vmax.f32 %v1100, 0.0
    %v1109 = vmax.f32 %v1101, 0.0
    %v1110 = vmax.f32 %v1102, 0.0
    %v1111 = vmax.f32 %v1103, 0.0
    %v1112 = vmax.f32 %v1104, 0.0
    %v1113 = vld [vmem:[%s4] sm:$0xff]
    %v1114 = vld [vmem:[%s4 + $0x8] sm:$0xff]
    %v1115 = vld [vmem:[%s4 + $0x10] sm:$0xff]
    %v1116 = vld [vmem:[%s4 + $0x18] sm:$0xff]
    %v1117 = vld [vmem:[%s4 + $0x20] sm:$0xff]
    %v1118 = vld [vmem:[%s4 + $0x28] sm:$0xff]
    %v1119 = vld [vmem:[%s4 + $0x30] sm:$0xff]
    %v1120 = vld [vmem:[%s4 + $0x38] sm:$0xff]
    %1121 = vrot.lane.b32.xlu0 %v1105, 1
    %v1122 = vpop.permute.xlu0 %1121
    %1123 = vrot.lane.b32.xlu0 %v1107, 1
    %v1124 = vpop.permute.xlu0 %1123
    %1125 = vrot.lane.b32.xlu0 %v1109, 1
    %v1126 = vpop.permute.xlu0 %1125
    %1127 = vrot.lane.b32.xlu0 %v1111, 1
    %v1128 = vpop.permute.xlu0 %1127
    %1129 = vrot.lane.b32.xlu0 %v1106, 1
    %v1130 = vpop.permute.xlu0 %1129
    %1131 = vrot.lane.b32.xlu0 %v1108, 1
    %v1132 = vpop.permute.xlu0 %1131
    %1133 = vrot.lane.b32.xlu0 %v1110, 1
    %v1134 = vpop.permute.xlu0 %1133
    %1135 = vrot.lane.b32.xlu0 %v1112, 1
    %v1136 = vpop.permute.xlu0 %1135
    %v1137 = vsel %vm201, %v1122, %v1130
    %v1138 = vsel %vm201, %v1124, %v1132
    %v1139 = vsel %vm201, %v1126, %v1134
    %v1140 = vsel %vm201, %v1128, %v1136
    %v1141 = vsel %vm201, %v1130, %v1122
    %v1142 = vsel %vm201, %v1132, %v1124
    %v1143 = vsel %vm201, %v1134, %v1126
    %v1144 = vsel %vm201, %v1136, %v1128
    %v1145 = vmul.f32 %v1141, %v173
    %v1146 = vmul.f32 %v1137, %v174
    %v1147 = vmul.f32 %v1142, %v173
    %v1148 = vmul.f32 %v1138, %v174
    %v1149 = vmul.f32 %v1143, %v173
    %v1150 = vmul.f32 %v1139, %v174
    %v1151 = vmul.f32 %v1144, %v173
    %v1152 = vmul.f32 %v1140, %v174
    %1153 = vrot.lane.b32.xlu0 %v1105, 127
    %v1154 = vpop.permute.xlu0 %1153
    %1155 = vrot.lane.b32.xlu0 %v1107, 127
    %v1156 = vpop.permute.xlu0 %1155
    %1157 = vrot.lane.b32.xlu0 %v1109, 127
    %v1158 = vpop.permute.xlu0 %1157
    %1159 = vrot.lane.b32.xlu0 %v1111, 127
    %v1160 = vpop.permute.xlu0 %1159
    %1161 = vrot.lane.b32.xlu0 %v1106, 127
    %v1162 = vpop.permute.xlu0 %1161
    %1163 = vrot.lane.b32.xlu0 %v1108, 127
    %v1164 = vpop.permute.xlu0 %1163
    %1165 = vrot.lane.b32.xlu0 %v1110, 127
    %v1166 = vpop.permute.xlu0 %1165
    %1167 = vrot.lane.b32.xlu0 %v1112, 127
    %v1168 = vpop.permute.xlu0 %1167
    %v1169 = vsel %vm218, %v1154, %v1162
    %v1170 = vsel %vm218, %v1156, %v1164
    %v1171 = vsel %vm218, %v1158, %v1166
    %v1172 = vsel %vm218, %v1160, %v1168
    %v1173 = vsel %vm218, %v1162, %v1154
    %v1174 = vsel %vm218, %v1164, %v1156
    %v1175 = vsel %vm218, %v1166, %v1158
    %v1176 = vsel %vm218, %v1168, %v1160
    %v1177 = vmul.f32 %v1169, %v179
    %v1178 = vmul.f32 %v1173, %v180
    %v1179 = vmul.f32 %v1170, %v179
    %v1180 = vmul.f32 %v1174, %v180
    %v1181 = vmul.f32 %v1171, %v179
    %v1182 = vmul.f32 %v1175, %v180
    %v1183 = vmul.f32 %v1172, %v179
    %v1184 = vmul.f32 %v1176, %v180
    %v1186 = vsel %vm546, %v1113, 0
    %v1189 = vsel %vm546, %v1114, 0
    %v1192 = vsel %vm546, %v1115, 0
    %v1195 = vsel %vm546, %v1116, 0
    %v1198 = vsel %vm546, %v1117, 0
    %v1201 = vsel %vm546, %v1118, 0
    %v1204 = vsel %vm546, %v1119, 0
    %v1207 = vsel %vm546, %v1120, 0
    %1209 = vmatprep.subr.mxu0 %v1146
    %1210 = vmatpush1.msra.mxu0 %v1145
    %1211 = vmatprep.subr.mxu0 %v1148
    %1212 = vmatpush1.msra.mxu0 %v1147
    %1213 = vmatprep.subr.mxu0 %v1150
    %1214 = vmatpush1.msra.mxu0 %v1149
    %1215 = vmatprep.subr.mxu0 %v1152
    %1216 = vmatpush1.msra.mxu0 %v1151
    %1217 = vmatprep.subr.mxu0 %v1106
    %1218 = vmatpush1.msra.mxu0 %v1105
    %1219 = vmatprep.subr.mxu0 %v1108
    %1220 = vmatpush1.msra.mxu0 %v1107
    %1221 = vmatprep.subr.mxu0 %v1110
    %1222 = vmatpush1.msra.mxu0 %v1109
    %1223 = vmatprep.subr.mxu0 %v1112
    %1224 = vmatpush1.msra.mxu0 %v1111
    %1225 = vmatprep.subr.mxu0 %v1178
    %1226 = vmatpush1.msra.mxu0 %v1177
    %1227 = vmatprep.subr.mxu0 %v1180
    %1228 = vmatpush1.msra.mxu0 %v1179
    %1229 = vmatprep.subr.mxu0 %v1182
    %1230 = vmatpush1.msra.mxu0 %v1181
    %1231 = vmatprep.subr.mxu0 %v1184
    %1232 = vmatpush1.msra.mxu0 %v1183
    %1233 = vmatprep.subr.mxu0 0.0
    %1234 = vmatpush1.msra.mxu0 0.0
    %1235 = vmatprep.subr.mxu0 0.0
    %1236 = vmatpush1.msra.mxu0 0.0
    %1237 = vmatprep.subr.mxu0 0.0
    %1238 = vmatpush1.msra.mxu0 0.0
    %1239 = vmatprep.subr.mxu0 0.0
    %1240 = vmatpush1.msra.mxu0 0.0
    %1241 = vmatprep.subr.mxu0 0.0
    %1242 = vmatpush1.msra.mxu0 0.0
    %1243 = vmatprep.subr.mxu0 0.0
    %1244 = vmatpush1.msra.mxu0 0.0
    %1245 = vmatprep.subr.mxu0 0.0
    %1246 = vmatpush1.msra.mxu0 0.0
    %1247 = vmatprep.subr.mxu0 0.0
    %1248 = vmatpush1.msra.mxu0 0.0
    %1249 = vmatprep.subr.mxu0 0.0
    %1250 = vmatpush1.msra.mxu0 0.0
    %1251 = vmatprep.subr.mxu0 0.0
    %1252 = vmatpush1.msra.mxu0 0.0
    %1253 = vmatprep.subr.mxu0 0.0
    %1254 = vmatpush1.msra.mxu0 0.0
    %1255 = vmatprep.subr.mxu0 0.0
    %1256 = vmatpush1.msra.mxu0 0.0
    %1257 = vmatprep.subr.mxu0 0.0
    %1258 = vmatpush1.msra.mxu0 0.0
    %1259 = vmatprep.subr.mxu0 0.0
    %1260 = vmatpush1.msra.mxu0 0.0
    %1261 = vmatprep.subr.mxu0 0.0
    %1262 = vmatpush1.msra.mxu0 0.0
    %1263 = vmatprep.subr.mxu0 0.0
    %1264 = vmatpush1.msra.mxu0 0.0
    %1265 = vmatprep.subr.mxu0 0.0
    %1266 = vmatpush1.msra.mxu0 0.0
    %1267 = vmatprep.subr.mxu0 0.0
    %1268 = vmatpush1.msra.mxu0 0.0
    %1269 = vmatprep.subr.mxu0 0.0
    %1270 = vmatpush1.msra.mxu0 0.0
    %1271 = vmatprep.subr.mxu0 0.0
    %1272 = vmatpush1.msra.mxu0 0.0
    %1273 = vmatprep.mubr.f32.mxu0 0.0
    %1274 = vmatmul.mubr.f32.gmra.mrb[0].mxu0 %v1186
    %v1275 = vpop.f32.mrb[0].mxu0
    %v1276 = vadd.f32 0.0, %v1275
    %v1277 = vpop.f32.mrb[0].mxu0
    %v1278 = vadd.f32 0.0, %v1277
    %1279 = vmatprep.mubr.f32.mxu0 0.0
    %1280 = vmatmul.mubr.f32.gmra.mrb[0].mxu0 %v1189
    %v1281 = vpop.f32.mrb[0].mxu0
    %v1282 = vadd.f32 0.0, %v1281
    %v1283 = vpop.f32.mrb[0].mxu0
    %v1284 = vadd.f32 0.0, %v1283
    %1285 = vmatprep.mubr.f32.mxu0 0.0
    %1286 = vmatmul.mubr.f32.gmra.mrb[0].mxu0 %v1192
    %v1287 = vpop.f32.mrb[0].mxu0
    %v1288 = vadd.f32 0.0, %v1287
    %v1289 = vpop.f32.mrb[0].mxu0
    %v1290 = vadd.f32 0.0, %v1289
    %1291 = vmatprep.mubr.f32.mxu0 0.0
    %1292 = vmatmul.mubr.f32.gmra.mrb[0].mxu0 %v1195
    %v1293 = vpop.f32.mrb[0].mxu0
    %v1294 = vadd.f32 0.0, %v1293
    %v1295 = vpop.f32.mrb[0].mxu0
    %v1296 = vadd.f32 0.0, %v1295
    %1297 = vmatprep.mubr.f32.mxu0 0.0
    %1298 = vmatmul.mubr.f32.gmra.mrb[0].mxu0 %v1198
    %v1299 = vpop.f32.mrb[0].mxu0
    %v1300 = vadd.f32 0.0, %v1299
    %v1301 = vpop.f32.mrb[0].mxu0
    %v1302 = vadd.f32 0.0, %v1301
    %1303 = vmatprep.mubr.f32.mxu0 0.0
    %1304 = vmatmul.mubr.f32.gmra.mrb[0].mxu0 %v1201
    %v1305 = vpop.f32.mrb[0].mxu0
    %v1306 = vadd.f32 0.0, %v1305
    %v1307 = vpop.f32.mrb[0].mxu0
    %v1308 = vadd.f32 0.0, %v1307
    %1309 = vmatprep.mubr.f32.mxu0 0.0
    %1310 = vmatmul.mubr.f32.gmra.mrb[0].mxu0 %v1204
    %v1311 = vpop.f32.mrb[0].mxu0
    %v1312 = vadd.f32 0.0, %v1311
    %v1313 = vpop.f32.mrb[0].mxu0
    %v1314 = vadd.f32 0.0, %v1313
    %1315 = vmatprep.mubr.f32.mxu0 0.0
    %1316 = vmatmul.mubr.f32.gmra.mrb[0].mxu0 %v1207
    %v1317 = vpop.f32.mrb[0].mxu0
    %v1318 = vadd.f32 0.0, %v1317
    %v1319 = vpop.f32.mrb[0].mxu0
    %v1320 = vadd.f32 0.0, %v1319
    %1321 = vdwg.mxu0
    %v1322 = vadd.f32 %v1276, %v1278
    %1323 = vadd.xlane.f32.xlu0 %v1322
    %v1324 = vpop.xlane.xlu0 %1323
    %v1325 = vadd.f32 %v1282, %v1284
    %1326 = vadd.xlane.f32.xlu0 %v1325
    %v1327 = vpop.xlane.xlu0 %1326
    %v1328 = vadd.f32 %v1288, %v1290
    %1329 = vadd.xlane.f32.xlu0 %v1328
    %v1330 = vpop.xlane.xlu0 %1329
    %v1331 = vadd.f32 %v1294, %v1296
    %1332 = vadd.xlane.f32.xlu0 %v1331
    %v1333 = vpop.xlane.xlu0 %1332
    %v1334 = vadd.f32 %v1300, %v1302
    %1335 = vadd.xlane.f32.xlu0 %v1334
    %v1336 = vpop.xlane.xlu0 %1335
    %v1337 = vadd.f32 %v1306, %v1308
    %1338 = vadd.xlane.f32.xlu0 %v1337
    %v1339 = vpop.xlane.xlu0 %1338
    %v1340 = vadd.f32 %v1312, %v1314
    %1341 = vadd.xlane.f32.xlu0 %v1340
    %v1342 = vpop.xlane.xlu0 %1341
    %v1343 = vadd.f32 %v1318, %v1320
    %1344 = vadd.xlane.f32.xlu0 %v1343
    %v1345 = vpop.xlane.xlu0 %1344
    %v1346 = vmul.f32 %v1324, %v341
    %v1347 = vmul.f32 %v1327, %v341
    %v1348 = vmul.f32 %v1330, %v341
    %v1349 = vmul.f32 %v1333, %v341
    %v1350 = vmul.f32 %v1336, %v341
    %v1351 = vmul.f32 %v1339, %v341
    %v1352 = vmul.f32 %v1342, %v341
    %v1353 = vmul.f32 %v1345, %v341
    %v1354 = vsub.f32 %v1276, %v1346
    %v1355 = vsub.f32 %v1278, %v1346
    %v1356 = vsub.f32 %v1282, %v1347
    %v1357 = vsub.f32 %v1284, %v1347
    %v1358 = vsub.f32 %v1288, %v1348
    %v1359 = vsub.f32 %v1290, %v1348
    %v1360 = vsub.f32 %v1294, %v1349
    %v1361 = vsub.f32 %v1296, %v1349
    %v1362 = vsub.f32 %v1300, %v1350
    %v1363 = vsub.f32 %v1302, %v1350
    %v1364 = vsub.f32 %v1306, %v1351
    %v1365 = vsub.f32 %v1308, %v1351
    %v1366 = vsub.f32 %v1312, %v1352
    %v1367 = vsub.f32 %v1314, %v1352
    %v1368 = vsub.f32 %v1318, %v1353
    %v1369 = vsub.f32 %v1320, %v1353
    %v1370 = vmul.f32 %v1354, %v1354
    %v1371 = vmul.f32 %v1355, %v1355
    %v1372 = vmul.f32 %v1356, %v1356
    %v1373 = vmul.f32 %v1357, %v1357
    %v1374 = vmul.f32 %v1358, %v1358
    %v1375 = vmul.f32 %v1359, %v1359
    %v1376 = vmul.f32 %v1360, %v1360
    %v1377 = vmul.f32 %v1361, %v1361
    %v1378 = vmul.f32 %v1362, %v1362
    %v1379 = vmul.f32 %v1363, %v1363
    %v1380 = vmul.f32 %v1364, %v1364
    %v1381 = vmul.f32 %v1365, %v1365
    %v1382 = vmul.f32 %v1366, %v1366
    %v1383 = vmul.f32 %v1367, %v1367
    %v1384 = vmul.f32 %v1368, %v1368
    %v1385 = vmul.f32 %v1369, %v1369
    %v1386 = vadd.f32 %v1370, %v1371
    %1387 = vadd.xlane.f32.xlu0 %v1386
    %v1388 = vpop.xlane.xlu0 %1387
    %v1389 = vadd.f32 %v1372, %v1373
    %1390 = vadd.xlane.f32.xlu0 %v1389
    %v1391 = vpop.xlane.xlu0 %1390
    %v1392 = vadd.f32 %v1374, %v1375
    %1393 = vadd.xlane.f32.xlu0 %v1392
    %v1394 = vpop.xlane.xlu0 %1393
    %v1395 = vadd.f32 %v1376, %v1377
    %1396 = vadd.xlane.f32.xlu0 %v1395
    %v1397 = vpop.xlane.xlu0 %1396
    %v1398 = vadd.f32 %v1378, %v1379
    %1399 = vadd.xlane.f32.xlu0 %v1398
    %v1400 = vpop.xlane.xlu0 %1399
    %v1401 = vadd.f32 %v1380, %v1381
    %1402 = vadd.xlane.f32.xlu0 %v1401
    %v1403 = vpop.xlane.xlu0 %1402
    %v1404 = vadd.f32 %v1382, %v1383
    %1405 = vadd.xlane.f32.xlu0 %v1404
    %v1406 = vpop.xlane.xlu0 %1405
    %v1407 = vadd.f32 %v1384, %v1385
    %1408 = vadd.xlane.f32.xlu0 %v1407
    %v1409 = vpop.xlane.xlu0 %1408
    %v1410 = vmul.f32 %v1388, %v341
    %v1411 = vmul.f32 %v1391, %v341
    %v1412 = vmul.f32 %v1394, %v341
    %v1413 = vmul.f32 %v1397, %v341
    %v1414 = vmul.f32 %v1400, %v341
    %v1415 = vmul.f32 %v1403, %v341
    %v1416 = vmul.f32 %v1406, %v341
    %v1417 = vmul.f32 %v1409, %v341
    %v1418 = vadd.f32 %v1410, 0.001
    %v1419 = vadd.f32 %v1411, 0.001
    %v1420 = vadd.f32 %v1412, 0.001
    %v1421 = vadd.f32 %v1413, 0.001
    %v1422 = vadd.f32 %v1414, 0.001
    %v1423 = vadd.f32 %v1415, 0.001
    %v1424 = vadd.f32 %v1416, 0.001
    %v1425 = vadd.f32 %v1417, 0.001
    %v1426 = vrsqrt.pop %v1418
    %v1427 = vrsqrt.pop %v1419
    %v1428 = vrsqrt.pop %v1420
    %v1429 = vrsqrt.pop %v1421
    %v1430 = vrsqrt.pop %v1422
    %v1431 = vrsqrt.pop %v1423
    %v1432 = vrsqrt.pop %v1424
    %v1433 = vrsqrt.pop %v1425
    %v1434 = vmul.f32 %v181, %v1426
    %v1435 = vmul.f32 %v182, %v1427
    %v1436 = vmul.f32 %v183, %v1428
    %v1437 = vmul.f32 %v184, %v1429
    %v1438 = vmul.f32 %v185, %v1430
    %v1439 = vmul.f32 %v186, %v1431
    %v1440 = vmul.f32 %v187, %v1432
    %v1441 = vmul.f32 %v188, %v1433
    %v1442 = vmul.f32 %v1346, %v1434
    %v1443 = vmul.f32 %v1347, %v1435
    %v1444 = vmul.f32 %v1348, %v1436
    %v1445 = vmul.f32 %v1349, %v1437
    %v1446 = vmul.f32 %v1350, %v1438
    %v1447 = vmul.f32 %v1351, %v1439
    %v1448 = vmul.f32 %v1352, %v1440
    %v1449 = vmul.f32 %v1353, %v1441
    %1458 = vrot.lane.b32.xlu0 %v1442, 1
    %v1459 = vpop.permute.xlu0 %1458
    %1460 = vrot.lane.b32.xlu0 %v1443, 1
    %v1461 = vpop.permute.xlu0 %1460
    %1462 = vrot.lane.b32.xlu0 %v1444, 1
    %v1463 = vpop.permute.xlu0 %1462
    %1464 = vrot.lane.b32.xlu0 %v1445, 1
    %v1465 = vpop.permute.xlu0 %1464
    %1466 = vrot.lane.b32.xlu0 %v1446, 1
    %v1467 = vpop.permute.xlu0 %1466
    %1468 = vrot.lane.b32.xlu0 %v1447, 1
    %v1469 = vpop.permute.xlu0 %1468
    %1470 = vrot.lane.b32.xlu0 %v1448, 1
    %v1471 = vpop.permute.xlu0 %1470
    %1472 = vrot.lane.b32.xlu0 %v1449, 1
    %v1473 = vpop.permute.xlu0 %1472
    %v1482 = vsub.f32 %v181, %v1459
    %v1483 = vsub.f32 %v182, %v1461
    %v1484 = vsub.f32 %v183, %v1463
    %v1485 = vsub.f32 %v184, %v1465
    %v1486 = vsub.f32 %v185, %v1467
    %v1487 = vsub.f32 %v186, %v1469
    %v1488 = vsub.f32 %v187, %v1471
    %v1489 = vsub.f32 %v188, %v1473
    %1491 = vset.pattern.permute.xlu0 6
    %1492 = vperm.xlu0 %1491, %v1434
    %v1493 = vpop.permute.xlu0 %1492
    %1496 = vset.pattern.permute.xlu0 6
    %1497 = vperm.xlu0 %1496, %v1435
    %v1498 = vpop.permute.xlu0 %1497
    %1501 = vset.pattern.permute.xlu0 6
    %1502 = vperm.xlu0 %1501, %v1436
    %v1503 = vpop.permute.xlu0 %1502
    %1506 = vset.pattern.permute.xlu0 6
    %1507 = vperm.xlu0 %1506, %v1437
    %v1508 = vpop.permute.xlu0 %1507
    %1511 = vset.pattern.permute.xlu0 6
    %1512 = vperm.xlu0 %1511, %v1438
    %v1513 = vpop.permute.xlu0 %1512
    %1516 = vset.pattern.permute.xlu0 6
    %1517 = vperm.xlu0 %1516, %v1439
    %v1518 = vpop.permute.xlu0 %1517
    %1521 = vset.pattern.permute.xlu0 6
    %1522 = vperm.xlu0 %1521, %v1440
    %v1523 = vpop.permute.xlu0 %1522
    %1526 = vset.pattern.permute.xlu0 6
    %1527 = vperm.xlu0 %1526, %v1441
    %v1528 = vpop.permute.xlu0 %1527
    %v1530 = vmul.f32 %v1276, %v1493
    %v1531 = vmul.f32 %v1278, %v1493
    %v1532 = vmul.f32 %v1282, %v1498
    %v1533 = vmul.f32 %v1284, %v1498
    %v1534 = vmul.f32 %v1288, %v1503
    %v1535 = vmul.f32 %v1290, %v1503
    %v1536 = vmul.f32 %v1294, %v1508
    %v1537 = vmul.f32 %v1296, %v1508
    %v1538 = vmul.f32 %v1300, %v1513
    %v1539 = vmul.f32 %v1302, %v1513
    %v1540 = vmul.f32 %v1306, %v1518
    %v1541 = vmul.f32 %v1308, %v1518
    %v1542 = vmul.f32 %v1312, %v1523
    %v1543 = vmul.f32 %v1314, %v1523
    %v1544 = vmul.f32 %v1318, %v1528
    %v1545 = vmul.f32 %v1320, %v1528
    %1547 = vset.pattern.permute.xlu0 7
    %1548 = vperm.xlu0 %1547, %v1482
    %v1549 = vpop.permute.xlu0 %1548
    %1552 = vset.pattern.permute.xlu0 7
    %1553 = vperm.xlu0 %1552, %v1483
    %v1554 = vpop.permute.xlu0 %1553
    %1557 = vset.pattern.permute.xlu0 7
    %1558 = vperm.xlu0 %1557, %v1484
    %v1559 = vpop.permute.xlu0 %1558
    %1562 = vset.pattern.permute.xlu0 7
    %1563 = vperm.xlu0 %1562, %v1485
    %v1564 = vpop.permute.xlu0 %1563
    %1567 = vset.pattern.permute.xlu0 7
    %1568 = vperm.xlu0 %1567, %v1486
    %v1569 = vpop.permute.xlu0 %1568
    %1572 = vset.pattern.permute.xlu0 7
    %1573 = vperm.xlu0 %1572, %v1487
    %v1574 = vpop.permute.xlu0 %1573
    %1577 = vset.pattern.permute.xlu0 7
    %1578 = vperm.xlu0 %1577, %v1488
    %v1579 = vpop.permute.xlu0 %1578
    %1582 = vset.pattern.permute.xlu0 7
    %1583 = vperm.xlu0 %1582, %v1489
    %v1584 = vpop.permute.xlu0 %1583
    %v1586 = vadd.f32 %v1530, %v1549
    %v1587 = vadd.f32 %v1531, %v1549
    %v1588 = vadd.f32 %v1532, %v1554
    %v1589 = vadd.f32 %v1533, %v1554
    %v1590 = vadd.f32 %v1534, %v1559
    %v1591 = vadd.f32 %v1535, %v1559
    %v1592 = vadd.f32 %v1536, %v1564
    %v1593 = vadd.f32 %v1537, %v1564
    %v1594 = vadd.f32 %v1538, %v1569
    %v1595 = vadd.f32 %v1539, %v1569
    %v1596 = vadd.f32 %v1540, %v1574
    %v1597 = vadd.f32 %v1541, %v1574
    %v1598 = vadd.f32 %v1542, %v1579
    %v1599 = vadd.f32 %v1543, %v1579
    %v1600 = vadd.f32 %v1544, %v1584
    %v1601 = vadd.f32 %v1545, %v1584
    %v1602 = vmax.f32 %v1586, 0.0
    %v1603 = vmax.f32 %v1587, 0.0
    %v1604 = vmax.f32 %v1588, 0.0
    %v1605 = vmax.f32 %v1589, 0.0
    %v1606 = vmax.f32 %v1590, 0.0
    %v1607 = vmax.f32 %v1591, 0.0
    %v1608 = vmax.f32 %v1592, 0.0
    %v1609 = vmax.f32 %v1593, 0.0
    %v1610 = vmax.f32 %v1594, 0.0
    %v1611 = vmax.f32 %v1595, 0.0
    %v1612 = vmax.f32 %v1596, 0.0
    %v1613 = vmax.f32 %v1597, 0.0
    %v1614 = vmax.f32 %v1598, 0.0
    %v1615 = vmax.f32 %v1599, 0.0
    %v1616 = vmax.f32 %v1600, 0.0
    %v1617 = vmax.f32 %v1601, 0.0
    %v1618 = vld [vmem:[#allocation9] sm:$0xff]
    %v1619 = vld [vmem:[#allocation9 + $0x8] sm:$0xff]
    %v1620 = vld [vmem:[#allocation9 + $0x10] sm:$0xff]
    %v1621 = vld [vmem:[#allocation9 + $0x18] sm:$0xff]
    %v1623 = vsel %vm546, %v1618, 0
    %v1626 = vsel %vm546, %v1619, 0
    %v1629 = vsel %vm546, %v1620, 0
    %v1632 = vsel %vm546, %v1621, 0
    %1634 = vmatprep.subr.mxu0 %v1146
    %1635 = vmatpush1.msra.mxu0 %v1145
    %1636 = vmatprep.subr.mxu0 %v1148
    %1637 = vmatpush1.msra.mxu0 %v1147
    %1638 = vmatprep.subr.mxu0 %v1150
    %1639 = vmatpush1.msra.mxu0 %v1149
    %1640 = vmatprep.subr.mxu0 %v1152
    %1641 = vmatpush1.msra.mxu0 %v1151
    %1642 = vmatprep.subr.mxu0 %v1106
    %1643 = vmatpush1.msra.mxu0 %v1105
    %1644 = vmatprep.subr.mxu0 %v1108
    %1645 = vmatpush1.msra.mxu0 %v1107
    %1646 = vmatprep.subr.mxu0 %v1110
    %1647 = vmatpush1.msra.mxu0 %v1109
    %1648 = vmatprep.subr.mxu0 %v1112
    %1649 = vmatpush1.msra.mxu0 %v1111
    %1650 = vmatprep.subr.mxu0 %v1178
    %1651 = vmatpush1.msra.mxu0 %v1177
    %1652 = vmatprep.subr.mxu0 %v1180
    %1653 = vmatpush1.msra.mxu0 %v1179
    %1654 = vmatprep.subr.mxu0 %v1182
    %1655 = vmatpush1.msra.mxu0 %v1181
    %1656 = vmatprep.subr.mxu0 %v1184
    %1657 = vmatpush1.msra.mxu0 %v1183
    %1658 = vmatprep.subr.mxu0 0.0
    %1659 = vmatpush1.msra.mxu0 0.0
    %1660 = vmatprep.subr.mxu0 0.0
    %1661 = vmatpush1.msra.mxu0 0.0
    %1662 = vmatprep.subr.mxu0 0.0
    %1663 = vmatpush1.msra.mxu0 0.0
    %1664 = vmatprep.subr.mxu0 0.0
    %1665 = vmatpush1.msra.mxu0 0.0
    %1666 = vmatprep.subr.mxu0 0.0
    %1667 = vmatpush1.msra.mxu0 0.0
    %1668 = vmatprep.subr.mxu0 0.0
    %1669 = vmatpush1.msra.mxu0 0.0
    %1670 = vmatprep.subr.mxu0 0.0
    %1671 = vmatpush1.msra.mxu0 0.0
    %1672 = vmatprep.subr.mxu0 0.0
    %1673 = vmatpush1.msra.mxu0 0.0
    %1674 = vmatprep.subr.mxu0 0.0
    %1675 = vmatpush1.msra.mxu0 0.0
    %1676 = vmatprep.subr.mxu0 0.0
    %1677 = vmatpush1.msra.mxu0 0.0
    %1678 = vmatprep.subr.mxu0 0.0
    %1679 = vmatpush1.msra.mxu0 0.0
    %1680 = vmatprep.subr.mxu0 0.0
    %1681 = vmatpush1.msra.mxu0 0.0
    %1682 = vmatprep.subr.mxu0 0.0
    %1683 = vmatpush1.msra.mxu0 0.0
    %1684 = vmatprep.subr.mxu0 0.0
    %1685 = vmatpush1.msra.mxu0 0.0
    %1686 = vmatprep.subr.mxu0 0.0
    %1687 = vmatpush1.msra.mxu0 0.0
    %1688 = vmatprep.subr.mxu0 0.0
    %1689 = vmatpush1.msra.mxu0 0.0
    %1690 = vmatprep.subr.mxu0 0.0
    %1691 = vmatpush1.msra.mxu0 0.0
    %1692 = vmatprep.subr.mxu0 0.0
    %1693 = vmatpush1.msra.mxu0 0.0
    %1694 = vmatprep.subr.mxu0 0.0
    %1695 = vmatpush1.msra.mxu0 0.0
    %1696 = vmatprep.subr.mxu0 0.0
    %1697 = vmatpush1.msra.mxu0 0.0
    %1698 = vmatprep.mubr.f32.mxu0 0.0
    %1699 = vmatmul.mubr.f32.gmra.mrb[0].mxu0 %v1623
    %v1700 = vpop.f32.mrb[0].mxu0
    %v1701 = vadd.f32 0.0, %v1700
    %v1702 = vpop.f32.mrb[0].mxu0
    %v1703 = vadd.f32 0.0, %v1702
    %1704 = vmatprep.mubr.f32.mxu0 0.0
    %1705 = vmatmul.mubr.f32.gmra.mrb[0].mxu0 %v1626
    %v1706 = vpop.f32.mrb[0].mxu0
    %v1707 = vadd.f32 0.0, %v1706
    %v1708 = vpop.f32.mrb[0].mxu0
    %v1709 = vadd.f32 0.0, %v1708
    %1710 = vmatprep.mubr.f32.mxu0 0.0
    %1711 = vmatmul.mubr.f32.gmra.mrb[0].mxu0 %v1629
    %v1712 = vpop.f32.mrb[0].mxu0
    %v1713 = vadd.f32 0.0, %v1712
    %v1714 = vpop.f32.mrb[0].mxu0
    %v1715 = vadd.f32 0.0, %v1714
    %1716 = vmatprep.mubr.f32.mxu0 0.0
    %1717 = vmatmul.mubr.f32.gmra.mrb[0].mxu0 %v1632
    %v1718 = vpop.f32.mrb[0].mxu0
    %v1719 = vadd.f32 0.0, %v1718
    %v1720 = vpop.f32.mrb[0].mxu0
    %v1721 = vadd.f32 0.0, %v1720
    %1722 = vdwg.mxu0
    %v1723 = vadd.f32 %v1701, %v1703
    %1724 = vadd.xlane.f32.xlu0 %v1723
    %v1725 = vpop.xlane.xlu0 %1724
    %v1726 = vadd.f32 %v1707, %v1709
    %1727 = vadd.xlane.f32.xlu0 %v1726
    %v1728 = vpop.xlane.xlu0 %1727
    %v1729 = vadd.f32 %v1713, %v1715
    %1730 = vadd.xlane.f32.xlu0 %v1729
    %v1731 = vpop.xlane.xlu0 %1730
    %v1732 = vadd.f32 %v1719, %v1721
    %1733 = vadd.xlane.f32.xlu0 %v1732
    %v1734 = vpop.xlane.xlu0 %1733
    %v1735 = vmul.f32 %v1725, %v341
    %v1736 = vmul.f32 %v1728, %v341
    %v1737 = vmul.f32 %v1731, %v341
    %v1738 = vmul.f32 %v1734, %v341
    %v1739 = vsub.f32 %v1701, %v1735
    %v1740 = vsub.f32 %v1703, %v1735
    %v1741 = vsub.f32 %v1707, %v1736
    %v1742 = vsub.f32 %v1709, %v1736
    %v1743 = vsub.f32 %v1713, %v1737
    %v1744 = vsub.f32 %v1715, %v1737
    %v1745 = vsub.f32 %v1719, %v1738
    %v1746 = vsub.f32 %v1721, %v1738
    %v1747 = vmul.f32 %v1739, %v1739
    %v1748 = vmul.f32 %v1740, %v1740
    %v1749 = vmul.f32 %v1741, %v1741
    %v1750 = vmul.f32 %v1742, %v1742
    %v1751 = vmul.f32 %v1743, %v1743
    %v1752 = vmul.f32 %v1744, %v1744
    %v1753 = vmul.f32 %v1745, %v1745
    %v1754 = vmul.f32 %v1746, %v1746
    %v1755 = vadd.f32 %v1747, %v1748
    %1756 = vadd.xlane.f32.xlu0 %v1755
    %v1757 = vpop.xlane.xlu0 %1756
    %v1758 = vadd.f32 %v1749, %v1750
    %1759 = vadd.xlane.f32.xlu0 %v1758
    %v1760 = vpop.xlane.xlu0 %1759
    %v1761 = vadd.f32 %v1751, %v1752
    %1762 = vadd.xlane.f32.xlu0 %v1761
    %v1763 = vpop.xlane.xlu0 %1762
    %v1764 = vadd.f32 %v1753, %v1754
    %1765 = vadd.xlane.f32.xlu0 %v1764
    %v1766 = vpop.xlane.xlu0 %1765
    %v1767 = vmul.f32 %v1757, %v341
    %v1768 = vmul.f32 %v1760, %v341
    %v1769 = vmul.f32 %v1763, %v341
    %v1770 = vmul.f32 %v1766, %v341
    %v1771 = vadd.f32 %v1767, 0.001
    %v1772 = vadd.f32 %v1768, 0.001
    %v1773 = vadd.f32 %v1769, 0.001
    %v1774 = vadd.f32 %v1770, 0.001
    %v1775 = vrsqrt.pop %v1771
    %v1776 = vrsqrt.pop %v1772
    %v1777 = vrsqrt.pop %v1773
    %v1778 = vrsqrt.pop %v1774
    %v1779 = vmul.f32 %v181, %v1775
    %v1780 = vmul.f32 %v182, %v1776
    %v1781 = vmul.f32 %v183, %v1777
    %v1782 = vmul.f32 %v184, %v1778
    %v1783 = vmul.f32 %v1735, %v1779
    %v1784 = vmul.f32 %v1736, %v1780
    %v1785 = vmul.f32 %v1737, %v1781
    %v1786 = vmul.f32 %v1738, %v1782
    %1791 = vrot.lane.b32.xlu0 %v1783, 1
    %v1792 = vpop.permute.xlu0 %1791
    %1793 = vrot.lane.b32.xlu0 %v1784, 1
    %v1794 = vpop.permute.xlu0 %1793
    %1795 = vrot.lane.b32.xlu0 %v1785, 1
    %v1796 = vpop.permute.xlu0 %1795
    %1797 = vrot.lane.b32.xlu0 %v1786, 1
    %v1798 = vpop.permute.xlu0 %1797
    %v1803 = vsub.f32 %v181, %v1792
    %v1804 = vsub.f32 %v182, %v1794
    %v1805 = vsub.f32 %v183, %v1796
    %v1806 = vsub.f32 %v184, %v1798
    %1808 = vset.pattern.permute.xlu0 8
    %1809 = vperm.xlu0 %1808, %v1779
    %v1810 = vpop.permute.xlu0 %1809
    %1813 = vset.pattern.permute.xlu0 8
    %1814 = vperm.xlu0 %1813, %v1780
    %v1815 = vpop.permute.xlu0 %1814
    %1818 = vset.pattern.permute.xlu0 8
    %1819 = vperm.xlu0 %1818, %v1781
    %v1820 = vpop.permute.xlu0 %1819
    %1823 = vset.pattern.permute.xlu0 8
    %1824 = vperm.xlu0 %1823, %v1782
    %v1825 = vpop.permute.xlu0 %1824
    %v1827 = vmul.f32 %v1701, %v1810
    %v1828 = vmul.f32 %v1703, %v1810
    %v1829 = vmul.f32 %v1707, %v1815
    %v1830 = vmul.f32 %v1709, %v1815
    %v1831 = vmul.f32 %v1713, %v1820
    %v1832 = vmul.f32 %v1715, %v1820
    %v1833 = vmul.f32 %v1719, %v1825
    %v1834 = vmul.f32 %v1721, %v1825
    %1836 = vset.pattern.permute.xlu0 9
    %1837 = vperm.xlu0 %1836, %v1803
    %v1838 = vpop.permute.xlu0 %1837
    %1841 = vset.pattern.permute.xlu0 9
    %1842 = vperm.xlu0 %1841, %v1804
    %v1843 = vpop.permute.xlu0 %1842
    %1846 = vset.pattern.permute.xlu0 9
    %1847 = vperm.xlu0 %1846, %v1805
    %v1848 = vpop.permute.xlu0 %1847
    %1851 = vset.pattern.permute.xlu0 9
    %1852 = vperm.xlu0 %1851, %v1806
    %v1853 = vpop.permute.xlu0 %1852
    %v1855 = vadd.f32 %v1827, %v1838
    %v1856 = vadd.f32 %v1828, %v1838
    %v1857 = vadd.f32 %v1829, %v1843
    %v1858 = vadd.f32 %v1830, %v1843
    %v1859 = vadd.f32 %v1831, %v1848
    %v1860 = vadd.f32 %v1832, %v1848
    %v1861 = vadd.f32 %v1833, %v1853
    %v1862 = vadd.f32 %v1834, %v1853
    %v1863 = vmax.f32 %v1855, 0.0
    %v1864 = vmax.f32 %v1856, 0.0
    %v1865 = vmax.f32 %v1857, 0.0
    %v1866 = vmax.f32 %v1858, 0.0
    %v1867 = vmax.f32 %v1859, 0.0
    %v1868 = vmax.f32 %v1860, 0.0
    %v1869 = vmax.f32 %v1861, 0.0
    %v1870 = vmax.f32 %v1862, 0.0
    %v1871 = vld [vmem:[#allocation10] sm:$0xff]
    %v1872 = vld [vmem:[#allocation10 + $0x8] sm:$0xff]
    %v1873 = vld [vmem:[#allocation10 + $0x10] sm:$0xff]
    %v1874 = vld [vmem:[#allocation10 + $0x18] sm:$0xff]
    %1875 = vrot.lane.b32.xlu0 %v1863, 1
    %v1876 = vpop.permute.xlu0 %1875
    %1877 = vrot.lane.b32.xlu0 %v1865, 1
    %v1878 = vpop.permute.xlu0 %1877
    %1879 = vrot.lane.b32.xlu0 %v1867, 1
    %v1880 = vpop.permute.xlu0 %1879
    %1881 = vrot.lane.b32.xlu0 %v1869, 1
    %v1882 = vpop.permute.xlu0 %1881
    %1883 = vrot.lane.b32.xlu0 %v1864, 1
    %v1884 = vpop.permute.xlu0 %1883
    %1885 = vrot.lane.b32.xlu0 %v1866, 1
    %v1886 = vpop.permute.xlu0 %1885
    %1887 = vrot.lane.b32.xlu0 %v1868, 1
    %v1888 = vpop.permute.xlu0 %1887
    %1889 = vrot.lane.b32.xlu0 %v1870, 1
    %v1890 = vpop.permute.xlu0 %1889
    %v1891 = vsel %vm201, %v1876, %v1884
    %v1892 = vsel %vm201, %v1878, %v1886
    %v1893 = vsel %vm201, %v1880, %v1888
    %v1894 = vsel %vm201, %v1882, %v1890
    %v1895 = vsel %vm201, %v1884, %v1876
    %v1896 = vsel %vm201, %v1886, %v1878
    %v1897 = vsel %vm201, %v1888, %v1880
    %v1898 = vsel %vm201, %v1890, %v1882
    %v1899 = vmul.f32 %v1895, %v173
    %v1900 = vmul.f32 %v1891, %v174
    %v1901 = vmul.f32 %v1896, %v173
    %v1902 = vmul.f32 %v1892, %v174
    %v1903 = vmul.f32 %v1897, %v173
    %v1904 = vmul.f32 %v1893, %v174
    %v1905 = vmul.f32 %v1898, %v173
    %v1906 = vmul.f32 %v1894, %v174
    %1907 = vrot.lane.b32.xlu0 %v1863, 127
    %v1908 = vpop.permute.xlu0 %1907
    %1909 = vrot.lane.b32.xlu0 %v1865, 127
    %v1910 = vpop.permute.xlu0 %1909
    %1911 = vrot.lane.b32.xlu0 %v1867, 127
    %v1912 = vpop.permute.xlu0 %1911
    %1913 = vrot.lane.b32.xlu0 %v1869, 127
    %v1914 = vpop.permute.xlu0 %1913
    %1915 = vrot.lane.b32.xlu0 %v1864, 127
    %v1916 = vpop.permute.xlu0 %1915
    %1917 = vrot.lane.b32.xlu0 %v1866, 127
    %v1918 = vpop.permute.xlu0 %1917
    %1919 = vrot.lane.b32.xlu0 %v1868, 127
    %v1920 = vpop.permute.xlu0 %1919
    %1921 = vrot.lane.b32.xlu0 %v1870, 127
    %v1922 = vpop.permute.xlu0 %1921
    %v1923 = vsel %vm218, %v1908, %v1916
    %v1924 = vsel %vm218, %v1910, %v1918
    %v1925 = vsel %vm218, %v1912, %v1920
    %v1926 = vsel %vm218, %v1914, %v1922
    %v1927 = vsel %vm218, %v1916, %v1908
    %v1928 = vsel %vm218, %v1918, %v1910
    %v1929 = vsel %vm218, %v1920, %v1912
    %v1930 = vsel %vm218, %v1922, %v1914
    %v1931 = vmul.f32 %v1923, %v179
    %v1932 = vmul.f32 %v1927, %v180
    %v1933 = vmul.f32 %v1924, %v179
    %v1934 = vmul.f32 %v1928, %v180
    %v1935 = vmul.f32 %v1925, %v179
    %v1936 = vmul.f32 %v1929, %v180
    %v1937 = vmul.f32 %v1926, %v179
    %v1938 = vmul.f32 %v1930, %v180
    %v1940 = vsel %vm546, %v1871, 0
    %v1943 = vsel %vm546, %v1872, 0
    %v1946 = vsel %vm546, %v1873, 0
    %v1949 = vsel %vm546, %v1874, 0
    %1951 = vmatprep.subr.mxu0 %v1900
    %1952 = vmatpush1.msra.mxu0 %v1899
    %1953 = vmatprep.subr.mxu0 %v1902
    %1954 = vmatpush1.msra.mxu0 %v1901
    %1955 = vmatprep.subr.mxu0 %v1904
    %1956 = vmatpush1.msra.mxu0 %v1903
    %1957 = vmatprep.subr.mxu0 %v1906
    %1958 = vmatpush1.msra.mxu0 %v1905
    %1959 = vmatprep.subr.mxu0 %v1864
    %1960 = vmatpush1.msra.mxu0 %v1863
    %1961 = vmatprep.subr.mxu0 %v1866
    %1962 = vmatpush1.msra.mxu0 %v1865
    %1963 = vmatprep.subr.mxu0 %v1868
    %1964 = vmatpush1.msra.mxu0 %v1867
    %1965 = vmatprep.subr.mxu0 %v1870
    %1966 = vmatpush1.msra.mxu0 %v1869
    %1967 = vmatprep.subr.mxu0 %v1932
    %1968 = vmatpush1.msra.mxu0 %v1931
    %1969 = vmatprep.subr.mxu0 %v1934
    %1970 = vmatpush1.msra.mxu0 %v1933
    %1971 = vmatprep.subr.mxu0 %v1936
    %1972 = vmatpush1.msra.mxu0 %v1935
    %1973 = vmatprep.subr.mxu0 %v1938
    %1974 = vmatpush1.msra.mxu0 %v1937
    %1975 = vmatprep.subr.mxu0 0.0
    %1976 = vmatpush1.msra.mxu0 0.0
    %1977 = vmatprep.subr.mxu0 0.0
    %1978 = vmatpush1.msra.mxu0 0.0
    %1979 = vmatprep.subr.mxu0 0.0
    %1980 = vmatpush1.msra.mxu0 0.0
    %1981 = vmatprep.subr.mxu0 0.0
    %1982 = vmatpush1.msra.mxu0 0.0
    %1983 = vmatprep.subr.mxu0 0.0
    %1984 = vmatpush1.msra.mxu0 0.0
    %1985 = vmatprep.subr.mxu0 0.0
    %1986 = vmatpush1.msra.mxu0 0.0
    %1987 = vmatprep.subr.mxu0 0.0
    %1988 = vmatpush1.msra.mxu0 0.0
    %1989 = vmatprep.subr.mxu0 0.0
    %1990 = vmatpush1.msra.mxu0 0.0
    %1991 = vmatprep.subr.mxu0 0.0
    %1992 = vmatpush1.msra.mxu0 0.0
    %1993 = vmatprep.subr.mxu0 0.0
    %1994 = vmatpush1.msra.mxu0 0.0
    %1995 = vmatprep.subr.mxu0 0.0
    %1996 = vmatpush1.msra.mxu0 0.0
    %1997 = vmatprep.subr.mxu0 0.0
    %1998 = vmatpush1.msra.mxu0 0.0
    %1999 = vmatprep.subr.mxu0 0.0
    %2000 = vmatpush1.msra.mxu0 0.0
    %2001 = vmatprep.subr.mxu0 0.0
    %2002 = vmatpush1.msra.mxu0 0.0
    %2003 = vmatprep.subr.mxu0 0.0
    %2004 = vmatpush1.msra.mxu0 0.0
    %2005 = vmatprep.subr.mxu0 0.0
    %2006 = vmatpush1.msra.mxu0 0.0
    %2007 = vmatprep.subr.mxu0 0.0
    %2008 = vmatpush1.msra.mxu0 0.0
    %2009 = vmatprep.subr.mxu0 0.0
    %2010 = vmatpush1.msra.mxu0 0.0
    %2011 = vmatprep.subr.mxu0 0.0
    %2012 = vmatpush1.msra.mxu0 0.0
    %2013 = vmatprep.subr.mxu0 0.0
    %2014 = vmatpush1.msra.mxu0 0.0
    %2015 = vmatprep.mubr.f32.mxu0 0.0
    %2016 = vmatmul.mubr.f32.gmra.mrb[0].mxu0 %v1940
    %v2017 = vpop.f32.mrb[0].mxu0
    %v2018 = vadd.f32 0.0, %v2017
    %v2019 = vpop.f32.mrb[0].mxu0
    %v2020 = vadd.f32 0.0, %v2019
    %2021 = vmatprep.mubr.f32.mxu0 0.0
    %2022 = vmatmul.mubr.f32.gmra.mrb[0].mxu0 %v1943
    %v2023 = vpop.f32.mrb[0].mxu0
    %v2024 = vadd.f32 0.0, %v2023
    %v2025 = vpop.f32.mrb[0].mxu0
    %v2026 = vadd.f32 0.0, %v2025
    %2027 = vmatprep.mubr.f32.mxu0 0.0
    %2028 = vmatmul.mubr.f32.gmra.mrb[0].mxu0 %v1946
    %v2029 = vpop.f32.mrb[0].mxu0
    %v2030 = vadd.f32 0.0, %v2029
    %v2031 = vpop.f32.mrb[0].mxu0
    %v2032 = vadd.f32 0.0, %v2031
    %2033 = vmatprep.mubr.f32.mxu0 0.0
    %2034 = vmatmul.mubr.f32.gmra.mrb[0].mxu0 %v1949
    %v2035 = vpop.f32.mrb[0].mxu0
    %v2036 = vadd.f32 0.0, %v2035
    %v2037 = vpop.f32.mrb[0].mxu0
    %v2038 = vadd.f32 0.0, %v2037
    %2039 = vdwg.mxu0
    %v2040 = vadd.f32 %v2018, %v2020
    %2041 = vadd.xlane.f32.xlu0 %v2040
    %v2042 = vpop.xlane.xlu0 %2041
    %v2043 = vadd.f32 %v2024, %v2026
    %2044 = vadd.xlane.f32.xlu0 %v2043
    %v2045 = vpop.xlane.xlu0 %2044
    %v2046 = vadd.f32 %v2030, %v2032
    %2047 = vadd.xlane.f32.xlu0 %v2046
    %v2048 = vpop.xlane.xlu0 %2047
    %v2049 = vadd.f32 %v2036, %v2038
    %2050 = vadd.xlane.f32.xlu0 %v2049
    %v2051 = vpop.xlane.xlu0 %2050
    %v2052 = vmul.f32 %v2042, %v341
    %v2053 = vmul.f32 %v2045, %v341
    %v2054 = vmul.f32 %v2048, %v341
    %v2055 = vmul.f32 %v2051, %v341
    %v2056 = vsub.f32 %v2018, %v2052
    %v2057 = vsub.f32 %v2020, %v2052
    %v2058 = vsub.f32 %v2024, %v2053
    %v2059 = vsub.f32 %v2026, %v2053
    %v2060 = vsub.f32 %v2030, %v2054
    %v2061 = vsub.f32 %v2032, %v2054
    %v2062 = vsub.f32 %v2036, %v2055
    %v2063 = vsub.f32 %v2038, %v2055
    %v2064 = vmul.f32 %v2056, %v2056
    %v2065 = vmul.f32 %v2057, %v2057
    %v2066 = vmul.f32 %v2058, %v2058
    %v2067 = vmul.f32 %v2059, %v2059
    %v2068 = vmul.f32 %v2060, %v2060
    %v2069 = vmul.f32 %v2061, %v2061
    %v2070 = vmul.f32 %v2062, %v2062
    %v2071 = vmul.f32 %v2063, %v2063
    %v2072 = vadd.f32 %v2064, %v2065
    %2073 = vadd.xlane.f32.xlu0 %v2072
    %v2074 = vpop.xlane.xlu0 %2073
    %v2075 = vadd.f32 %v2066, %v2067
    %2076 = vadd.xlane.f32.xlu0 %v2075
    %v2077 = vpop.xlane.xlu0 %2076
    %v2078 = vadd.f32 %v2068, %v2069
    %2079 = vadd.xlane.f32.xlu0 %v2078
    %v2080 = vpop.xlane.xlu0 %2079
    %v2081 = vadd.f32 %v2070, %v2071
    %2082 = vadd.xlane.f32.xlu0 %v2081
    %v2083 = vpop.xlane.xlu0 %2082
    %v2084 = vmul.f32 %v2074, %v341
    %v2085 = vmul.f32 %v2077, %v341
    %v2086 = vmul.f32 %v2080, %v341
    %v2087 = vmul.f32 %v2083, %v341
    %v2088 = vadd.f32 %v2084, 0.001
    %v2089 = vadd.f32 %v2085, 0.001
    %v2090 = vadd.f32 %v2086, 0.001
    %v2091 = vadd.f32 %v2087, 0.001
    %v2092 = vrsqrt.pop %v2088
    %v2093 = vrsqrt.pop %v2089
    %v2094 = vrsqrt.pop %v2090
    %v2095 = vrsqrt.pop %v2091
    %v2096 = vmul.f32 %v181, %v2092
    %v2097 = vmul.f32 %v182, %v2093
    %v2098 = vmul.f32 %v183, %v2094
    %v2099 = vmul.f32 %v184, %v2095
    %v2100 = vmul.f32 %v2052, %v2096
    %v2101 = vmul.f32 %v2053, %v2097
    %v2102 = vmul.f32 %v2054, %v2098
    %v2103 = vmul.f32 %v2055, %v2099
    %2108 = vrot.lane.b32.xlu0 %v2100, 1
    %v2109 = vpop.permute.xlu0 %2108
    %2110 = vrot.lane.b32.xlu0 %v2101, 1
    %v2111 = vpop.permute.xlu0 %2110
    %2112 = vrot.lane.b32.xlu0 %v2102, 1
    %v2113 = vpop.permute.xlu0 %2112
    %2114 = vrot.lane.b32.xlu0 %v2103, 1
    %v2115 = vpop.permute.xlu0 %2114
    %v2120 = vsub.f32 %v181, %v2109
    %v2121 = vsub.f32 %v182, %v2111
    %v2122 = vsub.f32 %v183, %v2113
    %v2123 = vsub.f32 %v184, %v2115
    %2125 = vset.pattern.permute.xlu0 10
    %2126 = vperm.xlu0 %2125, %v2096
    %v2127 = vpop.permute.xlu0 %2126
    %2130 = vset.pattern.permute.xlu0 10
    %2131 = vperm.xlu0 %2130, %v2097
    %v2132 = vpop.permute.xlu0 %2131
    %2135 = vset.pattern.permute.xlu0 10
    %2136 = vperm.xlu0 %2135, %v2098
    %v2137 = vpop.permute.xlu0 %2136
    %2140 = vset.pattern.permute.xlu0 10
    %2141 = vperm.xlu0 %2140, %v2099
    %v2142 = vpop.permute.xlu0 %2141
    %v2144 = vmul.f32 %v2018, %v2127
    %v2145 = vmul.f32 %v2020, %v2127
    %v2146 = vmul.f32 %v2024, %v2132
    %v2147 = vmul.f32 %v2026, %v2132
    %v2148 = vmul.f32 %v2030, %v2137
    %v2149 = vmul.f32 %v2032, %v2137
    %v2150 = vmul.f32 %v2036, %v2142
    %v2151 = vmul.f32 %v2038, %v2142
    %2153 = vset.pattern.permute.xlu0 11
    %2154 = vperm.xlu0 %2153, %v2120
    %v2155 = vpop.permute.xlu0 %2154
    %2158 = vset.pattern.permute.xlu0 11
    %2159 = vperm.xlu0 %2158, %v2121
    %v2160 = vpop.permute.xlu0 %2159
    %2163 = vset.pattern.permute.xlu0 11
    %2164 = vperm.xlu0 %2163, %v2122
    %v2165 = vpop.permute.xlu0 %2164
    %2168 = vset.pattern.permute.xlu0 11
    %2169 = vperm.xlu0 %2168, %v2123
    %v2170 = vpop.permute.xlu0 %2169
    %v2172 = vadd.f32 %v2144, %v2155
    %v2173 = vadd.f32 %v2145, %v2155
    %v2174 = vadd.f32 %v2146, %v2160
    %v2175 = vadd.f32 %v2147, %v2160
    %v2176 = vadd.f32 %v2148, %v2165
    %v2177 = vadd.f32 %v2149, %v2165
    %v2178 = vadd.f32 %v2150, %v2170
    %v2179 = vadd.f32 %v2151, %v2170
    %v2180 = vmax.f32 %v2172, 0.0
    %v2181 = vmax.f32 %v2173, 0.0
    %v2182 = vmax.f32 %v2174, 0.0
    %v2183 = vmax.f32 %v2175, 0.0
    %v2184 = vmax.f32 %v2176, 0.0
    %v2185 = vmax.f32 %v2177, 0.0
    %v2186 = vmax.f32 %v2178, 0.0
    %v2187 = vmax.f32 %v2179, 0.0
    %v2188 = vld [vmem:[#allocation12] sm:$0xff]
    %v2189 = vld [vmem:[#allocation12 + $0x8] sm:$0xff]
    %v2190 = vld [vmem:[#allocation12 + $0x10] sm:$0xff]
    %v2191 = vld [vmem:[#allocation12 + $0x18] sm:$0xff]
    %2192 = vrot.lane.b32.xlu0 %v2180, 1
    %v2193 = vpop.permute.xlu0 %2192
    %2194 = vrot.lane.b32.xlu0 %v2182, 1
    %v2195 = vpop.permute.xlu0 %2194
    %2196 = vrot.lane.b32.xlu0 %v2184, 1
    %v2197 = vpop.permute.xlu0 %2196
    %2198 = vrot.lane.b32.xlu0 %v2186, 1
    %v2199 = vpop.permute.xlu0 %2198
    %2200 = vrot.lane.b32.xlu0 %v2181, 1
    %v2201 = vpop.permute.xlu0 %2200
    %2202 = vrot.lane.b32.xlu0 %v2183, 1
    %v2203 = vpop.permute.xlu0 %2202
    %2204 = vrot.lane.b32.xlu0 %v2185, 1
    %v2205 = vpop.permute.xlu0 %2204
    %2206 = vrot.lane.b32.xlu0 %v2187, 1
    %v2207 = vpop.permute.xlu0 %2206
    %v2208 = vsel %vm201, %v2193, %v2201
    %v2209 = vsel %vm201, %v2195, %v2203
    %v2210 = vsel %vm201, %v2197, %v2205
    %v2211 = vsel %vm201, %v2199, %v2207
    %v2212 = vsel %vm201, %v2201, %v2193
    %v2213 = vsel %vm201, %v2203, %v2195
    %v2214 = vsel %vm201, %v2205, %v2197
    %v2215 = vsel %vm201, %v2207, %v2199
    %v2216 = vmul.f32 %v2212, %v173
    %v2217 = vmul.f32 %v2208, %v174
    %v2218 = vmul.f32 %v2213, %v173
    %v2219 = vmul.f32 %v2209, %v174
    %v2220 = vmul.f32 %v2214, %v173
    %v2221 = vmul.f32 %v2210, %v174
    %v2222 = vmul.f32 %v2215, %v173
    %v2223 = vmul.f32 %v2211, %v174
    %2224 = vrot.lane.b32.xlu0 %v2180, 127
    %v2225 = vpop.permute.xlu0 %2224
    %2226 = vrot.lane.b32.xlu0 %v2182, 127
    %v2227 = vpop.permute.xlu0 %2226
    %2228 = vrot.lane.b32.xlu0 %v2184, 127
    %v2229 = vpop.permute.xlu0 %2228
    %2230 = vrot.lane.b32.xlu0 %v2186, 127
    %v2231 = vpop.permute.xlu0 %2230
    %2232 = vrot.lane.b32.xlu0 %v2181, 127
    %v2233 = vpop.permute.xlu0 %2232
    %2234 = vrot.lane.b32.xlu0 %v2183, 127
    %v2235 = vpop.permute.xlu0 %2234
    %2236 = vrot.lane.b32.xlu0 %v2185, 127
    %v2237 = vpop.permute.xlu0 %2236
    %2238 = vrot.lane.b32.xlu0 %v2187, 127
    %v2239 = vpop.permute.xlu0 %2238
    %v2240 = vsel %vm218, %v2225, %v2233
    %v2241 = vsel %vm218, %v2227, %v2235
    %v2242 = vsel %vm218, %v2229, %v2237
    %v2243 = vsel %vm218, %v2231, %v2239
    %v2244 = vsel %vm218, %v2233, %v2225
    %v2245 = vsel %vm218, %v2235, %v2227
    %v2246 = vsel %vm218, %v2237, %v2229
    %v2247 = vsel %vm218, %v2239, %v2231
    %v2248 = vmul.f32 %v2240, %v179
    %v2249 = vmul.f32 %v2244, %v180
    %v2250 = vmul.f32 %v2241, %v179
    %v2251 = vmul.f32 %v2245, %v180
    %v2252 = vmul.f32 %v2242, %v179
    %v2253 = vmul.f32 %v2246, %v180
    %v2254 = vmul.f32 %v2243, %v179
    %v2255 = vmul.f32 %v2247, %v180
    %v2257 = vsel %vm546, %v2188, 0
    %v2260 = vsel %vm546, %v2189, 0
    %v2263 = vsel %vm546, %v2190, 0
    %v2266 = vsel %vm546, %v2191, 0
    %2268 = vmatprep.subr.mxu0 %v2217
    %2269 = vmatpush1.msra.mxu0 %v2216
    %2270 = vmatprep.subr.mxu0 %v2219
    %2271 = vmatpush1.msra.mxu0 %v2218
    %2272 = vmatprep.subr.mxu0 %v2221
    %2273 = vmatpush1.msra.mxu0 %v2220
    %2274 = vmatprep.subr.mxu0 %v2223
    %2275 = vmatpush1.msra.mxu0 %v2222
    %2276 = vmatprep.subr.mxu0 %v2181
    %2277 = vmatpush1.msra.mxu0 %v2180
    %2278 = vmatprep.subr.mxu0 %v2183
    %2279 = vmatpush1.msra.mxu0 %v2182
    %2280 = vmatprep.subr.mxu0 %v2185
    %2281 = vmatpush1.msra.mxu0 %v2184
    %2282 = vmatprep.subr.mxu0 %v2187
    %2283 = vmatpush1.msra.mxu0 %v2186
    %2284 = vmatprep.subr.mxu0 %v2249
    %2285 = vmatpush1.msra.mxu0 %v2248
    %2286 = vmatprep.subr.mxu0 %v2251
    %2287 = vmatpush1.msra.mxu0 %v2250
    %2288 = vmatprep.subr.mxu0 %v2253
    %2289 = vmatpush1.msra.mxu0 %v2252
    %2290 = vmatprep.subr.mxu0 %v2255
    %2291 = vmatpush1.msra.mxu0 %v2254
    %2292 = vmatprep.subr.mxu0 0.0
    %2293 = vmatpush1.msra.mxu0 0.0
    %2294 = vmatprep.subr.mxu0 0.0
    %2295 = vmatpush1.msra.mxu0 0.0
    %2296 = vmatprep.subr.mxu0 0.0
    %2297 = vmatpush1.msra.mxu0 0.0
    %2298 = vmatprep.subr.mxu0 0.0
    %2299 = vmatpush1.msra.mxu0 0.0
    %2300 = vmatprep.subr.mxu0 0.0
    %2301 = vmatpush1.msra.mxu0 0.0
    %2302 = vmatprep.subr.mxu0 0.0
    %2303 = vmatpush1.msra.mxu0 0.0
    %2304 = vmatprep.subr.mxu0 0.0
    %2305 = vmatpush1.msra.mxu0 0.0
    %2306 = vmatprep.subr.mxu0 0.0
    %2307 = vmatpush1.msra.mxu0 0.0
    %2308 = vmatprep.subr.mxu0 0.0
    %2309 = vmatpush1.msra.mxu0 0.0
    %2310 = vmatprep.subr.mxu0 0.0
    %2311 = vmatpush1.msra.mxu0 0.0
    %2312 = vmatprep.subr.mxu0 0.0
    %2313 = vmatpush1.msra.mxu0 0.0
    %2314 = vmatprep.subr.mxu0 0.0
    %2315 = vmatpush1.msra.mxu0 0.0
    %2316 = vmatprep.subr.mxu0 0.0
    %2317 = vmatpush1.msra.mxu0 0.0
    %2318 = vmatprep.subr.mxu0 0.0
    %2319 = vmatpush1.msra.mxu0 0.0
    %2320 = vmatprep.subr.mxu0 0.0
    %2321 = vmatpush1.msra.mxu0 0.0
    %2322 = vmatprep.subr.mxu0 0.0
    %2323 = vmatpush1.msra.mxu0 0.0
    %2324 = vmatprep.subr.mxu0 0.0
    %2325 = vmatpush1.msra.mxu0 0.0
    %2326 = vmatprep.subr.mxu0 0.0
    %2327 = vmatpush1.msra.mxu0 0.0
    %2328 = vmatprep.subr.mxu0 0.0
    %2329 = vmatpush1.msra.mxu0 0.0
    %2330 = vmatprep.subr.mxu0 0.0
    %2331 = vmatpush1.msra.mxu0 0.0
    %2332 = vmatprep.mubr.f32.mxu0 0.0
    %2333 = vmatmul.mubr.f32.gmra.mrb[0].mxu0 %v2257
    %v2334 = vpop.f32.mrb[0].mxu0
    %v2335 = vadd.f32 0.0, %v2334
    %v2336 = vpop.f32.mrb[0].mxu0
    %v2337 = vadd.f32 0.0, %v2336
    %2338 = vmatprep.mubr.f32.mxu0 0.0
    %2339 = vmatmul.mubr.f32.gmra.mrb[0].mxu0 %v2260
    %v2340 = vpop.f32.mrb[0].mxu0
    %v2341 = vadd.f32 0.0, %v2340
    %v2342 = vpop.f32.mrb[0].mxu0
    %v2343 = vadd.f32 0.0, %v2342
    %2344 = vmatprep.mubr.f32.mxu0 0.0
    %2345 = vmatmul.mubr.f32.gmra.mrb[0].mxu0 %v2263
    %v2346 = vpop.f32.mrb[0].mxu0
    %v2347 = vadd.f32 0.0, %v2346
    %v2348 = vpop.f32.mrb[0].mxu0
    %v2349 = vadd.f32 0.0, %v2348
    %2350 = vmatprep.mubr.f32.mxu0 0.0
    %2351 = vmatmul.mubr.f32.gmra.mrb[0].mxu0 %v2266
    %v2352 = vpop.f32.mrb[0].mxu0
    %v2353 = vadd.f32 0.0, %v2352
    %v2354 = vpop.f32.mrb[0].mxu0
    %v2355 = vadd.f32 0.0, %v2354
    %2356 = vdwg.mxu0
    %v2357 = vadd.f32 %v2335, %v2337
    %2358 = vadd.xlane.f32.xlu0 %v2357
    %v2359 = vpop.xlane.xlu0 %2358
    %v2360 = vadd.f32 %v2341, %v2343
    %2361 = vadd.xlane.f32.xlu0 %v2360
    %v2362 = vpop.xlane.xlu0 %2361
    %v2363 = vadd.f32 %v2347, %v2349
    %2364 = vadd.xlane.f32.xlu0 %v2363
    %v2365 = vpop.xlane.xlu0 %2364
    %v2366 = vadd.f32 %v2353, %v2355
    %2367 = vadd.xlane.f32.xlu0 %v2366
    %v2368 = vpop.xlane.xlu0 %2367
    %v2369 = vmul.f32 %v2359, %v341
    %v2370 = vmul.f32 %v2362, %v341
    %v2371 = vmul.f32 %v2365, %v341
    %v2372 = vmul.f32 %v2368, %v341
    %v2373 = vsub.f32 %v2335, %v2369
    %v2374 = vsub.f32 %v2337, %v2369
    %v2375 = vsub.f32 %v2341, %v2370
    %v2376 = vsub.f32 %v2343, %v2370
    %v2377 = vsub.f32 %v2347, %v2371
    %v2378 = vsub.f32 %v2349, %v2371
    %v2379 = vsub.f32 %v2353, %v2372
    %v2380 = vsub.f32 %v2355, %v2372
    %v2381 = vmul.f32 %v2373, %v2373
    %v2382 = vmul.f32 %v2374, %v2374
    %v2383 = vmul.f32 %v2375, %v2375
    %v2384 = vmul.f32 %v2376, %v2376
    %v2385 = vmul.f32 %v2377, %v2377
    %v2386 = vmul.f32 %v2378, %v2378
    %v2387 = vmul.f32 %v2379, %v2379
    %v2388 = vmul.f32 %v2380, %v2380
    %v2389 = vadd.f32 %v2381, %v2382
    %2390 = vadd.xlane.f32.xlu0 %v2389
    %v2391 = vpop.xlane.xlu0 %2390
    %v2392 = vadd.f32 %v2383, %v2384
    %2393 = vadd.xlane.f32.xlu0 %v2392
    %v2394 = vpop.xlane.xlu0 %2393
    %v2395 = vadd.f32 %v2385, %v2386
    %2396 = vadd.xlane.f32.xlu0 %v2395
    %v2397 = vpop.xlane.xlu0 %2396
    %v2398 = vadd.f32 %v2387, %v2388
    %2399 = vadd.xlane.f32.xlu0 %v2398
    %v2400 = vpop.xlane.xlu0 %2399
    %v2401 = vmul.f32 %v2391, %v341
    %v2402 = vmul.f32 %v2394, %v341
    %v2403 = vmul.f32 %v2397, %v341
    %v2404 = vmul.f32 %v2400, %v341
    %v2405 = vadd.f32 %v2401, 0.001
    %v2406 = vadd.f32 %v2402, 0.001
    %v2407 = vadd.f32 %v2403, 0.001
    %v2408 = vadd.f32 %v2404, 0.001
    %v2409 = vrsqrt.pop %v2405
    %v2410 = vrsqrt.pop %v2406
    %v2411 = vrsqrt.pop %v2407
    %v2412 = vrsqrt.pop %v2408
    %v2413 = vmul.f32 %v181, %v2409
    %v2414 = vmul.f32 %v182, %v2410
    %v2415 = vmul.f32 %v183, %v2411
    %v2416 = vmul.f32 %v184, %v2412
    %v2417 = vmul.f32 %v2369, %v2413
    %v2418 = vmul.f32 %v2370, %v2414
    %v2419 = vmul.f32 %v2371, %v2415
    %v2420 = vmul.f32 %v2372, %v2416
    %2425 = vrot.lane.b32.xlu0 %v2417, 1
    %v2426 = vpop.permute.xlu0 %2425
    %2427 = vrot.lane.b32.xlu0 %v2418, 1
    %v2428 = vpop.permute.xlu0 %2427
    %2429 = vrot.lane.b32.xlu0 %v2419, 1
    %v2430 = vpop.permute.xlu0 %2429
    %2431 = vrot.lane.b32.xlu0 %v2420, 1
    %v2432 = vpop.permute.xlu0 %2431
    %v2437 = vsub.f32 %v181, %v2426
    %v2438 = vsub.f32 %v182, %v2428
    %v2439 = vsub.f32 %v183, %v2430
    %v2440 = vsub.f32 %v184, %v2432
    %2442 = vset.pattern.permute.xlu0 12
    %2443 = vperm.xlu0 %2442, %v2413
    %v2444 = vpop.permute.xlu0 %2443
    %2447 = vset.pattern.permute.xlu0 12
    %2448 = vperm.xlu0 %2447, %v2414
    %v2449 = vpop.permute.xlu0 %2448
    %2452 = vset.pattern.permute.xlu0 12
    %2453 = vperm.xlu0 %2452, %v2415
    %v2454 = vpop.permute.xlu0 %2453
    %2457 = vset.pattern.permute.xlu0 12
    %2458 = vperm.xlu0 %2457, %v2416
    %v2459 = vpop.permute.xlu0 %2458
    %v2461 = vmul.f32 %v2335, %v2444
    %v2462 = vmul.f32 %v2337, %v2444
    %v2463 = vmul.f32 %v2341, %v2449
    %v2464 = vmul.f32 %v2343, %v2449
    %v2465 = vmul.f32 %v2347, %v2454
    %v2466 = vmul.f32 %v2349, %v2454
    %v2467 = vmul.f32 %v2353, %v2459
    %v2468 = vmul.f32 %v2355, %v2459
    %2470 = vset.pattern.permute.xlu0 13
    %2471 = vperm.xlu0 %2470, %v2437
    %v2472 = vpop.permute.xlu0 %2471
    %2475 = vset.pattern.permute.xlu0 13
    %2476 = vperm.xlu0 %2475, %v2438
    %v2477 = vpop.permute.xlu0 %2476
    %2480 = vset.pattern.permute.xlu0 13
    %2481 = vperm.xlu0 %2480, %v2439
    %v2482 = vpop.permute.xlu0 %2481
    %2485 = vset.pattern.permute.xlu0 13
    %2486 = vperm.xlu0 %2485, %v2440
    %v2487 = vpop.permute.xlu0 %2486
    %v2489 = vadd.f32 %v2461, %v2472
    %v2490 = vadd.f32 %v2462, %v2472
    %v2491 = vadd.f32 %v2463, %v2477
    %v2492 = vadd.f32 %v2464, %v2477
    %v2493 = vadd.f32 %v2465, %v2482
    %v2494 = vadd.f32 %v2466, %v2482
    %v2495 = vadd.f32 %v2467, %v2487
    %v2496 = vadd.f32 %v2468, %v2487
    %v2497 = vmax.f32 %v2489, 0.0
    %v2498 = vmax.f32 %v2490, 0.0
    %v2499 = vmax.f32 %v2491, 0.0
    %v2500 = vmax.f32 %v2492, 0.0
    %v2501 = vmax.f32 %v2493, 0.0
    %v2502 = vmax.f32 %v2494, 0.0
    %v2503 = vmax.f32 %v2495, 0.0
    %v2504 = vmax.f32 %v2496, 0.0
    %v2505 = vld [vmem:[%s8] sm:$0xff]
    %v2506 = vld [vmem:[%s8 + $0x8] sm:$0xff]
    %v2507 = vld [vmem:[%s8 + $0x10] sm:$0xff]
    %v2508 = vld [vmem:[%s8 + $0x18] sm:$0xff]
    %v2509 = vld [vmem:[%s8 + $0x20] sm:$0xff]
    %v2510 = vld [vmem:[%s8 + $0x28] sm:$0xff]
    %v2511 = vld [vmem:[%s8 + $0x30] sm:$0xff]
    %v2512 = vld [vmem:[%s8 + $0x38] sm:$0xff]
    %2513 = vrot.lane.b32.xlu0 %v2497, 1
    %v2514 = vpop.permute.xlu0 %2513
    %2515 = vrot.lane.b32.xlu0 %v2499, 1
    %v2516 = vpop.permute.xlu0 %2515
    %2517 = vrot.lane.b32.xlu0 %v2501, 1
    %v2518 = vpop.permute.xlu0 %2517
    %2519 = vrot.lane.b32.xlu0 %v2503, 1
    %v2520 = vpop.permute.xlu0 %2519
    %2521 = vrot.lane.b32.xlu0 %v2498, 1
    %v2522 = vpop.permute.xlu0 %2521
    %2523 = vrot.lane.b32.xlu0 %v2500, 1
    %v2524 = vpop.permute.xlu0 %2523
    %2525 = vrot.lane.b32.xlu0 %v2502, 1
    %v2526 = vpop.permute.xlu0 %2525
    %2527 = vrot.lane.b32.xlu0 %v2504, 1
    %v2528 = vpop.permute.xlu0 %2527
    %v2529 = vsel %vm201, %v2514, %v2522
    %v2530 = vsel %vm201, %v2516, %v2524
    %v2531 = vsel %vm201, %v2518, %v2526
    %v2532 = vsel %vm201, %v2520, %v2528
    %v2533 = vsel %vm201, %v2522, %v2514
    %v2534 = vsel %vm201, %v2524, %v2516
    %v2535 = vsel %vm201, %v2526, %v2518
    %v2536 = vsel %vm201, %v2528, %v2520
    %v2537 = vmul.f32 %v2533, %v173
    %v2538 = vmul.f32 %v2529, %v174
    %v2539 = vmul.f32 %v2534, %v173
    %v2540 = vmul.f32 %v2530, %v174
    %v2541 = vmul.f32 %v2535, %v173
    %v2542 = vmul.f32 %v2531, %v174
    %v2543 = vmul.f32 %v2536, %v173
    %v2544 = vmul.f32 %v2532, %v174
    %2545 = vrot.lane.b32.xlu0 %v2497, 127
    %v2546 = vpop.permute.xlu0 %2545
    %2547 = vrot.lane.b32.xlu0 %v2499, 127
    %v2548 = vpop.permute.xlu0 %2547
    %2549 = vrot.lane.b32.xlu0 %v2501, 127
    %v2550 = vpop.permute.xlu0 %2549
    %2551 = vrot.lane.b32.xlu0 %v2503, 127
    %v2552 = vpop.permute.xlu0 %2551
    %2553 = vrot.lane.b32.xlu0 %v2498, 127
    %v2554 = vpop.permute.xlu0 %2553
    %2555 = vrot.lane.b32.xlu0 %v2500, 127
    %v2556 = vpop.permute.xlu0 %2555
    %2557 = vrot.lane.b32.xlu0 %v2502, 127
    %v2558 = vpop.permute.xlu0 %2557
    %2559 = vrot.lane.b32.xlu0 %v2504, 127
    %v2560 = vpop.permute.xlu0 %2559
    %v2561 = vsel %vm218, %v2546, %v2554
    %v2562 = vsel %vm218, %v2548, %v2556
    %v2563 = vsel %vm218, %v2550, %v2558
    %v2564 = vsel %vm218, %v2552, %v2560
    %v2565 = vsel %vm218, %v2554, %v2546
    %v2566 = vsel %vm218, %v2556, %v2548
    %v2567 = vsel %vm218, %v2558, %v2550
    %v2568 = vsel %vm218, %v2560, %v2552
    %v2569 = vmul.f32 %v2561, %v179
    %v2570 = vmul.f32 %v2565, %v180
    %v2571 = vmul.f32 %v2562, %v179
    %v2572 = vmul.f32 %v2566, %v180
    %v2573 = vmul.f32 %v2563, %v179
    %v2574 = vmul.f32 %v2567, %v180
    %v2575 = vmul.f32 %v2564, %v179
    %v2576 = vmul.f32 %v2568, %v180
    %v2578 = vsel %vm546, %v2505, 0
    %v2581 = vsel %vm546, %v2506, 0
    %v2584 = vsel %vm546, %v2507, 0
    %v2587 = vsel %vm546, %v2508, 0
    %v2590 = vsel %vm546, %v2509, 0
    %v2593 = vsel %vm546, %v2510, 0
    %v2596 = vsel %vm546, %v2511, 0
    %v2599 = vsel %vm546, %v2512, 0
    %2601 = vmatprep.subr.mxu0 %v2538
    %2602 = vmatpush1.msra.mxu0 %v2537
    %2603 = vmatprep.subr.mxu0 %v2540
    %2604 = vmatpush1.msra.mxu0 %v2539
    %2605 = vmatprep.subr.mxu0 %v2542
    %2606 = vmatpush1.msra.mxu0 %v2541
    %2607 = vmatprep.subr.mxu0 %v2544
    %2608 = vmatpush1.msra.mxu0 %v2543
    %2609 = vmatprep.subr.mxu0 %v2498
    %2610 = vmatpush1.msra.mxu0 %v2497
    %2611 = vmatprep.subr.mxu0 %v2500
    %2612 = vmatpush1.msra.mxu0 %v2499
    %2613 = vmatprep.subr.mxu0 %v2502
    %2614 = vmatpush1.msra.mxu0 %v2501
    %2615 = vmatprep.subr.mxu0 %v2504
    %2616 = vmatpush1.msra.mxu0 %v2503
    %2617 = vmatprep.subr.mxu0 %v2570
    %2618 = vmatpush1.msra.mxu0 %v2569
    %2619 = vmatprep.subr.mxu0 %v2572
    %2620 = vmatpush1.msra.mxu0 %v2571
    %2621 = vmatprep.subr.mxu0 %v2574
    %2622 = vmatpush1.msra.mxu0 %v2573
    %2623 = vmatprep.subr.mxu0 %v2576
    %2624 = vmatpush1.msra.mxu0 %v2575
    %2625 = vmatprep.subr.mxu0 0.0
    %2626 = vmatpush1.msra.mxu0 0.0
    %2627 = vmatprep.subr.mxu0 0.0
    %2628 = vmatpush1.msra.mxu0 0.0
    %2629 = vmatprep.subr.mxu0 0.0
    %2630 = vmatpush1.msra.mxu0 0.0
    %2631 = vmatprep.subr.mxu0 0.0
    %2632 = vmatpush1.msra.mxu0 0.0
    %2633 = vmatprep.subr.mxu0 0.0
    %2634 = vmatpush1.msra.mxu0 0.0
    %2635 = vmatprep.subr.mxu0 0.0
    %2636 = vmatpush1.msra.mxu0 0.0
    %2637 = vmatprep.subr.mxu0 0.0
    %2638 = vmatpush1.msra.mxu0 0.0
    %2639 = vmatprep.subr.mxu0 0.0
    %2640 = vmatpush1.msra.mxu0 0.0
    %2641 = vmatprep.subr.mxu0 0.0
    %2642 = vmatpush1.msra.mxu0 0.0
    %2643 = vmatprep.subr.mxu0 0.0
    %2644 = vmatpush1.msra.mxu0 0.0
    %2645 = vmatprep.subr.mxu0 0.0
    %2646 = vmatpush1.msra.mxu0 0.0
    %2647 = vmatprep.subr.mxu0 0.0
    %2648 = vmatpush1.msra.mxu0 0.0
    %2649 = vmatprep.subr.mxu0 0.0
    %2650 = vmatpush1.msra.mxu0 0.0
    %2651 = vmatprep.subr.mxu0 0.0
    %2652 = vmatpush1.msra.mxu0 0.0
    %2653 = vmatprep.subr.mxu0 0.0
    %2654 = vmatpush1.msra.mxu0 0.0
    %2655 = vmatprep.subr.mxu0 0.0
    %2656 = vmatpush1.msra.mxu0 0.0
    %2657 = vmatprep.subr.mxu0 0.0
    %2658 = vmatpush1.msra.mxu0 0.0
    %2659 = vmatprep.subr.mxu0 0.0
    %2660 = vmatpush1.msra.mxu0 0.0
    %2661 = vmatprep.subr.mxu0 0.0
    %2662 = vmatpush1.msra.mxu0 0.0
    %2663 = vmatprep.subr.mxu0 0.0
    %2664 = vmatpush1.msra.mxu0 0.0
    %2665 = vmatprep.mubr.f32.mxu0 0.0
    %2666 = vmatmul.mubr.f32.gmra.mrb[0].mxu0 %v2578
    %v2667 = vpop.f32.mrb[0].mxu0
    %v2668 = vadd.f32 0.0, %v2667
    %v2669 = vpop.f32.mrb[0].mxu0
    %v2670 = vadd.f32 0.0, %v2669
    %2671 = vmatprep.mubr.f32.mxu0 0.0
    %2672 = vmatmul.mubr.f32.gmra.mrb[0].mxu0 %v2581
    %v2673 = vpop.f32.mrb[0].mxu0
    %v2674 = vadd.f32 0.0, %v2673
    %v2675 = vpop.f32.mrb[0].mxu0
    %v2676 = vadd.f32 0.0, %v2675
    %2677 = vmatprep.mubr.f32.mxu0 0.0
    %2678 = vmatmul.mubr.f32.gmra.mrb[0].mxu0 %v2584
    %v2679 = vpop.f32.mrb[0].mxu0
    %v2680 = vadd.f32 0.0, %v2679
    %v2681 = vpop.f32.mrb[0].mxu0
    %v2682 = vadd.f32 0.0, %v2681
    %2683 = vmatprep.mubr.f32.mxu0 0.0
    %2684 = vmatmul.mubr.f32.gmra.mrb[0].mxu0 %v2587
    %v2685 = vpop.f32.mrb[0].mxu0
    %v2686 = vadd.f32 0.0, %v2685
    %v2687 = vpop.f32.mrb[0].mxu0
    %v2688 = vadd.f32 0.0, %v2687
    %2689 = vmatprep.mubr.f32.mxu0 0.0
    %2690 = vmatmul.mubr.f32.gmra.mrb[0].mxu0 %v2590
    %v2691 = vpop.f32.mrb[0].mxu0
    %v2692 = vadd.f32 0.0, %v2691
    %v2693 = vpop.f32.mrb[0].mxu0
    %v2694 = vadd.f32 0.0, %v2693
    %2695 = vmatprep.mubr.f32.mxu0 0.0
    %2696 = vmatmul.mubr.f32.gmra.mrb[0].mxu0 %v2593
    %v2697 = vpop.f32.mrb[0].mxu0
    %v2698 = vadd.f32 0.0, %v2697
    %v2699 = vpop.f32.mrb[0].mxu0
    %v2700 = vadd.f32 0.0, %v2699
    %2701 = vmatprep.mubr.f32.mxu0 0.0
    %2702 = vmatmul.mubr.f32.gmra.mrb[0].mxu0 %v2596
    %v2703 = vpop.f32.mrb[0].mxu0
    %v2704 = vadd.f32 0.0, %v2703
    %v2705 = vpop.f32.mrb[0].mxu0
    %v2706 = vadd.f32 0.0, %v2705
    %2707 = vmatprep.mubr.f32.mxu0 0.0
    %2708 = vmatmul.mubr.f32.gmra.mrb[0].mxu0 %v2599
    %v2709 = vpop.f32.mrb[0].mxu0
    %v2710 = vadd.f32 0.0, %v2709
    %v2711 = vpop.f32.mrb[0].mxu0
    %v2712 = vadd.f32 0.0, %v2711
    %2713 = vdwg.mxu0
    %v2714 = vadd.f32 %v2668, %v2670
    %2715 = vadd.xlane.f32.xlu0 %v2714
    %v2716 = vpop.xlane.xlu0 %2715
    %v2717 = vadd.f32 %v2674, %v2676
    %2718 = vadd.xlane.f32.xlu0 %v2717
    %v2719 = vpop.xlane.xlu0 %2718
    %v2720 = vadd.f32 %v2680, %v2682
    %2721 = vadd.xlane.f32.xlu0 %v2720
    %v2722 = vpop.xlane.xlu0 %2721
    %v2723 = vadd.f32 %v2686, %v2688
    %2724 = vadd.xlane.f32.xlu0 %v2723
    %v2725 = vpop.xlane.xlu0 %2724
    %v2726 = vadd.f32 %v2692, %v2694
    %2727 = vadd.xlane.f32.xlu0 %v2726
    %v2728 = vpop.xlane.xlu0 %2727
    %v2729 = vadd.f32 %v2698, %v2700
    %2730 = vadd.xlane.f32.xlu0 %v2729
    %v2731 = vpop.xlane.xlu0 %2730
    %v2732 = vadd.f32 %v2704, %v2706
    %2733 = vadd.xlane.f32.xlu0 %v2732
    %v2734 = vpop.xlane.xlu0 %2733
    %v2735 = vadd.f32 %v2710, %v2712
    %2736 = vadd.xlane.f32.xlu0 %v2735
    %v2737 = vpop.xlane.xlu0 %2736
    %v2738 = vmul.f32 %v2716, %v341
    %v2739 = vmul.f32 %v2719, %v341
    %v2740 = vmul.f32 %v2722, %v341
    %v2741 = vmul.f32 %v2725, %v341
    %v2742 = vmul.f32 %v2728, %v341
    %v2743 = vmul.f32 %v2731, %v341
    %v2744 = vmul.f32 %v2734, %v341
    %v2745 = vmul.f32 %v2737, %v341
    %v2746 = vsub.f32 %v2668, %v2738
    %v2747 = vsub.f32 %v2670, %v2738
    %v2748 = vsub.f32 %v2674, %v2739
    %v2749 = vsub.f32 %v2676, %v2739
    %v2750 = vsub.f32 %v2680, %v2740
    %v2751 = vsub.f32 %v2682, %v2740
    %v2752 = vsub.f32 %v2686, %v2741
    %v2753 = vsub.f32 %v2688, %v2741
    %v2754 = vsub.f32 %v2692, %v2742
    %v2755 = vsub.f32 %v2694, %v2742
    %v2756 = vsub.f32 %v2698, %v2743
    %v2757 = vsub.f32 %v2700, %v2743
    %v2758 = vsub.f32 %v2704, %v2744
    %v2759 = vsub.f32 %v2706, %v2744
    %v2760 = vsub.f32 %v2710, %v2745
    %v2761 = vsub.f32 %v2712, %v2745
    %v2762 = vmul.f32 %v2746, %v2746
    %v2763 = vmul.f32 %v2747, %v2747
    %v2764 = vmul.f32 %v2748, %v2748
    %v2765 = vmul.f32 %v2749, %v2749
    %v2766 = vmul.f32 %v2750, %v2750
    %v2767 = vmul.f32 %v2751, %v2751
    %v2768 = vmul.f32 %v2752, %v2752
    %v2769 = vmul.f32 %v2753, %v2753
    %v2770 = vmul.f32 %v2754, %v2754
    %v2771 = vmul.f32 %v2755, %v2755
    %v2772 = vmul.f32 %v2756, %v2756
    %v2773 = vmul.f32 %v2757, %v2757
    %v2774 = vmul.f32 %v2758, %v2758
    %v2775 = vmul.f32 %v2759, %v2759
    %v2776 = vmul.f32 %v2760, %v2760
    %v2777 = vmul.f32 %v2761, %v2761
    %v2778 = vadd.f32 %v2762, %v2763
    %2779 = vadd.xlane.f32.xlu0 %v2778
    %v2780 = vpop.xlane.xlu0 %2779
    %v2781 = vadd.f32 %v2764, %v2765
    %2782 = vadd.xlane.f32.xlu0 %v2781
    %v2783 = vpop.xlane.xlu0 %2782
    %v2784 = vadd.f32 %v2766, %v2767
    %2785 = vadd.xlane.f32.xlu0 %v2784
    %v2786 = vpop.xlane.xlu0 %2785
    %v2787 = vadd.f32 %v2768, %v2769
    %2788 = vadd.xlane.f32.xlu0 %v2787
    %v2789 = vpop.xlane.xlu0 %2788
    %v2790 = vadd.f32 %v2770, %v2771
    %2791 = vadd.xlane.f32.xlu0 %v2790
    %v2792 = vpop.xlane.xlu0 %2791
    %v2793 = vadd.f32 %v2772, %v2773
    %2794 = vadd.xlane.f32.xlu0 %v2793
    %v2795 = vpop.xlane.xlu0 %2794
    %v2796 = vadd.f32 %v2774, %v2775
    %2797 = vadd.xlane.f32.xlu0 %v2796
    %v2798 = vpop.xlane.xlu0 %2797
    %v2799 = vadd.f32 %v2776, %v2777
    %2800 = vadd.xlane.f32.xlu0 %v2799
    %v2801 = vpop.xlane.xlu0 %2800
    %v2802 = vmul.f32 %v2780, %v341
    %v2803 = vmul.f32 %v2783, %v341
    %v2804 = vmul.f32 %v2786, %v341
    %v2805 = vmul.f32 %v2789, %v341
    %v2806 = vmul.f32 %v2792, %v341
    %v2807 = vmul.f32 %v2795, %v341
    %v2808 = vmul.f32 %v2798, %v341
    %v2809 = vmul.f32 %v2801, %v341
    %v2810 = vadd.f32 %v2802, 0.001
    %v2811 = vadd.f32 %v2803, 0.001
    %v2812 = vadd.f32 %v2804, 0.001
    %v2813 = vadd.f32 %v2805, 0.001
    %v2814 = vadd.f32 %v2806, 0.001
    %v2815 = vadd.f32 %v2807, 0.001
    %v2816 = vadd.f32 %v2808, 0.001
    %v2817 = vadd.f32 %v2809, 0.001
    %v2818 = vrsqrt.pop %v2810
    %v2819 = vrsqrt.pop %v2811
    %v2820 = vrsqrt.pop %v2812
    %v2821 = vrsqrt.pop %v2813
    %v2822 = vrsqrt.pop %v2814
    %v2823 = vrsqrt.pop %v2815
    %v2824 = vrsqrt.pop %v2816
    %v2825 = vrsqrt.pop %v2817
    %v2826 = vmul.f32 %v181, %v2818
    %v2827 = vmul.f32 %v182, %v2819
    %v2828 = vmul.f32 %v183, %v2820
    %v2829 = vmul.f32 %v184, %v2821
    %v2830 = vmul.f32 %v185, %v2822
    %v2831 = vmul.f32 %v186, %v2823
    %v2832 = vmul.f32 %v187, %v2824
    %v2833 = vmul.f32 %v188, %v2825
    %v2834 = vmul.f32 %v2738, %v2826
    %v2835 = vmul.f32 %v2739, %v2827
    %v2836 = vmul.f32 %v2740, %v2828
    %v2837 = vmul.f32 %v2741, %v2829
    %v2838 = vmul.f32 %v2742, %v2830
    %v2839 = vmul.f32 %v2743, %v2831
    %v2840 = vmul.f32 %v2744, %v2832
    %v2841 = vmul.f32 %v2745, %v2833
    %2850 = vrot.lane.b32.xlu0 %v2834, 1
    %v2851 = vpop.permute.xlu0 %2850
    %2852 = vrot.lane.b32.xlu0 %v2835, 1
    %v2853 = vpop.permute.xlu0 %2852
    %2854 = vrot.lane.b32.xlu0 %v2836, 1
    %v2855 = vpop.permute.xlu0 %2854
    %2856 = vrot.lane.b32.xlu0 %v2837, 1
    %v2857 = vpop.permute.xlu0 %2856
    %2858 = vrot.lane.b32.xlu0 %v2838, 1
    %v2859 = vpop.permute.xlu0 %2858
    %2860 = vrot.lane.b32.xlu0 %v2839, 1
    %v2861 = vpop.permute.xlu0 %2860
    %2862 = vrot.lane.b32.xlu0 %v2840, 1
    %v2863 = vpop.permute.xlu0 %2862
    %2864 = vrot.lane.b32.xlu0 %v2841, 1
    %v2865 = vpop.permute.xlu0 %2864
    %v2874 = vsub.f32 %v181, %v2851
    %v2875 = vsub.f32 %v182, %v2853
    %v2876 = vsub.f32 %v183, %v2855
    %v2877 = vsub.f32 %v184, %v2857
    %v2878 = vsub.f32 %v185, %v2859
    %v2879 = vsub.f32 %v186, %v2861
    %v2880 = vsub.f32 %v187, %v2863
    %v2881 = vsub.f32 %v188, %v2865
    %2883 = vset.pattern.permute.xlu0 14
    %2884 = vperm.xlu0 %2883, %v2826
    %v2885 = vpop.permute.xlu0 %2884
    %2888 = vset.pattern.permute.xlu0 14
    %2889 = vperm.xlu0 %2888, %v2827
    %v2890 = vpop.permute.xlu0 %2889
    %2893 = vset.pattern.permute.xlu0 14
    %2894 = vperm.xlu0 %2893, %v2828
    %v2895 = vpop.permute.xlu0 %2894
    %2898 = vset.pattern.permute.xlu0 14
    %2899 = vperm.xlu0 %2898, %v2829
    %v2900 = vpop.permute.xlu0 %2899
    %2903 = vset.pattern.permute.xlu0 14
    %2904 = vperm.xlu0 %2903, %v2830
    %v2905 = vpop.permute.xlu0 %2904
    %2908 = vset.pattern.permute.xlu0 14
    %2909 = vperm.xlu0 %2908, %v2831
    %v2910 = vpop.permute.xlu0 %2909
    %2913 = vset.pattern.permute.xlu0 14
    %2914 = vperm.xlu0 %2913, %v2832
    %v2915 = vpop.permute.xlu0 %2914
    %2918 = vset.pattern.permute.xlu0 14
    %2919 = vperm.xlu0 %2918, %v2833
    %v2920 = vpop.permute.xlu0 %2919
    %v2922 = vmul.f32 %v2668, %v2885
    %v2923 = vmul.f32 %v2670, %v2885
    %v2924 = vmul.f32 %v2674, %v2890
    %v2925 = vmul.f32 %v2676, %v2890
    %v2926 = vmul.f32 %v2680, %v2895
    %v2927 = vmul.f32 %v2682, %v2895
    %v2928 = vmul.f32 %v2686, %v2900
    %v2929 = vmul.f32 %v2688, %v2900
    %v2930 = vmul.f32 %v2692, %v2905
    %v2931 = vmul.f32 %v2694, %v2905
    %v2932 = vmul.f32 %v2698, %v2910
    %v2933 = vmul.f32 %v2700, %v2910
    %v2934 = vmul.f32 %v2704, %v2915
    %v2935 = vmul.f32 %v2706, %v2915
    %v2936 = vmul.f32 %v2710, %v2920
    %v2937 = vmul.f32 %v2712, %v2920
    %2939 = vset.pattern.permute.xlu0 15
    %2940 = vperm.xlu0 %2939, %v2874
    %v2941 = vpop.permute.xlu0 %2940
    %2944 = vset.pattern.permute.xlu0 15
    %2945 = vperm.xlu0 %2944, %v2875
    %v2946 = vpop.permute.xlu0 %2945
    %2949 = vset.pattern.permute.xlu0 15
    %2950 = vperm.xlu0 %2949, %v2876
    %v2951 = vpop.permute.xlu0 %2950
    %2954 = vset.pattern.permute.xlu0 15
    %2955 = vperm.xlu0 %2954, %v2877
    %v2956 = vpop.permute.xlu0 %2955
    %2959 = vset.pattern.permute.xlu0 15
    %2960 = vperm.xlu0 %2959, %v2878
    %v2961 = vpop.permute.xlu0 %2960
    %2964 = vset.pattern.permute.xlu0 15
    %2965 = vperm.xlu0 %2964, %v2879
    %v2966 = vpop.permute.xlu0 %2965
    %2969 = vset.pattern.permute.xlu0 15
    %2970 = vperm.xlu0 %2969, %v2880
    %v2971 = vpop.permute.xlu0 %2970
    %2974 = vset.pattern.permute.xlu0 15
    %2975 = vperm.xlu0 %2974, %v2881
    %v2976 = vpop.permute.xlu0 %2975
    %v2978 = vadd.f32 %v2922, %v2941
    %v2979 = vadd.f32 %v2923, %v2941
    %v2980 = vadd.f32 %v2924, %v2946
    %v2981 = vadd.f32 %v2925, %v2946
    %v2982 = vadd.f32 %v2926, %v2951
    %v2983 = vadd.f32 %v2927, %v2951
    %v2984 = vadd.f32 %v2928, %v2956
    %v2985 = vadd.f32 %v2929, %v2956
    %v2986 = vadd.f32 %v2930, %v2961
    %v2987 = vadd.f32 %v2931, %v2961
    %v2988 = vadd.f32 %v2932, %v2966
    %v2989 = vadd.f32 %v2933, %v2966
    %v2990 = vadd.f32 %v2934, %v2971
    %v2991 = vadd.f32 %v2935, %v2971
    %v2992 = vadd.f32 %v2936, %v2976
    %v2993 = vadd.f32 %v2937, %v2976
    %v2994 = vmax.f32 %v2978, 0.0
    %v2995 = vmax.f32 %v2979, 0.0
    %v2996 = vmax.f32 %v2980, 0.0
    %v2997 = vmax.f32 %v2981, 0.0
    %v2998 = vmax.f32 %v2982, 0.0
    %v2999 = vmax.f32 %v2983, 0.0
    %v3000 = vmax.f32 %v2984, 0.0
    %v3001 = vmax.f32 %v2985, 0.0
    %v3002 = vmax.f32 %v2986, 0.0
    %v3003 = vmax.f32 %v2987, 0.0
    %v3004 = vmax.f32 %v2988, 0.0
    %v3005 = vmax.f32 %v2989, 0.0
    %v3006 = vmax.f32 %v2990, 0.0
    %v3007 = vmax.f32 %v2991, 0.0
    %v3008 = vmax.f32 %v2992, 0.0
    %v3009 = vmax.f32 %v2993, 0.0
    %v3010 = vld [vmem:[#allocation13] sm:$0x3]
    %v3011 = vld [vmem:[#allocation15] sm:$0x3]
    %vm3012 = vcmask 523264
    %v3014 = vsel %vm3012, %v3011, 0
    %3016 = vmatprep.subr.mxu0 %v2995
    %3017 = vmatpush1.msra.mxu0 %v2994
    %3018 = vmatprep.subr.mxu0 %v2997
    %3019 = vmatpush1.msra.mxu0 %v2996
    %3020 = vmatprep.subr.mxu0 %v2999
    %3021 = vmatpush1.msra.mxu0 %v2998
    %3022 = vmatprep.subr.mxu0 %v3001
    %3023 = vmatpush1.msra.mxu0 %v3000
    %3024 = vmatprep.subr.mxu0 %v3003
    %3025 = vmatpush1.msra.mxu0 %v3002
    %3026 = vmatprep.subr.mxu0 %v3005
    %3027 = vmatpush1.msra.mxu0 %v3004
    %3028 = vmatprep.subr.mxu0 %v3007
    %3029 = vmatpush1.msra.mxu0 %v3006
    %3030 = vmatprep.subr.mxu0 %v3009
    %3031 = vmatpush1.msra.mxu0 %v3008
    %3032 = vmatprep.subr.mxu0 0.0
    %3033 = vmatpush1.msra.mxu0 0.0
    %3034 = vmatprep.subr.mxu0 0.0
    %3035 = vmatpush1.msra.mxu0 0.0
    %3036 = vmatprep.subr.mxu0 0.0
    %3037 = vmatpush1.msra.mxu0 0.0
    %3038 = vmatprep.subr.mxu0 0.0
    %3039 = vmatpush1.msra.mxu0 0.0
    %3040 = vmatprep.subr.mxu0 0.0
    %3041 = vmatpush1.msra.mxu0 0.0
    %3042 = vmatprep.subr.mxu0 0.0
    %3043 = vmatpush1.msra.mxu0 0.0
    %3044 = vmatprep.subr.mxu0 0.0
    %3045 = vmatpush1.msra.mxu0 0.0
    %3046 = vmatprep.subr.mxu0 0.0
    %3047 = vmatpush1.msra.mxu0 0.0
    %3048 = vmatprep.subr.mxu0 0.0
    %3049 = vmatpush1.msra.mxu0 0.0
    %3050 = vmatprep.subr.mxu0 0.0
    %3051 = vmatpush1.msra.mxu0 0.0
    %3052 = vmatprep.subr.mxu0 0.0
    %3053 = vmatpush1.msra.mxu0 0.0
    %3054 = vmatprep.subr.mxu0 0.0
    %3055 = vmatpush1.msra.mxu0 0.0
    %3056 = vmatprep.subr.mxu0 0.0
    %3057 = vmatpush1.msra.mxu0 0.0
    %3058 = vmatprep.subr.mxu0 0.0
    %3059 = vmatpush1.msra.mxu0 0.0
    %3060 = vmatprep.subr.mxu0 0.0
    %3061 = vmatpush1.msra.mxu0 0.0
    %3062 = vmatprep.subr.mxu0 0.0
    %3063 = vmatpush1.msra.mxu0 0.0
    %3064 = vmatprep.subr.mxu0 0.0
    %3065 = vmatpush1.msra.mxu0 0.0
    %3066 = vmatprep.subr.mxu0 0.0
    %3067 = vmatpush1.msra.mxu0 0.0
    %3068 = vmatprep.subr.mxu0 0.0
    %3069 = vmatpush1.msra.mxu0 0.0
    %3070 = vmatprep.subr.mxu0 0.0
    %3071 = vmatpush1.msra.mxu0 0.0
    %3072 = vmatprep.subr.mxu0 0.0
    %3073 = vmatpush1.msra.mxu0 0.0
    %3074 = vmatprep.subr.mxu0 0.0
    %3075 = vmatpush1.msra.mxu0 0.0
    %3076 = vmatprep.subr.mxu0 0.0
    %3077 = vmatpush1.msra.mxu0 0.0
    %3078 = vmatprep.subr.mxu0 0.0
    %3079 = vmatpush1.msra.mxu0 0.0
    %3080 = vmatprep.mubr.f32.mxu0 0.0
    %3081 = vmatmul.mubr.f32.gmra.mrb[0].mxu0 %v3014
    %v3082 = vpop.f32.mrb[0].mxu0
    %v3083 = vadd.f32 0.0, %v3082
    %v3084 = vpop.f32.mrb[0].mxu0
    %v3085 = vadd.f32 0.0, %v3084
    %3086 = vdwg.mxu0
    %v3088 = vsel %vm3012, %v3010, 0
    %3090 = vmatprep.subr.mxu0 %v1603
    %3091 = vmatpush1.msra.mxu0 %v1602
    %3092 = vmatprep.subr.mxu0 %v1605
    %3093 = vmatpush1.msra.mxu0 %v1604
    %3094 = vmatprep.subr.mxu0 %v1607
    %3095 = vmatpush1.msra.mxu0 %v1606
    %3096 = vmatprep.subr.mxu0 %v1609
    %3097 = vmatpush1.msra.mxu0 %v1608
    %3098 = vmatprep.subr.mxu0 %v1611
    %3099 = vmatpush1.msra.mxu0 %v1610
    %3100 = vmatprep.subr.mxu0 %v1613
    %3101 = vmatpush1.msra.mxu0 %v1612
    %3102 = vmatprep.subr.mxu0 %v1615
    %3103 = vmatpush1.msra.mxu0 %v1614
    %3104 = vmatprep.subr.mxu0 %v1617
    %3105 = vmatpush1.msra.mxu0 %v1616
    %3106 = vmatprep.subr.mxu0 0.0
    %3107 = vmatpush1.msra.mxu0 0.0
    %3108 = vmatprep.subr.mxu0 0.0
    %3109 = vmatpush1.msra.mxu0 0.0
    %3110 = vmatprep.subr.mxu0 0.0
    %3111 = vmatpush1.msra.mxu0 0.0
    %3112 = vmatprep.subr.mxu0 0.0
    %3113 = vmatpush1.msra.mxu0 0.0
    %3114 = vmatprep.subr.mxu0 0.0
    %3115 = vmatpush1.msra.mxu0 0.0
    %3116 = vmatprep.subr.mxu0 0.0
    %3117 = vmatpush1.msra.mxu0 0.0
    %3118 = vmatprep.subr.mxu0 0.0
    %3119 = vmatpush1.msra.mxu0 0.0
    %3120 = vmatprep.subr.mxu0 0.0
    %3121 = vmatpush1.msra.mxu0 0.0
    %3122 = vmatprep.subr.mxu0 0.0
    %3123 = vmatpush1.msra.mxu0 0.0
    %3124 = vmatprep.subr.mxu0 0.0
    %3125 = vmatpush1.msra.mxu0 0.0
    %3126 = vmatprep.subr.mxu0 0.0
    %3127 = vmatpush1.msra.mxu0 0.0
    %3128 = vmatprep.subr.mxu0 0.0
    %3129 = vmatpush1.msra.mxu0 0.0
    %3130 = vmatprep.subr.mxu0 0.0
    %3131 = vmatpush1.msra.mxu0 0.0
    %3132 = vmatprep.subr.mxu0 0.0
    %3133 = vmatpush1.msra.mxu0 0.0
    %3134 = vmatprep.subr.mxu0 0.0
    %3135 = vmatpush1.msra.mxu0 0.0
    %3136 = vmatprep.subr.mxu0 0.0
    %3137 = vmatpush1.msra.mxu0 0.0
    %3138 = vmatprep.subr.mxu0 0.0
    %3139 = vmatpush1.msra.mxu0 0.0
    %3140 = vmatprep.subr.mxu0 0.0
    %3141 = vmatpush1.msra.mxu0 0.0
    %3142 = vmatprep.subr.mxu0 0.0
    %3143 = vmatpush1.msra.mxu0 0.0
    %3144 = vmatprep.subr.mxu0 0.0
    %3145 = vmatpush1.msra.mxu0 0.0
    %3146 = vmatprep.subr.mxu0 0.0
    %3147 = vmatpush1.msra.mxu0 0.0
    %3148 = vmatprep.subr.mxu0 0.0
    %3149 = vmatpush1.msra.mxu0 0.0
    %3150 = vmatprep.subr.mxu0 0.0
    %3151 = vmatpush1.msra.mxu0 0.0
    %3152 = vmatprep.subr.mxu0 0.0
    %3153 = vmatpush1.msra.mxu0 0.0
    %3154 = vmatprep.mubr.f32.mxu0 0.0
    %3155 = vmatmul.mubr.f32.gmra.mrb[0].mxu0 %v3088
    %v3156 = vpop.f32.mrb[0].mxu0
    %v3157 = vadd.f32 %v3083, %v3156
    %v3158 = vpop.f32.mrb[0].mxu0
    %v3159 = vadd.f32 %v3085, %v3158
    %3160 = vdwg.mxu0
    %v3161 = vld [vmem:[%s12] sm:$0x3]
    %3163 = vset.pattern.permute.xlu0 0
    %3164 = vperm.xlu0 %3163, %v3161
    %v3165 = vpop.permute.xlu0 %3164
    %v3167 = vadd.f32 %v3157, %v3165
    %v3168 = vadd.f32 %v3159, %v3165
    %v3171 = vcombine.low %v3167, %v3168
    %v3173 = vunpack.c.l.s4 1983009808
    %v3174 = vunpack.c.0.s8 %v3173
    %v3175 = vlaneseq
    %v3176 = vshrl.u32 %v3175, 7
    %v3177 = vsub.s32 %v3174, %v3176
    %v3178 = vrot.slane %v3171, %v3177
    %3180 = vst [vmem:[%s13] sm:$0xf] %v3178
    // Predicated region
    $region90: #{segnet_forward.1} parent=1 // pred_check
      _
    $region91: #{segnet_forward.1} parent=1 // pred_check_branch
      %3182 = sbr.rel (0) target = $region93
    $region92: #{segnet_forward.1} parent=1 // pred_region
      _
    $region93: #{segnet_forward.1} parent=1 // pred_fallthru
      _
    // Predicated region
    $region94: #{segnet_forward.1} parent=1 // pred_check
      _
    $region95: #{segnet_forward.1} parent=1 // pred_check_branch
      %3184 = sbr.rel (0) target = $region97
    $region96: #{segnet_forward.1} parent=1 // pred_region
      _
    $region97: #{segnet_forward.1} parent=1 // pred_fallthru
      _
    %3185 = vsyncpa [#allocation3], 1
    %3186 = vsyncpa [#allocation5], 1
    %3187 = vsyncpa [#allocation8], 1
    %3188 = vsyncpa [#allocation11], 1
    %3189 = vsyncpa [#allocation14], 1

</llo_original>
